<compile_context>
chip_gen: v6e
topology: v6e:2x2x1
jax: 0.10.0
libtpu: 0.0.40
codegen_flags: <defaults>
</compile_context>

<pallas_src>
import functools
import math

import jax
import jax.numpy as jnp
import numpy as np
from jax.experimental import pallas as pl
from jax.experimental.pallas import tpu as pltpu

_INV_SQRT2 = 0.7071067811865476
_GELU_TANH_C = math.sqrt(2.0 / math.pi)


def _gelu(h, approx):
    if approx:
        # tanh approximation -> EUP slot (nearly free when VALU is the saturating slot)
        return 0.5 * h * (1.0 + jnp.tanh(_GELU_TANH_C * (h + 0.044715 * h * h * h)))
    # exact GELU (erf), matching nn.GELU() default
    return 0.5 * h * (1.0 + jax.lax.erf(h * _INV_SQRT2))


# ----------------------------------------------------------------------------------------------
# Channels-on-lanes kernel (C >= 96): x_ref / o_ref are (H, W, C); no lane repacks anywhere.
# ----------------------------------------------------------------------------------------------
def _block_kernel_cl(x_ref, dww_ref, dwb_ref, w1_ref, b1_ref, w2_ref, b2_ref,
                     o_ref, xpad_ref, *, H, W, C, eps, Hc, approx_gelu):
    f32 = jnp.float32
    cdt = xpad_ref.dtype  # depthwise compute dtype (bf16 on v6e/v7x, f32 otherwise)

    # ---- build the 3-px zero border in VMEM (input arrives unpadded: saves an HBM pad pass) ----
    zcol = jnp.zeros((H, 3, C), cdt)
    xpad_ref[3:3 + H, :, :] = jnp.concatenate(
        [zcol, x_ref[...].astype(cdt), zcol], axis=1)
    zrow = jnp.zeros((3, W + 6, C), cdt)
    xpad_ref[0:3, :, :] = zrow
    xpad_ref[3 + H:3 + H + 3, :, :] = zrow

    n_chunks = H // Hc

    # ---- row-chunked: dwconv -> LN -> pwconv1 -> GELU -> pwconv2 -> residual ----
    @pl.loop(0, n_chunks)
    def _(ci):
        h0 = ci * Hc

        # depthwise 7x7: channels on lanes, every tap is a row/sublane-offset slice;
        # accumulator initialized from the broadcast bias (no zero pass, no trailing add).
        acc = jnp.broadcast_to(dwb_ref[...].reshape(1, 1, C), (Hc, W, C)).astype(f32)
        for kh in range(7):
            xrows = xpad_ref[pl.ds(h0 + kh, Hc), :, :]            # (Hc, W+6, C), cdt
            for kw in range(7):
                wt = dww_ref[kh * 7 + kw, :].reshape(1, 1, C)     # (1, 1, C), cdt
                acc = acc + xrows[:, kw:kw + W, :] * wt

        rows = acc.reshape(Hc * W, C)

        # LayerNorm over channels (affine folded into pwconv1 on the host); rsqrt on the EUP.
        mean = jnp.mean(rows, axis=-1, keepdims=True)
        xc = rows - mean
        var = jnp.mean(xc * xc, axis=-1, keepdims=True)
        xn = xc * jax.lax.rsqrt(var + eps)

        # pointwise convs on the MXU: bf16 operands, f32 accumulation.
        h = jnp.dot(xn.astype(jnp.bfloat16), w1_ref[...],
                    preferred_element_type=f32) + b1_ref[...]
        h = _gelu(h, approx_gelu)
        y = jnp.dot(h.astype(jnp.bfloat16), w2_ref[...],
                    preferred_element_type=f32) + b2_ref[...]

        # residual add (drop_path == identity); lane-dense (Hc, W, C) store.
        sc = x_ref[pl.ds(h0, Hc), :, :].astype(f32)
        o_ref[pl.ds(h0, Hc), :, :] = (sc + y.reshape(Hc, W, C)).astype(o_ref.dtype)


# ----------------------------------------------------------------------------------------------
# Lane-packed kernel (tiny C): x_ref / o_ref are (H, W*C); output store is lane-dense.
# ----------------------------------------------------------------------------------------------
def _block_kernel_packed(x_ref, dww_ref, dwb_ref, w1_ref, b1_ref, w2_ref, b2_ref,
                         o_ref, xpad_ref, *, H, W, C, eps, approx_gelu):
    WC = W * C
    f32 = jnp.float32
    cdt = xpad_ref.dtype

    # ---- in-VMEM zero pad (input arrives unpadded) ----
    zcol = jnp.zeros((H, 3 * C), cdt)
    xpad_ref[3:3 + H, :] = jnp.concatenate([zcol, x_ref[...].astype(cdt), zcol], axis=1)
    zrow = jnp.zeros((3, (W + 6) * C), cdt)
    xpad_ref[0:3, :] = zrow
    xpad_ref[3 + H:3 + H + 3, :] = zrow

    xp = xpad_ref[...]                          # (H+6, (W+6)*C), cdt
    dww = dww_ref[...]                          # (49, W*C), cdt (pre-tiled on host)

    # ---- depthwise 7x7; bias-initialized accumulator ----
    acc = jnp.broadcast_to(dwb_ref[...], (H, WC)).astype(f32)
    for kw in range(7):
        sh = xp[:, kw * C:kw * C + WC]          # one lane shift per kw (hoisted out of kh loop)
        for kh in range(7):
            tap = kh * 7 + kw
            acc = acc + sh[kh:kh + H, :] * dww[tap:tap + 1, :]

    # ---- repack (H, W*C) -> (W*H, C) with w-major rows for LN / matmuls ----
    x2 = jnp.concatenate([acc[:, w * C:(w + 1) * C] for w in range(W)], axis=0)

    mean = jnp.mean(x2, axis=-1, keepdims=True)
    xc = x2 - mean
    var = jnp.mean(xc * xc, axis=-1, keepdims=True)
    xn = xc * jax.lax.rsqrt(var + eps)

    h = jnp.dot(xn.astype(jnp.bfloat16), w1_ref[...],
                preferred_element_type=f32) + b1_ref[...]
    h = _gelu(h, approx_gelu)
    y = jnp.dot(h.astype(jnp.bfloat16), w2_ref[...],
                preferred_element_type=f32) + b2_ref[...]

    # ---- repack only y back to lane-dense (H, W*C); shortcut stays in its native layout ----
    y_hwc = jnp.concatenate([y[w * H:(w + 1) * H, :] for w in range(W)], axis=1)
    o_ref[...] = (x_ref[...] + y_hwc).astype(o_ref.dtype)
    # TODO(synk): row-chunk this pointwise phase too (as in the channels-on-lanes kernel) if
    # this path is ever used with large H*W*C; at tiny C the intermediates are a few KiB.


# ----------------------------------------------------------------------------------------------
# Host wrapper
# ----------------------------------------------------------------------------------------------
def _device_kind():
    try:
        return jax.devices()[0].device_kind.lower()
    except Exception:
        return ""


def _default_fast_math():
    # bf16 depthwise taps + tanh GELU only where the VPU/EUP have native bf16 (v6e / v7x).
    kind = _device_kind()
    return ("v6" in kind) or ("v7" in kind) or ("7x" in kind)


def _compiler_params(vmem_need_bytes):
    kind = _device_kind()
    cap = (48 << 20) if ("v7" in kind or "7x" in kind) else (100 << 20)
    limit = int(max(16 << 20, min(vmem_need_bytes * 3 // 2 + (4 << 20), cap)))
    return pltpu.CompilerParams(
        dimension_semantics=("parallel",),     # batch axis: images are independent
        vmem_limit_bytes=limit,
    )


def convnext_block(x_nchw, params, eps=1e-6, fast_math=None):
    """ConvNeXt Block forward (eval-mode drop_path == identity).  NCHW in / NCHW out."""
    dw_w, dw_b, ln_w, ln_b, w1, b1, w2, b2, gamma = params
    N, C, H, W = x_nchw.shape
    C4 = w1.shape[1]
    f32 = jnp.float32
    if gamma is None:                          # layer_scale_init_value <= 0 => no layer scale
        gamma = jnp.ones((C,), f32)
    if fast_math is None:
        fast_math = _default_fast_math()
    cdt = jnp.bfloat16 if fast_math else jnp.float32
    csz = 2 if fast_math else 4
    approx_gelu = bool(fast_math)

    # NCHW -> NHWC.
    # TODO(synk): if the surrounding model can produce/consume NHWC, drop this transpose and
    # the final one; each is a full HBM pass over the activation.
    x = jnp.transpose(x_nchw, (0, 2, 3, 1))

    # Fold LayerNorm affine into pwconv1 and layer-scale gamma into pwconv2 (host side).
    w1f = (w1 * ln_w[:, None]).astype(jnp.bfloat16)
    b1f = (ln_b @ w1 + b1).reshape(1, C4).astype(f32)
    w2f = (w2 * gamma[None, :]).astype(jnp.bfloat16)
    b2f = (b2 * gamma).reshape(1, C).astype(f32)

    img_bytes = H * W * C * x.dtype.itemsize
    pad_bytes = (H + 6) * (W + 6) * C * csz
    pw_bytes = (C * C4 + C4 * C) * 2 + (C4 + C) * 4

    if C >= 96:
        # -------------- channels-on-lanes path (all real ConvNeXt stage widths) --------------
        dww = dw_w.reshape(49, C).astype(cdt)
        dwb = dw_b.reshape(1, C).astype(f32)
        # Row-chunk size for the dwconv+LN+matmul phase: <= ~512 rows per chunk, Hc | H.
        Hc = max((d for d in range(1, H + 1) if H % d == 0 and d * W <= 512), default=1)
        vmem_need = (4 * img_bytes + 2 * (49 * C * csz + C * 4 + pw_bytes)
                     + pad_bytes + Hc * W * C * 64)
        kernel = functools.partial(_block_kernel_cl, H=H, W=W, C=C, eps=eps, Hc=Hc,
                                   approx_gelu=approx_gelu)
        out = pl.pallas_call(
            kernel,
            out_shape=jax.ShapeDtypeStruct((N, H, W, C), x.dtype),
            grid_spec=pltpu.PrefetchScalarGridSpec(
                num_scalar_prefetch=0,
                grid=(N,),
                in_specs=[
                    pl.BlockSpec((None, H, W, C), lambda n: (n, 0, 0, 0)),  # unpadded image
                    pl.BlockSpec((49, C), lambda n: (0, 0)),                # dw weights
                    pl.BlockSpec((1, C), lambda n: (0, 0)),                 # dw bias
                    pl.BlockSpec((C, C4), lambda n: (0, 0)),                # pwconv1 W (LN folded)
                    pl.BlockSpec((1, C4), lambda n: (0, 0)),                # pwconv1 b (folded)
                    pl.BlockSpec((C4, C), lambda n: (0, 0)),                # pwconv2 W (gamma folded)
                    pl.BlockSpec((1, C), lambda n: (0, 0)),                 # pwconv2 b (folded)
                ],
                out_specs=pl.BlockSpec((None, H, W, C), lambda n: (n, 0, 0, 0)),
                scratch_shapes=[pltpu.VMEM((H + 6, W + 6, C), cdt)],        # in-kernel zero pad
            ),
            compiler_params=_compiler_params(vmem_need),
        )(x, dww, dwb, w1f, b1f, w2f, b2f)
        return jnp.transpose(out, (0, 3, 1, 2))

    # ---------------------- lane-packed path (tiny C, e.g. smoke tests) ----------------------
    WC = W * C
    xpk = x.reshape(N, H, WC)
    dww = jnp.tile(dw_w.reshape(49, 1, C), (1, W, 1)).reshape(49, WC).astype(cdt)
    dwb = jnp.tile(dw_b.reshape(1, 1, C), (1, W, 1)).reshape(1, WC).astype(f32)
    vmem_need = (4 * img_bytes + 2 * (49 * WC * csz + WC * 4 + pw_bytes)
                 + pad_bytes + H * W * C * 64)
    kernel = functools.partial(_block_kernel_packed, H=H, W=W, C=C, eps=eps,
                               approx_gelu=approx_gelu)
    out = pl.pallas_call(
        kernel,
        out_shape=jax.ShapeDtypeStruct((N, H, WC), x.dtype),
        grid_spec=pltpu.PrefetchScalarGridSpec(
            num_scalar_prefetch=0,
            grid=(N,),
            in_specs=[
                pl.BlockSpec((None, H, WC), lambda n: (n, 0, 0)),           # unpadded image
                pl.BlockSpec((49, WC), lambda n: (0, 0)),                   # dw weights (tiled)
                pl.BlockSpec((1, WC), lambda n: (0, 0)),                    # dw bias (tiled)
                pl.BlockSpec((C, C4), lambda n: (0, 0)),
                pl.BlockSpec((1, C4), lambda n: (0, 0)),
                pl.BlockSpec((C4, C), lambda n: (0, 0)),
                pl.BlockSpec((1, C), lambda n: (0, 0)),
            ],
            out_specs=pl.BlockSpec((None, H, WC), lambda n: (n, 0, 0)),
            scratch_shapes=[pltpu.VMEM((H + 6, (W + 6) * C), cdt)],
        ),
        compiler_params=_compiler_params(vmem_need),
    )(xpk, dww, dwb, w1f, b1f, w2f, b2f)
    return jnp.transpose(out.reshape(N, H, W, C), (0, 3, 1, 2))


# ----------------------------------------------------------------------------------------------
# Pure-JAX f32 reference matching the PyTorch Block.forward semantics (unfolded).
# ----------------------------------------------------------------------------------------------
def _reference(x_nchw, params, eps=1e-6):
    dw_w, dw_b, ln_w, ln_b, w1, b1, w2, b2, gamma = params
    if gamma is None:
        gamma = jnp.ones((x_nchw.shape[1],), jnp.float32)
    x = jnp.transpose(x_nchw, (0, 2, 3, 1))
    N, H, W, C = x.shape
    xp = jnp.pad(x, ((0, 0), (3, 3), (3, 3), (0, 0)))
    acc = jnp.zeros_like(x)
    for kh in range(7):
        for kw in range(7):
            acc = acc + xp[:, kh:kh + H, kw:kw + W, :] * dw_w[kh, kw, :]
    acc = acc + dw_b
    mean = acc.mean(-1, keepdims=True)
    var = ((acc - mean) ** 2).mean(-1, keepdims=True)
    xn = (acc - mean) / jnp.sqrt(var + eps) * ln_w + ln_b
    h = xn @ w1 + b1
    h = jax.nn.gelu(h, approximate=False)
    y = (h @ w2 + b2) * gamma
    return jnp.transpose(x + y, (0, 3, 1, 2))


def _make_params(C, key):
    C4 = 4 * C
    k = jax.random.split(key, 9)
    dw_w = jax.random.normal(k[0], (7, 7, C), jnp.float32) * 0.1      # dwconv weight (kh,kw,C)
    dw_b = jax.random.normal(k[1], (C,), jnp.float32) * 0.1           # dwconv bias
    ln_w = 1.0 + 0.1 * jax.random.normal(k[2], (C,), jnp.float32)     # LayerNorm weight
    ln_b = 0.1 * jax.random.normal(k[3], (C,), jnp.float32)           # LayerNorm bias
    w1 = jax.random.normal(k[4], (C, C4), jnp.float32) * 0.1          # pwconv1 (C -> 4C)
    b1 = jax.random.normal(k[5], (C4,), jnp.float32) * 0.1
    w2 = jax.random.normal(k[6], (C4, C), jnp.float32) * 0.1          # pwconv2 (4C -> C)
    b2 = jax.random.normal(k[7], (C,), jnp.float32) * 0.1
    gamma = 0.1 * jax.random.normal(k[8], (C,), jnp.float32)          # layer scale
    return (dw_w, dw_b, ln_w, ln_b, w1, b1, w2, b2, gamma)


if __name__ == "__main__":
    # NOTE: these are small correctness smoke tests; benchmark at real ConvNeXt shapes
    # (C=96/192/384/768, H=W=56/28/14/7) -- perf conclusions at C=8 do not transfer.
    key = jax.random.PRNGKey(0)
    kp1, kx1, kp2, kx2 = jax.random.split(key, 4)

    fn = jax.jit(convnext_block)

    # Tolerance covers bf16 depthwise taps + bf16 MXU operands + tanh GELU (v6e/v7x fast path)
    # against the f32 / exact-erf reference; with fast_math=False the kernel matches ~1e-4.
    ATOL, RTOL = 1e-2, 1e-2

    # 1) tiny-C lane-packed path (C=8).
    x1 = jax.random.normal(kx1, (2, 8, 16, 16), jnp.float32)
    p1 = _make_params(8, kp1)
    o1 = jax.block_until_ready(fn(x1, p1))
    np.testing.assert_allclose(np.asarray(o1), np.asarray(_reference(x1, p1)),
                               atol=ATOL, rtol=RTOL)

    # 2) channels-on-lanes path (C=128; layout used for all real ConvNeXt stage widths).
    x2 = jax.random.normal(kx2, (2, 128, 16, 16), jnp.float32)
    p2 = _make_params(128, kp2)
    o2 = jax.block_until_ready(fn(x2, p2))
    np.testing.assert_allclose(np.asarray(o2), np.asarray(_reference(x2, p2)),
                               atol=ATOL, rtol=RTOL)

    print("KERNEL_OK")
</pallas_src>

<mosaic_0001>
module attributes {stable_mosaic.version = 11 : i64} {
  func.func @_block_kernel_packed(%arg0: i32, %arg1: memref<1x16x128xf32, #tpu.memory_space<vmem>>, %arg2: memref<49x128xf32, #tpu.memory_space<vmem>>, %arg3: memref<1x128xf32, #tpu.memory_space<vmem>>, %arg4: memref<8x32xbf16, #tpu.memory_space<vmem>>, %arg5: memref<1x32xf32, #tpu.memory_space<vmem>>, %arg6: memref<32x8xbf16, #tpu.memory_space<vmem>>, %arg7: memref<1x8xf32, #tpu.memory_space<vmem>>, %arg8: memref<1x16x128xf32, #tpu.memory_space<vmem>>, %arg9: memref<22x176xf32, #tpu.memory_space<vmem>>) attributes {dimension_semantics = [#tpu.dimension_semantics<parallel>], iteration_bounds = array<i64: 2>, scalar_prefetch = 0 : i64, scratch_operands = 1 : i64, tpu.core_type = #tpu.core_type<tc>, window_params = [{transform_indices = @transform_0, window_bounds = array<i64: 1, 16, 128>}, {pipeline_mode = #tpu.pipeline_mode<synchronous>, transform_indices = @transform_1, window_bounds = array<i64: 49, 128>}, {pipeline_mode = #tpu.pipeline_mode<synchronous>, transform_indices = @transform_2, window_bounds = array<i64: 1, 128>}, {pipeline_mode = #tpu.pipeline_mode<synchronous>, transform_indices = @transform_3, window_bounds = array<i64: 8, 32>}, {pipeline_mode = #tpu.pipeline_mode<synchronous>, transform_indices = @transform_4, window_bounds = array<i64: 1, 32>}, {pipeline_mode = #tpu.pipeline_mode<synchronous>, transform_indices = @transform_5, window_bounds = array<i64: 32, 8>}, {pipeline_mode = #tpu.pipeline_mode<synchronous>, transform_indices = @transform_6, window_bounds = array<i64: 1, 8>}, {transform_indices = @transform_7, window_bounds = array<i64: 1, 16, 128>}]} {
    %cst = arith.constant 0.000000e+00 : f32
    %0 = vector.broadcast %cst : f32 to vector<16x24xf32>
    %c0 = arith.constant 0 : index
    %c0_0 = arith.constant 0 : index
    %c0_1 = arith.constant 0 : index
    %1 = vector.load %arg1[%c0, %c0_0, %c0_1] : memref<1x16x128xf32, #tpu.memory_space<vmem>>, vector<1x16x128xf32>
    %2 = vector.shape_cast %1 : vector<1x16x128xf32> to vector<16x128xf32>
    %3 = tpu.concatenate %0, %2, %0 in 1 : vector<16x24xf32>, vector<16x128xf32>, vector<16x24xf32> -> vector<16x176xf32>
    %c3 = arith.constant 3 : index
    %c0_2 = arith.constant 0 : index
    %4 = vector.load %arg9[%c3, %c0_2] : memref<22x176xf32, #tpu.memory_space<vmem>>, vector<16x176xf32>
    tpu.vector_store %arg9[%c3, %c0_2], %3 {strides = array<i32>} : memref<22x176xf32, #tpu.memory_space<vmem>>, vector<16x176xf32>,
    %cst_3 = arith.constant 0.000000e+00 : f32
    %5 = vector.broadcast %cst_3 : f32 to vector<3x176xf32>
    %c0_4 = arith.constant 0 : index
    %c0_5 = arith.constant 0 : index
    %6 = vector.load %arg9[%c0_4, %c0_5] : memref<22x176xf32, #tpu.memory_space<vmem>>, vector<3x176xf32>
    tpu.vector_store %arg9[%c0_4, %c0_5], %5 {strides = array<i32>} : memref<22x176xf32, #tpu.memory_space<vmem>>, vector<3x176xf32>,
    %c19 = arith.constant 19 : index
    %c0_6 = arith.constant 0 : index
    %7 = vector.load %arg9[%c19, %c0_6] : memref<22x176xf32, #tpu.memory_space<vmem>>, vector<3x176xf32>
    tpu.vector_store %arg9[%c19, %c0_6], %5 {strides = array<i32>} : memref<22x176xf32, #tpu.memory_space<vmem>>, vector<3x176xf32>,
    %c0_7 = arith.constant 0 : index
    %c0_8 = arith.constant 0 : index
    %8 = vector.load %arg9[%c0_7, %c0_8] : memref<22x176xf32, #tpu.memory_space<vmem>>, vector<22x176xf32>
    %c0_9 = arith.constant 0 : index
    %c0_10 = arith.constant 0 : index
    %9 = vector.load %arg2[%c0_9, %c0_10] : memref<49x128xf32, #tpu.memory_space<vmem>>, vector<49x128xf32>
    %c0_11 = arith.constant 0 : index
    %c0_12 = arith.constant 0 : index
    %10 = vector.load %arg3[%c0_11, %c0_12] : memref<1x128xf32, #tpu.memory_space<vmem>>, vector<1x128xf32>
    %11 = vector.shape_cast %10 : vector<1x128xf32> to vector<1x128xf32>
    %12 = vector.broadcast %11 : vector<1x128xf32> to vector<16x128xf32>
    %13 = vector.extract_strided_slice %8 {offsets = [0, 0], sizes = [22, 128], strides = [1, 1]} : vector<22x176xf32> to vector<22x128xf32>
    %14 = vector.extract_strided_slice %13 {offsets = [0, 0], sizes = [16, 128], strides = [1, 1]} : vector<22x128xf32> to vector<16x128xf32>
    %15 = vector.extract_strided_slice %9 {offsets = [0, 0], sizes = [1, 128], strides = [1, 1]} : vector<49x128xf32> to vector<1x128xf32>
    %16 = vector.broadcast %15 : vector<1x128xf32> to vector<16x128xf32>
    %17 = arith.mulf %14, %16 : vector<16x128xf32>
    %18 = arith.addf %12, %17 : vector<16x128xf32>
    %19 = vector.extract_strided_slice %13 {offsets = [1, 0], sizes = [16, 128], strides = [1, 1]} : vector<22x128xf32> to vector<16x128xf32>
    %20 = vector.extract_strided_slice %9 {offsets = [7, 0], sizes = [1, 128], strides = [1, 1]} : vector<49x128xf32> to vector<1x128xf32>
    %21 = vector.broadcast %20 : vector<1x128xf32> to vector<16x128xf32>
    %22 = arith.mulf %19, %21 : vector<16x128xf32>
    %23 = arith.addf %18, %22 : vector<16x128xf32>
    %24 = vector.extract_strided_slice %13 {offsets = [2, 0], sizes = [16, 128], strides = [1, 1]} : vector<22x128xf32> to vector<16x128xf32>
    %25 = vector.extract_strided_slice %9 {offsets = [14, 0], sizes = [1, 128], strides = [1, 1]} : vector<49x128xf32> to vector<1x128xf32>
    %26 = vector.broadcast %25 : vector<1x128xf32> to vector<16x128xf32>
    %27 = arith.mulf %24, %26 : vector<16x128xf32>
    %28 = arith.addf %23, %27 : vector<16x128xf32>
    %29 = vector.extract_strided_slice %13 {offsets = [3, 0], sizes = [16, 128], strides = [1, 1]} : vector<22x128xf32> to vector<16x128xf32>
    %30 = vector.extract_strided_slice %9 {offsets = [21, 0], sizes = [1, 128], strides = [1, 1]} : vector<49x128xf32> to vector<1x128xf32>
    %31 = vector.broadcast %30 : vector<1x128xf32> to vector<16x128xf32>
    %32 = arith.mulf %29, %31 : vector<16x128xf32>
    %33 = arith.addf %28, %32 : vector<16x128xf32>
    %34 = vector.extract_strided_slice %13 {offsets = [4, 0], sizes = [16, 128], strides = [1, 1]} : vector<22x128xf32> to vector<16x128xf32>
    %35 = vector.extract_strided_slice %9 {offsets = [28, 0], sizes = [1, 128], strides = [1, 1]} : vector<49x128xf32> to vector<1x128xf32>
    %36 = vector.broadcast %35 : vector<1x128xf32> to vector<16x128xf32>
    %37 = arith.mulf %34, %36 : vector<16x128xf32>
    %38 = arith.addf %33, %37 : vector<16x128xf32>
    %39 = vector.extract_strided_slice %13 {offsets = [5, 0], sizes = [16, 128], strides = [1, 1]} : vector<22x128xf32> to vector<16x128xf32>
    %40 = vector.extract_strided_slice %9 {offsets = [35, 0], sizes = [1, 128], strides = [1, 1]} : vector<49x128xf32> to vector<1x128xf32>
    %41 = vector.broadcast %40 : vector<1x128xf32> to vector<16x128xf32>
    %42 = arith.mulf %39, %41 : vector<16x128xf32>
    %43 = arith.addf %38, %42 : vector<16x128xf32>
    %44 = vector.extract_strided_slice %13 {offsets = [6, 0], sizes = [16, 128], strides = [1, 1]} : vector<22x128xf32> to vector<16x128xf32>
    %45 = vector.extract_strided_slice %9 {offsets = [42, 0], sizes = [1, 128], strides = [1, 1]} : vector<49x128xf32> to vector<1x128xf32>
    %46 = vector.broadcast %45 : vector<1x128xf32> to vector<16x128xf32>
    %47 = arith.mulf %44, %46 : vector<16x128xf32>
    %48 = arith.addf %43, %47 : vector<16x128xf32>
    %49 = vector.extract_strided_slice %8 {offsets = [0, 8], sizes = [22, 128], strides = [1, 1]} : vector<22x176xf32> to vector<22x128xf32>
    %50 = vector.extract_strided_slice %49 {offsets = [0, 0], sizes = [16, 128], strides = [1, 1]} : vector<22x128xf32> to vector<16x128xf32>
    %51 = vector.extract_strided_slice %9 {offsets = [1, 0], sizes = [1, 128], strides = [1, 1]} : vector<49x128xf32> to vector<1x128xf32>
    %52 = vector.broadcast %51 : vector<1x128xf32> to vector<16x128xf32>
    %53 = arith.mulf %50, %52 : vector<16x128xf32>
    %54 = arith.addf %48, %53 : vector<16x128xf32>
    %55 = vector.extract_strided_slice %49 {offsets = [1, 0], sizes = [16, 128], strides = [1, 1]} : vector<22x128xf32> to vector<16x128xf32>
    %56 = vector.extract_strided_slice %9 {offsets = [8, 0], sizes = [1, 128], strides = [1, 1]} : vector<49x128xf32> to vector<1x128xf32>
    %57 = vector.broadcast %56 : vector<1x128xf32> to vector<16x128xf32>
    %58 = arith.mulf %55, %57 : vector<16x128xf32>
    %59 = arith.addf %54, %58 : vector<16x128xf32>
    %60 = vector.extract_strided_slice %49 {offsets = [2, 0], sizes = [16, 128], strides = [1, 1]} : vector<22x128xf32> to vector<16x128xf32>
    %61 = vector.extract_strided_slice %9 {offsets = [15, 0], sizes = [1, 128], strides = [1, 1]} : vector<49x128xf32> to vector<1x128xf32>
    %62 = vector.broadcast %61 : vector<1x128xf32> to vector<16x128xf32>
    %63 = arith.mulf %60, %62 : vector<16x128xf32>
    %64 = arith.addf %59, %63 : vector<16x128xf32>
    %65 = vector.extract_strided_slice %49 {offsets = [3, 0], sizes = [16, 128], strides = [1, 1]} : vector<22x128xf32> to vector<16x128xf32>
    %66 = vector.extract_strided_slice %9 {offsets = [22, 0], sizes = [1, 128], strides = [1, 1]} : vector<49x128xf32> to vector<1x128xf32>
    %67 = vector.broadcast %66 : vector<1x128xf32> to vector<16x128xf32>
    %68 = arith.mulf %65, %67 : vector<16x128xf32>
    %69 = arith.addf %64, %68 : vector<16x128xf32>
    %70 = vector.extract_strided_slice %49 {offsets = [4, 0], sizes = [16, 128], strides = [1, 1]} : vector<22x128xf32> to vector<16x128xf32>
    %71 = vector.extract_strided_slice %9 {offsets = [29, 0], sizes = [1, 128], strides = [1, 1]} : vector<49x128xf32> to vector<1x128xf32>
    %72 = vector.broadcast %71 : vector<1x128xf32> to vector<16x128xf32>
    %73 = arith.mulf %70, %72 : vector<16x128xf32>
    %74 = arith.addf %69, %73 : vector<16x128xf32>
    %75 = vector.extract_strided_slice %49 {offsets = [5, 0], sizes = [16, 128], strides = [1, 1]} : vector<22x128xf32> to vector<16x128xf32>
    %76 = vector.extract_strided_slice %9 {offsets = [36, 0], sizes = [1, 128], strides = [1, 1]} : vector<49x128xf32> to vector<1x128xf32>
    %77 = vector.broadcast %76 : vector<1x128xf32> to vector<16x128xf32>
    %78 = arith.mulf %75, %77 : vector<16x128xf32>
    %79 = arith.addf %74, %78 : vector<16x128xf32>
    %80 = vector.extract_strided_slice %49 {offsets = [6, 0], sizes = [16, 128], strides = [1, 1]} : vector<22x128xf32> to vector<16x128xf32>
    %81 = vector.extract_strided_slice %9 {offsets = [43, 0], sizes = [1, 128], strides = [1, 1]} : vector<49x128xf32> to vector<1x128xf32>
    %82 = vector.broadcast %81 : vector<1x128xf32> to vector<16x128xf32>
    %83 = arith.mulf %80, %82 : vector<16x128xf32>
    %84 = arith.addf %79, %83 : vector<16x128xf32>
    %85 = vector.extract_strided_slice %8 {offsets = [0, 16], sizes = [22, 128], strides = [1, 1]} : vector<22x176xf32> to vector<22x128xf32>
    %86 = vector.extract_strided_slice %85 {offsets = [0, 0], sizes = [16, 128], strides = [1, 1]} : vector<22x128xf32> to vector<16x128xf32>
    %87 = vector.extract_strided_slice %9 {offsets = [2, 0], sizes = [1, 128], strides = [1, 1]} : vector<49x128xf32> to vector<1x128xf32>
    %88 = vector.broadcast %87 : vector<1x128xf32> to vector<16x128xf32>
    %89 = arith.mulf %86, %88 : vector<16x128xf32>
    %90 = arith.addf %84, %89 : vector<16x128xf32>
    %91 = vector.extract_strided_slice %85 {offsets = [1, 0], sizes = [16, 128], strides = [1, 1]} : vector<22x128xf32> to vector<16x128xf32>
    %92 = vector.extract_strided_slice %9 {offsets = [9, 0], sizes = [1, 128], strides = [1, 1]} : vector<49x128xf32> to vector<1x128xf32>
    %93 = vector.broadcast %92 : vector<1x128xf32> to vector<16x128xf32>
    %94 = arith.mulf %91, %93 : vector<16x128xf32>
    %95 = arith.addf %90, %94 : vector<16x128xf32>
    %96 = vector.extract_strided_slice %85 {offsets = [2, 0], sizes = [16, 128], strides = [1, 1]} : vector<22x128xf32> to vector<16x128xf32>
    %97 = vector.extract_strided_slice %9 {offsets = [16, 0], sizes = [1, 128], strides = [1, 1]} : vector<49x128xf32> to vector<1x128xf32>
    %98 = vector.broadcast %97 : vector<1x128xf32> to vector<16x128xf32>
    %99 = arith.mulf %96, %98 : vector<16x128xf32>
    %100 = arith.addf %95, %99 : vector<16x128xf32>
    %101 = vector.extract_strided_slice %85 {offsets = [3, 0], sizes = [16, 128], strides = [1, 1]} : vector<22x128xf32> to vector<16x128xf32>
    %102 = vector.extract_strided_slice %9 {offsets = [23, 0], sizes = [1, 128], strides = [1, 1]} : vector<49x128xf32> to vector<1x128xf32>
    %103 = vector.broadcast %102 : vector<1x128xf32> to vector<16x128xf32>
    %104 = arith.mulf %101, %103 : vector<16x128xf32>
    %105 = arith.addf %100, %104 : vector<16x128xf32>
    %106 = vector.extract_strided_slice %85 {offsets = [4, 0], sizes = [16, 128], strides = [1, 1]} : vector<22x128xf32> to vector<16x128xf32>
    %107 = vector.extract_strided_slice %9 {offsets = [30, 0], sizes = [1, 128], strides = [1, 1]} : vector<49x128xf32> to vector<1x128xf32>
    %108 = vector.broadcast %107 : vector<1x128xf32> to vector<16x128xf32>
    %109 = arith.mulf %106, %108 : vector<16x128xf32>
    %110 = arith.addf %105, %109 : vector<16x128xf32>
    %111 = vector.extract_strided_slice %85 {offsets = [5, 0], sizes = [16, 128], strides = [1, 1]} : vector<22x128xf32> to vector<16x128xf32>
    %112 = vector.extract_strided_slice %9 {offsets = [37, 0], sizes = [1, 128], strides = [1, 1]} : vector<49x128xf32> to vector<1x128xf32>
    %113 = vector.broadcast %112 : vector<1x128xf32> to vector<16x128xf32>
    %114 = arith.mulf %111, %113 : vector<16x128xf32>
    %115 = arith.addf %110, %114 : vector<16x128xf32>
    %116 = vector.extract_strided_slice %85 {offsets = [6, 0], sizes = [16, 128], strides = [1, 1]} : vector<22x128xf32> to vector<16x128xf32>
    %117 = vector.extract_strided_slice %9 {offsets = [44, 0], sizes = [1, 128], strides = [1, 1]} : vector<49x128xf32> to vector<1x128xf32>
    %118 = vector.broadcast %117 : vector<1x128xf32> to vector<16x128xf32>
    %119 = arith.mulf %116, %118 : vector<16x128xf32>
    %120 = arith.addf %115, %119 : vector<16x128xf32>
    %121 = vector.extract_strided_slice %8 {offsets = [0, 24], sizes = [22, 128], strides = [1, 1]} : vector<22x176xf32> to vector<22x128xf32>
    %122 = vector.extract_strided_slice %121 {offsets = [0, 0], sizes = [16, 128], strides = [1, 1]} : vector<22x128xf32> to vector<16x128xf32>
    %123 = vector.extract_strided_slice %9 {offsets = [3, 0], sizes = [1, 128], strides = [1, 1]} : vector<49x128xf32> to vector<1x128xf32>
    %124 = vector.broadcast %123 : vector<1x128xf32> to vector<16x128xf32>
    %125 = arith.mulf %122, %124 : vector<16x128xf32>
    %126 = arith.addf %120, %125 : vector<16x128xf32>
    %127 = vector.extract_strided_slice %121 {offsets = [1, 0], sizes = [16, 128], strides = [1, 1]} : vector<22x128xf32> to vector<16x128xf32>
    %128 = vector.extract_strided_slice %9 {offsets = [10, 0], sizes = [1, 128], strides = [1, 1]} : vector<49x128xf32> to vector<1x128xf32>
    %129 = vector.broadcast %128 : vector<1x128xf32> to vector<16x128xf32>
    %130 = arith.mulf %127, %129 : vector<16x128xf32>
    %131 = arith.addf %126, %130 : vector<16x128xf32>
    %132 = vector.extract_strided_slice %121 {offsets = [2, 0], sizes = [16, 128], strides = [1, 1]} : vector<22x128xf32> to vector<16x128xf32>
    %133 = vector.extract_strided_slice %9 {offsets = [17, 0], sizes = [1, 128], strides = [1, 1]} : vector<49x128xf32> to vector<1x128xf32>
    %134 = vector.broadcast %133 : vector<1x128xf32> to vector<16x128xf32>
    %135 = arith.mulf %132, %134 : vector<16x128xf32>
    %136 = arith.addf %131, %135 : vector<16x128xf32>
    %137 = vector.extract_strided_slice %121 {offsets = [3, 0], sizes = [16, 128], strides = [1, 1]} : vector<22x128xf32> to vector<16x128xf32>
    %138 = vector.extract_strided_slice %9 {offsets = [24, 0], sizes = [1, 128], strides = [1, 1]} : vector<49x128xf32> to vector<1x128xf32>
    %139 = vector.broadcast %138 : vector<1x128xf32> to vector<16x128xf32>
    %140 = arith.mulf %137, %139 : vector<16x128xf32>
    %141 = arith.addf %136, %140 : vector<16x128xf32>
    %142 = vector.extract_strided_slice %121 {offsets = [4, 0], sizes = [16, 128], strides = [1, 1]} : vector<22x128xf32> to vector<16x128xf32>
    %143 = vector.extract_strided_slice %9 {offsets = [31, 0], sizes = [1, 128], strides = [1, 1]} : vector<49x128xf32> to vector<1x128xf32>
    %144 = vector.broadcast %143 : vector<1x128xf32> to vector<16x128xf32>
    %145 = arith.mulf %142, %144 : vector<16x128xf32>
    %146 = arith.addf %141, %145 : vector<16x128xf32>
    %147 = vector.extract_strided_slice %121 {offsets = [5, 0], sizes = [16, 128], strides = [1, 1]} : vector<22x128xf32> to vector<16x128xf32>
    %148 = vector.extract_strided_slice %9 {offsets = [38, 0], sizes = [1, 128], strides = [1, 1]} : vector<49x128xf32> to vector<1x128xf32>
    %149 = vector.broadcast %148 : vector<1x128xf32> to vector<16x128xf32>
    %150 = arith.mulf %147, %149 : vector<16x128xf32>
    %151 = arith.addf %146, %150 : vector<16x128xf32>
    %152 = vector.extract_strided_slice %121 {offsets = [6, 0], sizes = [16, 128], strides = [1, 1]} : vector<22x128xf32> to vector<16x128xf32>
    %153 = vector.extract_strided_slice %9 {offsets = [45, 0], sizes = [1, 128], strides = [1, 1]} : vector<49x128xf32> to vector<1x128xf32>
    %154 = vector.broadcast %153 : vector<1x128xf32> to vector<16x128xf32>
    %155 = arith.mulf %152, %154 : vector<16x128xf32>
    %156 = arith.addf %151, %155 : vector<16x128xf32>
    %157 = vector.extract_strided_slice %8 {offsets = [0, 32], sizes = [22, 128], strides = [1, 1]} : vector<22x176xf32> to vector<22x128xf32>
    %158 = vector.extract_strided_slice %157 {offsets = [0, 0], sizes = [16, 128], strides = [1, 1]} : vector<22x128xf32> to vector<16x128xf32>
    %159 = vector.extract_strided_slice %9 {offsets = [4, 0], sizes = [1, 128], strides = [1, 1]} : vector<49x128xf32> to vector<1x128xf32>
    %160 = vector.broadcast %159 : vector<1x128xf32> to vector<16x128xf32>
    %161 = arith.mulf %158, %160 : vector<16x128xf32>
    %162 = arith.addf %156, %161 : vector<16x128xf32>
    %163 = vector.extract_strided_slice %157 {offsets = [1, 0], sizes = [16, 128], strides = [1, 1]} : vector<22x128xf32> to vector<16x128xf32>
    %164 = vector.extract_strided_slice %9 {offsets = [11, 0], sizes = [1, 128], strides = [1, 1]} : vector<49x128xf32> to vector<1x128xf32>
    %165 = vector.broadcast %164 : vector<1x128xf32> to vector<16x128xf32>
    %166 = arith.mulf %163, %165 : vector<16x128xf32>
    %167 = arith.addf %162, %166 : vector<16x128xf32>
    %168 = vector.extract_strided_slice %157 {offsets = [2, 0], sizes = [16, 128], strides = [1, 1]} : vector<22x128xf32> to vector<16x128xf32>
    %169 = vector.extract_strided_slice %9 {offsets = [18, 0], sizes = [1, 128], strides = [1, 1]} : vector<49x128xf32> to vector<1x128xf32>
    %170 = vector.broadcast %169 : vector<1x128xf32> to vector<16x128xf32>
    %171 = arith.mulf %168, %170 : vector<16x128xf32>
    %172 = arith.addf %167, %171 : vector<16x128xf32>
    %173 = vector.extract_strided_slice %157 {offsets = [3, 0], sizes = [16, 128], strides = [1, 1]} : vector<22x128xf32> to vector<16x128xf32>
    %174 = vector.extract_strided_slice %9 {offsets = [25, 0], sizes = [1, 128], strides = [1, 1]} : vector<49x128xf32> to vector<1x128xf32>
    %175 = vector.broadcast %174 : vector<1x128xf32> to vector<16x128xf32>
    %176 = arith.mulf %173, %175 : vector<16x128xf32>
    %177 = arith.addf %172, %176 : vector<16x128xf32>
    %178 = vector.extract_strided_slice %157 {offsets = [4, 0], sizes = [16, 128], strides = [1, 1]} : vector<22x128xf32> to vector<16x128xf32>
    %179 = vector.extract_strided_slice %9 {offsets = [32, 0], sizes = [1, 128], strides = [1, 1]} : vector<49x128xf32> to vector<1x128xf32>
    %180 = vector.broadcast %179 : vector<1x128xf32> to vector<16x128xf32>
    %181 = arith.mulf %178, %180 : vector<16x128xf32>
    %182 = arith.addf %177, %181 : vector<16x128xf32>
    %183 = vector.extract_strided_slice %157 {offsets = [5, 0], sizes = [16, 128], strides = [1, 1]} : vector<22x128xf32> to vector<16x128xf32>
    %184 = vector.extract_strided_slice %9 {offsets = [39, 0], sizes = [1, 128], strides = [1, 1]} : vector<49x128xf32> to vector<1x128xf32>
    %185 = vector.broadcast %184 : vector<1x128xf32> to vector<16x128xf32>
    %186 = arith.mulf %183, %185 : vector<16x128xf32>
    %187 = arith.addf %182, %186 : vector<16x128xf32>
    %188 = vector.extract_strided_slice %157 {offsets = [6, 0], sizes = [16, 128], strides = [1, 1]} : vector<22x128xf32> to vector<16x128xf32>
    %189 = vector.extract_strided_slice %9 {offsets = [46, 0], sizes = [1, 128], strides = [1, 1]} : vector<49x128xf32> to vector<1x128xf32>
    %190 = vector.broadcast %189 : vector<1x128xf32> to vector<16x128xf32>
    %191 = arith.mulf %188, %190 : vector<16x128xf32>
    %192 = arith.addf %187, %191 : vector<16x128xf32>
    %193 = vector.extract_strided_slice %8 {offsets = [0, 40], sizes = [22, 128], strides = [1, 1]} : vector<22x176xf32> to vector<22x128xf32>
    %194 = vector.extract_strided_slice %193 {offsets = [0, 0], sizes = [16, 128], strides = [1, 1]} : vector<22x128xf32> to vector<16x128xf32>
    %195 = vector.extract_strided_slice %9 {offsets = [5, 0], sizes = [1, 128], strides = [1, 1]} : vector<49x128xf32> to vector<1x128xf32>
    %196 = vector.broadcast %195 : vector<1x128xf32> to vector<16x128xf32>
    %197 = arith.mulf %194, %196 : vector<16x128xf32>
    %198 = arith.addf %192, %197 : vector<16x128xf32>
    %199 = vector.extract_strided_slice %193 {offsets = [1, 0], sizes = [16, 128], strides = [1, 1]} : vector<22x128xf32> to vector<16x128xf32>
    %200 = vector.extract_strided_slice %9 {offsets = [12, 0], sizes = [1, 128], strides = [1, 1]} : vector<49x128xf32> to vector<1x128xf32>
    %201 = vector.broadcast %200 : vector<1x128xf32> to vector<16x128xf32>
    %202 = arith.mulf %199, %201 : vector<16x128xf32>
    %203 = arith.addf %198, %202 : vector<16x128xf32>
    %204 = vector.extract_strided_slice %193 {offsets = [2, 0], sizes = [16, 128], strides = [1, 1]} : vector<22x128xf32> to vector<16x128xf32>
    %205 = vector.extract_strided_slice %9 {offsets = [19, 0], sizes = [1, 128], strides = [1, 1]} : vector<49x128xf32> to vector<1x128xf32>
    %206 = vector.broadcast %205 : vector<1x128xf32> to vector<16x128xf32>
    %207 = arith.mulf %204, %206 : vector<16x128xf32>
    %208 = arith.addf %203, %207 : vector<16x128xf32>
    %209 = vector.extract_strided_slice %193 {offsets = [3, 0], sizes = [16, 128], strides = [1, 1]} : vector<22x128xf32> to vector<16x128xf32>
    %210 = vector.extract_strided_slice %9 {offsets = [26, 0], sizes = [1, 128], strides = [1, 1]} : vector<49x128xf32> to vector<1x128xf32>
    %211 = vector.broadcast %210 : vector<1x128xf32> to vector<16x128xf32>
    %212 = arith.mulf %209, %211 : vector<16x128xf32>
    %213 = arith.addf %208, %212 : vector<16x128xf32>
    %214 = vector.extract_strided_slice %193 {offsets = [4, 0], sizes = [16, 128], strides = [1, 1]} : vector<22x128xf32> to vector<16x128xf32>
    %215 = vector.extract_strided_slice %9 {offsets = [33, 0], sizes = [1, 128], strides = [1, 1]} : vector<49x128xf32> to vector<1x128xf32>
    %216 = vector.broadcast %215 : vector<1x128xf32> to vector<16x128xf32>
    %217 = arith.mulf %214, %216 : vector<16x128xf32>
    %218 = arith.addf %213, %217 : vector<16x128xf32>
    %219 = vector.extract_strided_slice %193 {offsets = [5, 0], sizes = [16, 128], strides = [1, 1]} : vector<22x128xf32> to vector<16x128xf32>
    %220 = vector.extract_strided_slice %9 {offsets = [40, 0], sizes = [1, 128], strides = [1, 1]} : vector<49x128xf32> to vector<1x128xf32>
    %221 = vector.broadcast %220 : vector<1x128xf32> to vector<16x128xf32>
    %222 = arith.mulf %219, %221 : vector<16x128xf32>
    %223 = arith.addf %218, %222 : vector<16x128xf32>
    %224 = vector.extract_strided_slice %193 {offsets = [6, 0], sizes = [16, 128], strides = [1, 1]} : vector<22x128xf32> to vector<16x128xf32>
    %225 = vector.extract_strided_slice %9 {offsets = [47, 0], sizes = [1, 128], strides = [1, 1]} : vector<49x128xf32> to vector<1x128xf32>
    %226 = vector.broadcast %225 : vector<1x128xf32> to vector<16x128xf32>
    %227 = arith.mulf %224, %226 : vector<16x128xf32>
    %228 = arith.addf %223, %227 : vector<16x128xf32>
    %229 = vector.extract_strided_slice %8 {offsets = [0, 48], sizes = [22, 128], strides = [1, 1]} : vector<22x176xf32> to vector<22x128xf32>
    %230 = vector.extract_strided_slice %229 {offsets = [0, 0], sizes = [16, 128], strides = [1, 1]} : vector<22x128xf32> to vector<16x128xf32>
    %231 = vector.extract_strided_slice %9 {offsets = [6, 0], sizes = [1, 128], strides = [1, 1]} : vector<49x128xf32> to vector<1x128xf32>
    %232 = vector.broadcast %231 : vector<1x128xf32> to vector<16x128xf32>
    %233 = arith.mulf %230, %232 : vector<16x128xf32>
    %234 = arith.addf %228, %233 : vector<16x128xf32>
    %235 = vector.extract_strided_slice %229 {offsets = [1, 0], sizes = [16, 128], strides = [1, 1]} : vector<22x128xf32> to vector<16x128xf32>
    %236 = vector.extract_strided_slice %9 {offsets = [13, 0], sizes = [1, 128], strides = [1, 1]} : vector<49x128xf32> to vector<1x128xf32>
    %237 = vector.broadcast %236 : vector<1x128xf32> to vector<16x128xf32>
    %238 = arith.mulf %235, %237 : vector<16x128xf32>
    %239 = arith.addf %234, %238 : vector<16x128xf32>
    %240 = vector.extract_strided_slice %229 {offsets = [2, 0], sizes = [16, 128], strides = [1, 1]} : vector<22x128xf32> to vector<16x128xf32>
    %241 = vector.extract_strided_slice %9 {offsets = [20, 0], sizes = [1, 128], strides = [1, 1]} : vector<49x128xf32> to vector<1x128xf32>
    %242 = vector.broadcast %241 : vector<1x128xf32> to vector<16x128xf32>
    %243 = arith.mulf %240, %242 : vector<16x128xf32>
    %244 = arith.addf %239, %243 : vector<16x128xf32>
    %245 = vector.extract_strided_slice %229 {offsets = [3, 0], sizes = [16, 128], strides = [1, 1]} : vector<22x128xf32> to vector<16x128xf32>
    %246 = vector.extract_strided_slice %9 {offsets = [27, 0], sizes = [1, 128], strides = [1, 1]} : vector<49x128xf32> to vector<1x128xf32>
    %247 = vector.broadcast %246 : vector<1x128xf32> to vector<16x128xf32>
    %248 = arith.mulf %245, %247 : vector<16x128xf32>
    %249 = arith.addf %244, %248 : vector<16x128xf32>
    %250 = vector.extract_strided_slice %229 {offsets = [4, 0], sizes = [16, 128], strides = [1, 1]} : vector<22x128xf32> to vector<16x128xf32>
    %251 = vector.extract_strided_slice %9 {offsets = [34, 0], sizes = [1, 128], strides = [1, 1]} : vector<49x128xf32> to vector<1x128xf32>
    %252 = vector.broadcast %251 : vector<1x128xf32> to vector<16x128xf32>
    %253 = arith.mulf %250, %252 : vector<16x128xf32>
    %254 = arith.addf %249, %253 : vector<16x128xf32>
    %255 = vector.extract_strided_slice %229 {offsets = [5, 0], sizes = [16, 128], strides = [1, 1]} : vector<22x128xf32> to vector<16x128xf32>
    %256 = vector.extract_strided_slice %9 {offsets = [41, 0], sizes = [1, 128], strides = [1, 1]} : vector<49x128xf32> to vector<1x128xf32>
    %257 = vector.broadcast %256 : vector<1x128xf32> to vector<16x128xf32>
    %258 = arith.mulf %255, %257 : vector<16x128xf32>
    %259 = arith.addf %254, %258 : vector<16x128xf32>
    %260 = vector.extract_strided_slice %229 {offsets = [6, 0], sizes = [16, 128], strides = [1, 1]} : vector<22x128xf32> to vector<16x128xf32>
    %261 = vector.extract_strided_slice %9 {offsets = [48, 0], sizes = [1, 128], strides = [1, 1]} : vector<49x128xf32> to vector<1x128xf32>
    %262 = vector.broadcast %261 : vector<1x128xf32> to vector<16x128xf32>
    %263 = arith.mulf %260, %262 : vector<16x128xf32>
    %264 = arith.addf %259, %263 : vector<16x128xf32>
    %265 = vector.extract_strided_slice %264 {offsets = [0, 0], sizes = [16, 8], strides = [1, 1]} : vector<16x128xf32> to vector<16x8xf32>
    %266 = vector.extract_strided_slice %264 {offsets = [0, 8], sizes = [16, 8], strides = [1, 1]} : vector<16x128xf32> to vector<16x8xf32>
    %267 = vector.extract_strided_slice %264 {offsets = [0, 16], sizes = [16, 8], strides = [1, 1]} : vector<16x128xf32> to vector<16x8xf32>
    %268 = vector.extract_strided_slice %264 {offsets = [0, 24], sizes = [16, 8], strides = [1, 1]} : vector<16x128xf32> to vector<16x8xf32>
    %269 = vector.extract_strided_slice %264 {offsets = [0, 32], sizes = [16, 8], strides = [1, 1]} : vector<16x128xf32> to vector<16x8xf32>
    %270 = vector.extract_strided_slice %264 {offsets = [0, 40], sizes = [16, 8], strides = [1, 1]} : vector<16x128xf32> to vector<16x8xf32>
    %271 = vector.extract_strided_slice %264 {offsets = [0, 48], sizes = [16, 8], strides = [1, 1]} : vector<16x128xf32> to vector<16x8xf32>
    %272 = vector.extract_strided_slice %264 {offsets = [0, 56], sizes = [16, 8], strides = [1, 1]} : vector<16x128xf32> to vector<16x8xf32>
    %273 = vector.extract_strided_slice %264 {offsets = [0, 64], sizes = [16, 8], strides = [1, 1]} : vector<16x128xf32> to vector<16x8xf32>
    %274 = vector.extract_strided_slice %264 {offsets = [0, 72], sizes = [16, 8], strides = [1, 1]} : vector<16x128xf32> to vector<16x8xf32>
    %275 = vector.extract_strided_slice %264 {offsets = [0, 80], sizes = [16, 8], strides = [1, 1]} : vector<16x128xf32> to vector<16x8xf32>
    %276 = vector.extract_strided_slice %264 {offsets = [0, 88], sizes = [16, 8], strides = [1, 1]} : vector<16x128xf32> to vector<16x8xf32>
    %277 = vector.extract_strided_slice %264 {offsets = [0, 96], sizes = [16, 8], strides = [1, 1]} : vector<16x128xf32> to vector<16x8xf32>
    %278 = vector.extract_strided_slice %264 {offsets = [0, 104], sizes = [16, 8], strides = [1, 1]} : vector<16x128xf32> to vector<16x8xf32>
    %279 = vector.extract_strided_slice %264 {offsets = [0, 112], sizes = [16, 8], strides = [1, 1]} : vector<16x128xf32> to vector<16x8xf32>
    %280 = vector.extract_strided_slice %264 {offsets = [0, 120], sizes = [16, 8], strides = [1, 1]} : vector<16x128xf32> to vector<16x8xf32>
    %281 = tpu.concatenate %265, %266, %267, %268, %269, %270, %271, %272, %273, %274, %275, %276, %277, %278, %279, %280 in 0 : vector<16x8xf32>, vector<16x8xf32>, vector<16x8xf32>, vector<16x8xf32>, vector<16x8xf32>, vector<16x8xf32>, vector<16x8xf32>, vector<16x8xf32>, vector<16x8xf32>, vector<16x8xf32>, vector<16x8xf32>, vector<16x8xf32>, vector<16x8xf32>, vector<16x8xf32>, vector<16x8xf32>, vector<16x8xf32> -> vector<256x8xf32>
    %cst_13 = arith.constant dense<0.000000e+00> : vector<256xf32>
    %282 = vector.multi_reduction <add>, %281, %cst_13 [1] : vector<256x8xf32> to vector<256xf32>
    %283 = vector.shape_cast %282 : vector<256xf32> to vector<256x1xf32>
    %cst_14 = arith.constant 8.000000e+00 : f32
    %284 = vector.broadcast %cst_14 : f32 to vector<256x1xf32>
    %285 = arith.divf %283, %284 : vector<256x1xf32>
    %286 = vector.broadcast %285 : vector<256x1xf32> to vector<256x8xf32>
    %287 = arith.subf %281, %286 : vector<256x8xf32>
    %288 = arith.mulf %287, %287 : vector<256x8xf32>
    %cst_15 = arith.constant dense<0.000000e+00> : vector<256xf32>
    %289 = vector.multi_reduction <add>, %288, %cst_15 [1] : vector<256x8xf32> to vector<256xf32>
    %290 = vector.shape_cast %289 : vector<256xf32> to vector<256x1xf32>
    %cst_16 = arith.constant 8.000000e+00 : f32
    %291 = vector.broadcast %cst_16 : f32 to vector<256x1xf32>
    %292 = arith.divf %290, %291 : vector<256x1xf32>
    %cst_17 = arith.constant 9.99999997E-7 : f32
    %293 = vector.broadcast %cst_17 : f32 to vector<256x1xf32>
    %294 = arith.addf %292, %293 : vector<256x1xf32>
    %295 = math.rsqrt %294 : vector<256x1xf32>
    %296 = vector.broadcast %295 : vector<256x1xf32> to vector<256x8xf32>
    %297 = arith.mulf %287, %296 : vector<256x8xf32>
    %298 = arith.truncf %297 : vector<256x8xf32> to vector<256x8xbf16>
    %c0_18 = arith.constant 0 : index
    %c0_19 = arith.constant 0 : index
    %299 = vector.load %arg4[%c0_18, %c0_19] : memref<8x32xbf16, #tpu.memory_space<vmem>>, vector<8x32xbf16>
    %cst_20 = arith.constant dense<0.000000e+00> : vector<256x32xf32>
    %300 = tpu.matmul %298, %299, %cst_20 {dimension_numbers = #tpu.dot_dimension_numbers<[1], [0], [0], [1], [0, 0, 1, 1], [], []>} : vector<256x8xbf16>, vector<8x32xbf16>, vector<256x32xf32> -> vector<256x32xf32>
    %c0_21 = arith.constant 0 : index
    %c0_22 = arith.constant 0 : index
    %301 = vector.load %arg5[%c0_21, %c0_22] : memref<1x32xf32, #tpu.memory_space<vmem>>, vector<1x32xf32>
    %302 = vector.broadcast %301 : vector<1x32xf32> to vector<256x32xf32>
    %303 = arith.addf %300, %302 : vector<256x32xf32>
    %cst_23 = arith.constant 5.000000e-01 : f32
    %304 = vector.broadcast %cst_23 : f32 to vector<256x32xf32>
    %305 = arith.mulf %304, %303 : vector<256x32xf32>
    %cst_24 = arith.constant 0.707106769 : f32
    %306 = vector.broadcast %cst_24 : f32 to vector<256x32xf32>
    %307 = arith.mulf %303, %306 : vector<256x32xf32>
    %308 = math.erf %307 : vector<256x32xf32>
    %cst_25 = arith.constant 1.000000e+00 : f32
    %309 = vector.broadcast %cst_25 : f32 to vector<256x32xf32>
    %310 = arith.addf %309, %308 : vector<256x32xf32>
    %311 = arith.mulf %305, %310 : vector<256x32xf32>
    %312 = arith.truncf %311 : vector<256x32xf32> to vector<256x32xbf16>
    %c0_26 = arith.constant 0 : index
    %c0_27 = arith.constant 0 : index
    %313 = vector.load %arg6[%c0_26, %c0_27] : memref<32x8xbf16, #tpu.memory_space<vmem>>, vector<32x8xbf16>
    %cst_28 = arith.constant dense<0.000000e+00> : vector<256x8xf32>
    %314 = tpu.matmul %312, %313, %cst_28 {dimension_numbers = #tpu.dot_dimension_numbers<[1], [0], [0], [1], [0, 0, 1, 1], [], []>} : vector<256x32xbf16>, vector<32x8xbf16>, vector<256x8xf32> -> vector<256x8xf32>
    %c0_29 = arith.constant 0 : index
    %c0_30 = arith.constant 0 : index
    %315 = vector.load %arg7[%c0_29, %c0_30] : memref<1x8xf32, #tpu.memory_space<vmem>>, vector<1x8xf32>
    %316 = vector.broadcast %315 : vector<1x8xf32> to vector<256x8xf32>
    %317 = arith.addf %314, %316 : vector<256x8xf32>
    %318 = vector.extract_strided_slice %317 {offsets = [0, 0], sizes = [16, 8], strides = [1, 1]} : vector<256x8xf32> to vector<16x8xf32>
    %319 = vector.extract_strided_slice %317 {offsets = [16, 0], sizes = [16, 8], strides = [1, 1]} : vector<256x8xf32> to vector<16x8xf32>
    %320 = vector.extract_strided_slice %317 {offsets = [32, 0], sizes = [16, 8], strides = [1, 1]} : vector<256x8xf32> to vector<16x8xf32>
    %321 = vector.extract_strided_slice %317 {offsets = [48, 0], sizes = [16, 8], strides = [1, 1]} : vector<256x8xf32> to vector<16x8xf32>
    %322 = vector.extract_strided_slice %317 {offsets = [64, 0], sizes = [16, 8], strides = [1, 1]} : vector<256x8xf32> to vector<16x8xf32>
    %323 = vector.extract_strided_slice %317 {offsets = [80, 0], sizes = [16, 8], strides = [1, 1]} : vector<256x8xf32> to vector<16x8xf32>
    %324 = vector.extract_strided_slice %317 {offsets = [96, 0], sizes = [16, 8], strides = [1, 1]} : vector<256x8xf32> to vector<16x8xf32>
    %325 = vector.extract_strided_slice %317 {offsets = [112, 0], sizes = [16, 8], strides = [1, 1]} : vector<256x8xf32> to vector<16x8xf32>
    %326 = vector.extract_strided_slice %317 {offsets = [128, 0], sizes = [16, 8], strides = [1, 1]} : vector<256x8xf32> to vector<16x8xf32>
    %327 = vector.extract_strided_slice %317 {offsets = [144, 0], sizes = [16, 8], strides = [1, 1]} : vector<256x8xf32> to vector<16x8xf32>
    %328 = vector.extract_strided_slice %317 {offsets = [160, 0], sizes = [16, 8], strides = [1, 1]} : vector<256x8xf32> to vector<16x8xf32>
    %329 = vector.extract_strided_slice %317 {offsets = [176, 0], sizes = [16, 8], strides = [1, 1]} : vector<256x8xf32> to vector<16x8xf32>
    %330 = vector.extract_strided_slice %317 {offsets = [192, 0], sizes = [16, 8], strides = [1, 1]} : vector<256x8xf32> to vector<16x8xf32>
    %331 = vector.extract_strided_slice %317 {offsets = [208, 0], sizes = [16, 8], strides = [1, 1]} : vector<256x8xf32> to vector<16x8xf32>
    %332 = vector.extract_strided_slice %317 {offsets = [224, 0], sizes = [16, 8], strides = [1, 1]} : vector<256x8xf32> to vector<16x8xf32>
    %333 = vector.extract_strided_slice %317 {offsets = [240, 0], sizes = [16, 8], strides = [1, 1]} : vector<256x8xf32> to vector<16x8xf32>
    %334 = tpu.concatenate %318, %319, %320, %321, %322, %323, %324, %325, %326, %327, %328, %329, %330, %331, %332, %333 in 1 : vector<16x8xf32>, vector<16x8xf32>, vector<16x8xf32>, vector<16x8xf32>, vector<16x8xf32>, vector<16x8xf32>, vector<16x8xf32>, vector<16x8xf32>, vector<16x8xf32>, vector<16x8xf32>, vector<16x8xf32>, vector<16x8xf32>, vector<16x8xf32>, vector<16x8xf32>, vector<16x8xf32>, vector<16x8xf32> -> vector<16x128xf32>
    %c0_31 = arith.constant 0 : index
    %c0_32 = arith.constant 0 : index
    %c0_33 = arith.constant 0 : index
    %335 = vector.load %arg1[%c0_31, %c0_32, %c0_33] : memref<1x16x128xf32, #tpu.memory_space<vmem>>, vector<1x16x128xf32>
    %336 = vector.shape_cast %335 : vector<1x16x128xf32> to vector<16x128xf32>
    %337 = arith.addf %336, %334 : vector<16x128xf32>
    %c0_34 = arith.constant 0 : index
    %c0_35 = arith.constant 0 : index
    %c0_36 = arith.constant 0 : index
    %338 = vector.load %arg8[%c0_34, %c0_35, %c0_36] : memref<1x16x128xf32, #tpu.memory_space<vmem>>, vector<1x16x128xf32>
    %339 = vector.shape_cast %338 : vector<1x16x128xf32> to vector<16x128xf32>
    %340 = vector.shape_cast %337 : vector<16x128xf32> to vector<1x16x128xf32>
    tpu.vector_store %arg8[%c0_34, %c0_35, %c0_36], %340 {strides = array<i32>} : memref<1x16x128xf32, #tpu.memory_space<vmem>>, vector<1x16x128xf32>,
    return
  }
  func.func @transform_0(%arg0: i32) -> (i32, i32, i32) {
    %c0_i32 = arith.constant 0 : i32
    %c0_i32_0 = arith.constant 0 : i32
    %c0_i32_1 = arith.constant 0 : i32
    return %arg0, %c0_i32, %c0_i32_0 : i32, i32, i32
  }
  func.func @transform_1(%arg0: i32) -> (i32, i32) {
    %c0_i32 = arith.constant 0 : i32
    %c0_i32_0 = arith.constant 0 : i32
    %c0_i32_1 = arith.constant 0 : i32
    return %c0_i32, %c0_i32_0 : i32, i32
  }
  func.func @transform_2(%arg0: i32) -> (i32, i32) {
    %c0_i32 = arith.constant 0 : i32
    %c0_i32_0 = arith.constant 0 : i32
    %c0_i32_1 = arith.constant 0 : i32
    return %c0_i32, %c0_i32_0 : i32, i32
  }
  func.func @transform_3(%arg0: i32) -> (i32, i32) {
    %c0_i32 = arith.constant 0 : i32
    %c0_i32_0 = arith.constant 0 : i32
    %c0_i32_1 = arith.constant 0 : i32
    return %c0_i32, %c0_i32_0 : i32, i32
  }
  func.func @transform_4(%arg0: i32) -> (i32, i32) {
    %c0_i32 = arith.constant 0 : i32
    %c0_i32_0 = arith.constant 0 : i32
    %c0_i32_1 = arith.constant 0 : i32
    return %c0_i32, %c0_i32_0 : i32, i32
  }
  func.func @transform_5(%arg0: i32) -> (i32, i32) {
    %c0_i32 = arith.constant 0 : i32
    %c0_i32_0 = arith.constant 0 : i32
    %c0_i32_1 = arith.constant 0 : i32
    return %c0_i32, %c0_i32_0 : i32, i32
  }
  func.func @transform_6(%arg0: i32) -> (i32, i32) {
    %c0_i32 = arith.constant 0 : i32
    %c0_i32_0 = arith.constant 0 : i32
    %c0_i32_1 = arith.constant 0 : i32
    return %c0_i32, %c0_i32_0 : i32, i32
  }
  func.func @transform_7(%arg0: i32) -> (i32, i32, i32) {
    %c0_i32 = arith.constant 0 : i32
    %c0_i32_0 = arith.constant 0 : i32
    %c0_i32_1 = arith.constant 0 : i32
    return %arg0, %c0_i32, %c0_i32_0 : i32, i32, i32
  }
}

</mosaic_0001>

<llo_original>
// kernel: convnext_block.1
$region0: #{convnext_block.1}
  #allocation0 [shape = 'u32[]', space=smem, size = 0x4, offset = 0x4, fixed_abs, tag = 'smem constant byte address 0x4 - core index']
  #allocation1 [shape = 'u32[144,128]{1,0:T(1,128)}', space=vmem, size = 0x12000, scoped, tag = 'internal scratch']
  #allocation2 [shape = 'f32[22,176]{1,0:T(8,128)}', space=vmem, size = 0x6000, scoped, tag = 'scratch operand']
  %s0 = inlined_call_operand.vmem [shape: f32[2,16,128], index: 0, kind: input, shape index: {}]
  %s1 = inlined_call_operand.vmem [shape: f32[49,128], index: 1, kind: input, shape index: {}]
  %s2 = inlined_call_operand.vmem [shape: f32[1,128], index: 2, kind: input, shape index: {}]
  %s3 = inlined_call_operand.vmem [shape: bf16[8,32], index: 3, kind: input, shape index: {}]
  %s4 = inlined_call_operand.vmem [shape: f32[1,32], index: 4, kind: input, shape index: {}]
  %s5 = inlined_call_operand.vmem [shape: bf16[32,8], index: 5, kind: input, shape index: {}]
  %s6 = inlined_call_operand.vmem [shape: f32[1,8], index: 6, kind: input, shape index: {}]
  %s7 = inlined_call_operand.vmem [shape: f32[2,16,128], index: 7, kind: output, shape index: {}]
  %s8 = sld [smem:[#allocation0]]
  $region61: #{convnext_block.1} parent=0
    _
  %s10 = ssub.s32 1, %s8
  %s11 = scalar_select 0, %s10, %s8
  loop: start=0, step=1, limit=4
  $region2: #{convnext_block.1} parent=0 // loop_pre_header
    _
  $region3: #{convnext_block.1} parent=0 // loop_header
    %s13 = sphi 0, %s17
    %p14 = scmp.ge.s32.totalorder %s13, 4
    %s23 = sphi 0, %s25
    %s26 = sphi 0, %s23
    %s27 = sphi 0, %s26
    %s43 = sphi 0, %s27
    %s47 = sphi 0, %s47
    %s49 = sphi 0, %s47
    %s50 = sphi 0, %s49
    %s64 = sphi 0, %s50
    %s68 = sphi 0, %s68
    %s70 = sphi 0, %s68
    %s71 = sphi 0, %s70
    %s85 = sphi 0, %s71
    %s89 = sphi 0, %s89
    %s91 = sphi 0, %s89
    %s92 = sphi 0, %s91
    %s106 = sphi 0, %s92
    %s110 = sphi 0, %s110
    %s112 = sphi 0, %s110
    %s113 = sphi 0, %s112
    %s127 = sphi 0, %s113
    %s131 = sphi 0, %s131
    %s133 = sphi 0, %s131
    %s134 = sphi 0, %s133
    %s148 = sphi 0, %s134
    %s152 = sphi 0, %s152
    %s154 = sphi 0, %s152
    %s155 = sphi 0, %s154
    %s169 = sphi 0, %s155
    %s175 = sphi 0, %s177
    %s178 = sphi 0, %s175
    %s179 = sphi 0, %s178
    %s195 = sphi 0, %s179
  $region4: #{convnext_block.1} parent=0 // loop_header_branch
    %16 = sbr.rel (%p14) target = $region8
  $region5: #{convnext_block.1} parent=0 // loop_body
    %s18 = ssub.s32 %s13, 1
    %s19 = ssub.s32 %s13, 2
    %s20 = sadd.s32 %s13, 1
    %s21 = ssub.s32 %s13, %s20
    %p22 = scmp.eq.s32.totalorder %s21, 0
    %s24 = sadd.s32 %s23, 1
    %s25 = scalar_select %p22, %s23, %s24
    %p28 = pneg %p22
    %p29 = scmp.eq.s32.totalorder %s13, 1
    %p30 = por %p28, %p29
    %p31 = scmp.ne.s32.totalorder %s23, %s26
    %p32 = scmp.eq.s32.totalorder %s13, 0
    %p33 = por %p31, %p32
    %p34 = scmp.ne.s32.totalorder %s23, %s26
    %p35 = scmp.eq.s32.totalorder %s18, 1
    %p36 = por %p34, %p35
    %p37 = scmp.ne.s32.totalorder %s26, %s27
    %p38 = scmp.eq.s32.totalorder %s18, 0
    %p39 = por %p37, %p38
    %p40 = scmp.ne.s32.totalorder %s26, %s27
    %p41 = scmp.eq.s32.totalorder %s19, 1
    %p42 = por %p40, %p41
    %p44 = scmp.ne.s32.totalorder %s27, %s43
    %p45 = scmp.eq.s32.totalorder %s19, 0
    %p46 = por %p44, %p45
    %s48 = sadd.s32 %s47, 1
    %p51 = scmp.eq.s32.totalorder %s13, 1
    %p52 = scmp.ne.s32.totalorder %s47, %s49
    %p53 = scmp.eq.s32.totalorder %s13, 0
    %p54 = por %p52, %p53
    %p55 = scmp.ne.s32.totalorder %s47, %s49
    %p56 = scmp.eq.s32.totalorder %s18, 1
    %p57 = por %p55, %p56
    %p58 = scmp.ne.s32.totalorder %s49, %s50
    %p59 = scmp.eq.s32.totalorder %s18, 0
    %p60 = por %p58, %p59
    %p61 = scmp.ne.s32.totalorder %s49, %s50
    %p62 = scmp.eq.s32.totalorder %s19, 1
    %p63 = por %p61, %p62
    %p65 = scmp.ne.s32.totalorder %s50, %s64
    %p66 = scmp.eq.s32.totalorder %s19, 0
    %p67 = por %p65, %p66
    %s69 = sadd.s32 %s68, 1
    %p72 = scmp.eq.s32.totalorder %s13, 1
    %p73 = scmp.ne.s32.totalorder %s68, %s70
    %p74 = scmp.eq.s32.totalorder %s13, 0
    %p75 = por %p73, %p74
    %p76 = scmp.ne.s32.totalorder %s68, %s70
    %p77 = scmp.eq.s32.totalorder %s18, 1
    %p78 = por %p76, %p77
    %p79 = scmp.ne.s32.totalorder %s70, %s71
    %p80 = scmp.eq.s32.totalorder %s18, 0
    %p81 = por %p79, %p80
    %p82 = scmp.ne.s32.totalorder %s70, %s71
    %p83 = scmp.eq.s32.totalorder %s19, 1
    %p84 = por %p82, %p83
    %p86 = scmp.ne.s32.totalorder %s71, %s85
    %p87 = scmp.eq.s32.totalorder %s19, 0
    %p88 = por %p86, %p87
    %s90 = sadd.s32 %s89, 1
    %p93 = scmp.eq.s32.totalorder %s13, 1
    %p94 = scmp.ne.s32.totalorder %s89, %s91
    %p95 = scmp.eq.s32.totalorder %s13, 0
    %p96 = por %p94, %p95
    %p97 = scmp.ne.s32.totalorder %s89, %s91
    %p98 = scmp.eq.s32.totalorder %s18, 1
    %p99 = por %p97, %p98
    %p100 = scmp.ne.s32.totalorder %s91, %s92
    %p101 = scmp.eq.s32.totalorder %s18, 0
    %p102 = por %p100, %p101
    %p103 = scmp.ne.s32.totalorder %s91, %s92
    %p104 = scmp.eq.s32.totalorder %s19, 1
    %p105 = por %p103, %p104
    %p107 = scmp.ne.s32.totalorder %s92, %s106
    %p108 = scmp.eq.s32.totalorder %s19, 0
    %p109 = por %p107, %p108
    %s111 = sadd.s32 %s110, 1
    %p114 = scmp.eq.s32.totalorder %s13, 1
    %p115 = scmp.ne.s32.totalorder %s110, %s112
    %p116 = scmp.eq.s32.totalorder %s13, 0
    %p117 = por %p115, %p116
    %p118 = scmp.ne.s32.totalorder %s110, %s112
    %p119 = scmp.eq.s32.totalorder %s18, 1
    %p120 = por %p118, %p119
    %p121 = scmp.ne.s32.totalorder %s112, %s113
    %p122 = scmp.eq.s32.totalorder %s18, 0
    %p123 = por %p121, %p122
    %p124 = scmp.ne.s32.totalorder %s112, %s113
    %p125 = scmp.eq.s32.totalorder %s19, 1
    %p126 = por %p124, %p125
    %p128 = scmp.ne.s32.totalorder %s113, %s127
    %p129 = scmp.eq.s32.totalorder %s19, 0
    %p130 = por %p128, %p129
    %s132 = sadd.s32 %s131, 1
    %p135 = scmp.eq.s32.totalorder %s13, 1
    %p136 = scmp.ne.s32.totalorder %s131, %s133
    %p137 = scmp.eq.s32.totalorder %s13, 0
    %p138 = por %p136, %p137
    %p139 = scmp.ne.s32.totalorder %s131, %s133
    %p140 = scmp.eq.s32.totalorder %s18, 1
    %p141 = por %p139, %p140
    %p142 = scmp.ne.s32.totalorder %s133, %s134
    %p143 = scmp.eq.s32.totalorder %s18, 0
    %p144 = por %p142, %p143
    %p145 = scmp.ne.s32.totalorder %s133, %s134
    %p146 = scmp.eq.s32.totalorder %s19, 1
    %p147 = por %p145, %p146
    %p149 = scmp.ne.s32.totalorder %s134, %s148
    %p150 = scmp.eq.s32.totalorder %s19, 0
    %p151 = por %p149, %p150
    %s153 = sadd.s32 %s152, 1
    %p156 = scmp.eq.s32.totalorder %s13, 1
    %p157 = scmp.ne.s32.totalorder %s152, %s154
    %p158 = scmp.eq.s32.totalorder %s13, 0
    %p159 = por %p157, %p158
    %p160 = scmp.ne.s32.totalorder %s152, %s154
    %p161 = scmp.eq.s32.totalorder %s18, 1
    %p162 = por %p160, %p161
    %p163 = scmp.ne.s32.totalorder %s154, %s155
    %p164 = scmp.eq.s32.totalorder %s18, 0
    %p165 = por %p163, %p164
    %p166 = scmp.ne.s32.totalorder %s154, %s155
    %p167 = scmp.eq.s32.totalorder %s19, 1
    %p168 = por %p166, %p167
    %p170 = scmp.ne.s32.totalorder %s155, %s169
    %p171 = scmp.eq.s32.totalorder %s19, 0
    %p172 = por %p170, %p171
    %s173 = ssub.s32 %s13, %s20
    %p174 = scmp.eq.s32.totalorder %s173, 0
    %s176 = sadd.s32 %s175, 1
    %s177 = scalar_select %p174, %s175, %s176
    %p180 = pneg %p174
    %p181 = scmp.eq.s32.totalorder %s13, 1
    %p182 = por %p180, %p181
    %p183 = scmp.ne.s32.totalorder %s175, %s178
    %p184 = scmp.eq.s32.totalorder %s13, 0
    %p185 = por %p183, %p184
    %p186 = scmp.ne.s32.totalorder %s175, %s178
    %p187 = scmp.eq.s32.totalorder %s18, 1
    %p188 = por %p186, %p187
    %p189 = scmp.ne.s32.totalorder %s178, %s179
    %p190 = scmp.eq.s32.totalorder %s18, 0
    %p191 = por %p189, %p190
    %p192 = scmp.ne.s32.totalorder %s178, %s179
    %p193 = scmp.eq.s32.totalorder %s19, 1
    %p194 = por %p192, %p193
    %p196 = scmp.ne.s32.totalorder %s179, %s195
    %p197 = scmp.eq.s32.totalorder %s19, 0
    %p198 = por %p196, %p197
    %p199 = scmp.le.s32.totalorder 1, %s13
    %p200 = scmp.lt.s32.totalorder %s13, 3
    %p201 = pnand %p199, %p200
    %p202 = pneg %p201
    // Predicated region
    $region9: #{convnext_block.1} parent=5 // pred_check
      _
    $region10: #{convnext_block.1} parent=5 // pred_check_branch
      %204 = sbr.rel (%p201) target = $region12
    $region11: #{convnext_block.1} parent=5 // pred_region
      %s205 = ssub.s32 %s13, 1
      // Predicated region
      $region13: #{convnext_block.1} parent=11 // pred_check
        %p206 = pneg %p60
      $region14: #{convnext_block.1} parent=11 // pred_check_branch
        %208 = sbr.rel (%p206) target = $region16
      $region15: #{convnext_block.1} parent=11 // pred_region
        _
      $region16: #{convnext_block.1} parent=11 // pred_fallthru
        _
      // Predicated region
      $region17: #{convnext_block.1} parent=11 // pred_check
        %p209 = pneg %p81
      $region18: #{convnext_block.1} parent=11 // pred_check_branch
        %211 = sbr.rel (%p209) target = $region20
      $region19: #{convnext_block.1} parent=11 // pred_region
        _
      $region20: #{convnext_block.1} parent=11 // pred_fallthru
        _
      // Predicated region
      $region21: #{convnext_block.1} parent=11 // pred_check
        %p212 = pneg %p102
      $region22: #{convnext_block.1} parent=11 // pred_check_branch
        %214 = sbr.rel (%p212) target = $region24
      $region23: #{convnext_block.1} parent=11 // pred_region
        _
      $region24: #{convnext_block.1} parent=11 // pred_fallthru
        _
      // Predicated region
      $region25: #{convnext_block.1} parent=11 // pred_check
        %p215 = pneg %p123
      $region26: #{convnext_block.1} parent=11 // pred_check_branch
        %217 = sbr.rel (%p215) target = $region28
      $region27: #{convnext_block.1} parent=11 // pred_region
        _
      $region28: #{convnext_block.1} parent=11 // pred_fallthru
        _
      // Predicated region
      $region29: #{convnext_block.1} parent=11 // pred_check
        %p218 = pneg %p144
      $region30: #{convnext_block.1} parent=11 // pred_check_branch
        %220 = sbr.rel (%p218) target = $region32
      $region31: #{convnext_block.1} parent=11 // pred_region
        _
      $region32: #{convnext_block.1} parent=11 // pred_fallthru
        _
      // Predicated region
      $region33: #{convnext_block.1} parent=11 // pred_check
        %p221 = pneg %p165
      $region34: #{convnext_block.1} parent=11 // pred_check_branch
        %223 = sbr.rel (%p221) target = $region36
      $region35: #{convnext_block.1} parent=11 // pred_region
        _
      $region36: #{convnext_block.1} parent=11 // pred_fallthru
        _
    $region12: #{convnext_block.1} parent=5 // pred_fallthru
      _
    %p224 = scmp.lt.s32.totalorder %s13, 2
    // Predicated region
    $region37: #{convnext_block.1} parent=5 // pred_check
      %p225 = pneg %p224
    $region38: #{convnext_block.1} parent=5 // pred_check_branch
      %227 = sbr.rel (%p225) target = $region40
    $region39: #{convnext_block.1} parent=5 // pred_region
      // Predicated region
      $region41: #{convnext_block.1} parent=39 // pred_check
        %p228 = pneg %p33
      $region42: #{convnext_block.1} parent=39 // pred_check_branch
        %230 = sbr.rel (%p228) target = $region44
      $region43: #{convnext_block.1} parent=39 // pred_region
        %p231 = scmp.lt.s32.totalorder %s13, 1
        %s232 = scalar_select %p231, %s13, 1
        %s233 = smul.addr %s232, 2
        %s234 = smul.addr %s233, 8
        %s235 = scalar_lea.vmem %s0, %s234
      $region44: #{convnext_block.1} parent=39 // pred_fallthru
        _
    $region40: #{convnext_block.1} parent=5 // pred_fallthru
      _
    %p236 = scmp.le.s32.totalorder 1, %s13
    %p237 = scmp.lt.s32.totalorder %s13, 3
    %p238 = pnand %p236, %p237
    %p239 = pneg %p238
    // Predicated region
    $region45: #{convnext_block.1} parent=5 // pred_check
      _
    $region46: #{convnext_block.1} parent=5 // pred_check_branch
      %241 = sbr.rel (%p238) target = $region48
    $region47: #{convnext_block.1} parent=5 // pred_region
      %s242 = ssub.s32 %s13, 1
      %p243 = scmp.lt.s32.totalorder %s18, 1
      %s244 = scalar_select %p243, %s18, 1
      %s245 = smul.addr %s244, 2
      %s246 = smul.addr %s245, 8
      %s247 = scalar_lea.vmem %s0, %s246
      %p248 = pneg %p39
      %p249 = pneg %p36
      %p250 = pneg %p60
      %p251 = pneg %p57
      %p252 = pneg %p81
      %p253 = pneg %p78
      %p254 = pneg %p102
      %p255 = pneg %p99
      %p256 = pneg %p123
      %p257 = pneg %p120
      %p258 = pneg %p144
      %p259 = pneg %p141
      %p260 = pneg %p165
      %p261 = pneg %p162
      %p262 = pneg %p191
      %p263 = pneg %p188
      %p264 = scmp.lt.s32.totalorder %s18, 1
      %s265 = scalar_select %p264, %s18, 1
      %s266 = smul.addr %s265, 2
      %s267 = smul.addr %s266, 8
      %s268 = scalar_lea.vmem %s7, %s267
      %p269 = scmp.lt.s32.totalorder %s18, 1
      %s270 = scalar_select %p269, %s18, 1
      %s271 = smul.addr %s270, 2
      %s272 = smul.addr %s271, 8
      %s273 = scalar_lea.vmem %s0, %s272
      %p274 = scmp.lt.s32.totalorder %s18, 1
      %s275 = scalar_select %p274, %s18, 1
      %s276 = smul.addr %s275, 2
      %s277 = smul.addr %s276, 8
      %s278 = scalar_lea.vmem %s7, %s277
      %v280 = vld [vmem:[%s273] sm:$0xff]
      %v281 = vld [vmem:[%s273 + $0x8] sm:$0xff]
      %284 = vrot.lane.b32.xlu0 %v280, 24
      %v285 = vpop.permute.xlu0 %284
      %286 = vrot.lane.b32.xlu0 %v281, 24
      %v287 = vpop.permute.xlu0 %286
      %vm290 = vcmask 195584
      %v291 = vsel %vm290, 0.0, %v285
      %v292 = vsel %vm290, 0.0, %v287
      %v293 = vsel %vm290, %v285, 0.0
      %v294 = vsel %vm290, %v287, 0.0
      %vm299 = vcmask 1042432
      %v300 = vrot.slane %v291, 5
      %v301 = vrot.slane %v293, 5
      %v302 = vrot.slane %v292, 5
      %v303 = vsel %vm299, %v300, %v302
      %v304 = vrot.slane %v294, 5
      %v305 = vsel %vm299, %v301, %v304
      %312 = vst [vmem:[#allocation2] sm:$0xf8] %v300
      %vm313 = vcmask 392195
      %314 = vst.msk [vmem:[#allocation2 + $0x8] sm:$0xf8] %vm313, %v301
      %315 = vst [vmem:[#allocation2 + $0x10] sm:$0xff] %v303
      %vm316 = vcmask 392192
      %317 = vst.msk [vmem:[#allocation2 + $0x18] sm:$0xff] %vm316, %v305
      %318 = vst [vmem:[#allocation2 + $0x20] sm:$0x7] %v302
      %vm319 = vcmask 387072
      %320 = vst.msk [vmem:[#allocation2 + $0x28] sm:$0x7] %vm319, %v304
      %321 = vst [vmem:[#allocation2] sm:$0x7] 0.0
      %322 = vst.msk [vmem:[#allocation2 + $0x8] sm:$0x7] %vm319, 0.0
      %323 = vst [vmem:[#allocation2 + $0x20] sm:$0x38] 0.0
      %vm324 = vcmask 390147
      %325 = vst.msk [vmem:[#allocation2 + $0x28] sm:$0x38] %vm324, 0.0
      %v326 = vld [vmem:[#allocation2] sm:$0xff]
      %v327 = vld [vmem:[#allocation2 + $0x8] sm:$0xff]
      %v328 = vld [vmem:[#allocation2 + $0x10] sm:$0xff]
      %v329 = vld [vmem:[#allocation2 + $0x18] sm:$0xff]
      %v330 = vld [vmem:[#allocation2 + $0x20] sm:$0x3f]
      %v331 = vld [vmem:[#allocation2 + $0x28] sm:$0x3f]
      %v332 = vld [vmem:[%s1] sm:$0xff]
      %v333 = vld [vmem:[%s1 + $0x8] sm:$0xff]
      %v334 = vld [vmem:[%s1 + $0x10] sm:$0xff]
      %v335 = vld [vmem:[%s1 + $0x18] sm:$0xff]
      %v336 = vld [vmem:[%s1 + $0x20] sm:$0xff]
      %v337 = vld [vmem:[%s1 + $0x28] sm:$0xff]
      %v338 = vld [vmem:[%s1 + $0x30] sm:$0x1]
      %v339 = vld [vmem:[%s2] sm:$0x1]
      %v341 = vlaneseq
      %v342 = vshrl.u32 %v341, 7
      %v343 = vsub.s32 0, %v342
      %v344 = vrot.slane %v339, %v343
      %v346 = vlaneseq
      %v347 = vshrl.u32 %v346, 7
      %v348 = vsub.s32 0, %v347
      %v349 = vrot.slane %v332, %v348
      %v350 = vmul.f32 %v326, %v349
      %v351 = vmul.f32 %v328, %v349
      %v352 = vadd.f32 %v344, %v350
      %v353 = vadd.f32 %v344, %v351
      %v354 = vlaneseq
      %v355 = vshrl.u32 %v354, 7
      %v356 = vsub.s32 7, %v355
      %v357 = vrot.slane %v332, %v356
      %v358 = vmul.f32 %v326, %v357
      %v359 = vmul.f32 %v328, %v357
      %v360 = vmul.f32 %v330, %v357
      %vm364 = vcmask 1046528
      %v365 = vrot.slane %v358, 1
      %v366 = vrot.slane %v359, 1
      %v367 = vsel %vm364, %v365, %v366
      %v368 = vrot.slane %v360, 1
      %v369 = vsel %vm364, %v366, %v368
      %v372 = vadd.f32 %v352, %v367
      %v373 = vadd.f32 %v353, %v369
      %v374 = vlaneseq
      %v375 = vshrl.u32 %v374, 7
      %v376 = vsub.s32 6, %v375
      %v377 = vrot.slane %v333, %v376
      %v378 = vmul.f32 %v326, %v377
      %v379 = vmul.f32 %v328, %v377
      %v380 = vmul.f32 %v330, %v377
      %vm384 = vcmask 1045504
      %v385 = vrot.slane %v378, 2
      %v386 = vrot.slane %v379, 2
      %v387 = vsel %vm384, %v385, %v386
      %v388 = vrot.slane %v380, 2
      %v389 = vsel %vm384, %v386, %v388
      %v392 = vadd.f32 %v372, %v387
      %v393 = vadd.f32 %v373, %v389
      %v394 = vlaneseq
      %v395 = vshrl.u32 %v394, 7
      %v396 = vsub.s32 5, %v395
      %v397 = vrot.slane %v334, %v396
      %v398 = vmul.f32 %v326, %v397
      %v399 = vmul.f32 %v328, %v397
      %v400 = vmul.f32 %v330, %v397
      %vm404 = vcmask 1044480
      %v405 = vrot.slane %v398, 3
      %v406 = vrot.slane %v399, 3
      %v407 = vsel %vm404, %v405, %v406
      %v408 = vrot.slane %v400, 3
      %v409 = vsel %vm404, %v406, %v408
      %v412 = vadd.f32 %v392, %v407
      %v413 = vadd.f32 %v393, %v409
      %v414 = vlaneseq
      %v415 = vshrl.u32 %v414, 7
      %v416 = vsub.s32 4, %v415
      %v417 = vrot.slane %v335, %v416
      %v418 = vmul.f32 %v326, %v417
      %v419 = vmul.f32 %v328, %v417
      %v420 = vmul.f32 %v330, %v417
      %vm424 = vcmask 1043456
      %v425 = vrot.slane %v418, 4
      %v426 = vrot.slane %v419, 4
      %v427 = vsel %vm424, %v425, %v426
      %v428 = vrot.slane %v420, 4
      %v429 = vsel %vm424, %v426, %v428
      %v432 = vadd.f32 %v412, %v427
      %v433 = vadd.f32 %v413, %v429
      %v434 = vlaneseq
      %v435 = vshrl.u32 %v434, 7
      %v436 = vsub.s32 3, %v435
      %v437 = vrot.slane %v336, %v436
      %v438 = vmul.f32 %v326, %v437
      %v439 = vmul.f32 %v328, %v437
      %v440 = vmul.f32 %v330, %v437
      %v444 = vrot.slane %v438, 5
      %v445 = vrot.slane %v439, 5
      %v446 = vsel %vm299, %v444, %v445
      %v447 = vrot.slane %v440, 5
      %v448 = vsel %vm299, %v445, %v447
      %v451 = vadd.f32 %v432, %v446
      %v452 = vadd.f32 %v433, %v448
      %v453 = vlaneseq
      %v454 = vshrl.u32 %v453, 7
      %v455 = vsub.s32 2, %v454
      %v456 = vrot.slane %v337, %v455
      %v457 = vmul.f32 %v326, %v456
      %v458 = vmul.f32 %v328, %v456
      %v459 = vmul.f32 %v330, %v456
      %vm463 = vcmask 1041408
      %v464 = vrot.slane %v457, 6
      %v465 = vrot.slane %v458, 6
      %v466 = vsel %vm463, %v464, %v465
      %v467 = vrot.slane %v459, 6
      %v468 = vsel %vm463, %v465, %v467
      %v471 = vadd.f32 %v451, %v466
      %v472 = vadd.f32 %v452, %v468
      %v473 = vlaneseq
      %v474 = vshrl.u32 %v473, 7
      %v475 = vsub.s32 1, %v474
      %v476 = vrot.slane %v332, %v475
      %478 = vrot.lane.b32.xlu0 %v476, 8
      %v479 = vpop.permute.xlu0 %478
      %v481 = vmul.f32 %v326, %v479
      %v482 = vmul.f32 %v327, %v479
      %v483 = vmul.f32 %v328, %v479
      %v484 = vmul.f32 %v329, %v479
      %489 = vrot.lane.b32.xlu0 %v481, 120
      %v490 = vpop.permute.xlu0 %489
      %491 = vrot.lane.b32.xlu0 %v482, 120
      %v492 = vpop.permute.xlu0 %491
      %493 = vrot.lane.b32.xlu0 %v483, 120
      %v494 = vpop.permute.xlu0 %493
      %495 = vrot.lane.b32.xlu0 %v484, 120
      %v496 = vpop.permute.xlu0 %495
      %vm497 = vcmask 982016
      %v498 = vsel %vm497, %v490, %v492
      %v499 = vsel %vm497, %v494, %v496
      %v502 = vadd.f32 %v471, %v498
      %v503 = vadd.f32 %v472, %v499
      %v504 = vlaneseq
      %v505 = vshrl.u32 %v504, 7
      %v506 = vsub.s32 0, %v505
      %v507 = vrot.slane %v333, %v506
      %509 = vrot.lane.b32.xlu0 %v507, 8
      %v510 = vpop.permute.xlu0 %509
      %v512 = vmul.f32 %v326, %v510
      %v513 = vmul.f32 %v327, %v510
      %v514 = vmul.f32 %v328, %v510
      %v515 = vmul.f32 %v329, %v510
      %v516 = vmul.f32 %v330, %v510
      %v517 = vmul.f32 %v331, %v510
      %v524 = vrot.slane %v512, 1
      %v525 = vrot.slane %v514, 1
      %v526 = vsel %vm364, %v524, %v525
      %v527 = vrot.slane %v513, 1
      %v528 = vrot.slane %v515, 1
      %v529 = vsel %vm364, %v527, %v528
      %v530 = vrot.slane %v516, 1
      %v531 = vsel %vm364, %v525, %v530
      %v532 = vrot.slane %v517, 1
      %v533 = vsel %vm364, %v528, %v532
      %534 = vrot.lane.b32.xlu0 %v526, 120
      %v535 = vpop.permute.xlu0 %534
      %536 = vrot.lane.b32.xlu0 %v529, 120
      %v537 = vpop.permute.xlu0 %536
      %538 = vrot.lane.b32.xlu0 %v531, 120
      %v539 = vpop.permute.xlu0 %538
      %540 = vrot.lane.b32.xlu0 %v533, 120
      %v541 = vpop.permute.xlu0 %540
      %v542 = vsel %vm497, %v535, %v537
      %v543 = vsel %vm497, %v539, %v541
      %v546 = vadd.f32 %v502, %v542
      %v547 = vadd.f32 %v503, %v543
      %v548 = vlaneseq
      %v549 = vshrl.u32 %v548, 7
      %v550 = vsub.s32 7, %v549
      %v551 = vrot.slane %v333, %v550
      %553 = vrot.lane.b32.xlu0 %v551, 8
      %v554 = vpop.permute.xlu0 %553
      %v556 = vmul.f32 %v326, %v554
      %v557 = vmul.f32 %v327, %v554
      %v558 = vmul.f32 %v328, %v554
      %v559 = vmul.f32 %v329, %v554
      %v560 = vmul.f32 %v330, %v554
      %v561 = vmul.f32 %v331, %v554
      %v568 = vrot.slane %v556, 2
      %v569 = vrot.slane %v558, 2
      %v570 = vsel %vm384, %v568, %v569
      %v571 = vrot.slane %v557, 2
      %v572 = vrot.slane %v559, 2
      %v573 = vsel %vm384, %v571, %v572
      %v574 = vrot.slane %v560, 2
      %v575 = vsel %vm384, %v569, %v574
      %v576 = vrot.slane %v561, 2
      %v577 = vsel %vm384, %v572, %v576
      %578 = vrot.lane.b32.xlu0 %v570, 120
      %v579 = vpop.permute.xlu0 %578
      %580 = vrot.lane.b32.xlu0 %v573, 120
      %v581 = vpop.permute.xlu0 %580
      %582 = vrot.lane.b32.xlu0 %v575, 120
      %v583 = vpop.permute.xlu0 %582
      %584 = vrot.lane.b32.xlu0 %v577, 120
      %v585 = vpop.permute.xlu0 %584
      %v586 = vsel %vm497, %v579, %v581
      %v587 = vsel %vm497, %v583, %v585
      %v590 = vadd.f32 %v546, %v586
      %v591 = vadd.f32 %v547, %v587
      %v592 = vlaneseq
      %v593 = vshrl.u32 %v592, 7
      %v594 = vsub.s32 6, %v593
      %v595 = vrot.slane %v334, %v594
      %597 = vrot.lane.b32.xlu0 %v595, 8
      %v598 = vpop.permute.xlu0 %597
      %v600 = vmul.f32 %v326, %v598
      %v601 = vmul.f32 %v327, %v598
      %v602 = vmul.f32 %v328, %v598
      %v603 = vmul.f32 %v329, %v598
      %v604 = vmul.f32 %v330, %v598
      %v605 = vmul.f32 %v331, %v598
      %v612 = vrot.slane %v600, 3
      %v613 = vrot.slane %v602, 3
      %v614 = vsel %vm404, %v612, %v613
      %v615 = vrot.slane %v601, 3
      %v616 = vrot.slane %v603, 3
      %v617 = vsel %vm404, %v615, %v616
      %v618 = vrot.slane %v604, 3
      %v619 = vsel %vm404, %v613, %v618
      %v620 = vrot.slane %v605, 3
      %v621 = vsel %vm404, %v616, %v620
      %622 = vrot.lane.b32.xlu0 %v614, 120
      %v623 = vpop.permute.xlu0 %622
      %624 = vrot.lane.b32.xlu0 %v617, 120
      %v625 = vpop.permute.xlu0 %624
      %626 = vrot.lane.b32.xlu0 %v619, 120
      %v627 = vpop.permute.xlu0 %626
      %628 = vrot.lane.b32.xlu0 %v621, 120
      %v629 = vpop.permute.xlu0 %628
      %v630 = vsel %vm497, %v623, %v625
      %v631 = vsel %vm497, %v627, %v629
      %v634 = vadd.f32 %v590, %v630
      %v635 = vadd.f32 %v591, %v631
      %v636 = vlaneseq
      %v637 = vshrl.u32 %v636, 7
      %v638 = vsub.s32 5, %v637
      %v639 = vrot.slane %v335, %v638
      %641 = vrot.lane.b32.xlu0 %v639, 8
      %v642 = vpop.permute.xlu0 %641
      %v644 = vmul.f32 %v326, %v642
      %v645 = vmul.f32 %v327, %v642
      %v646 = vmul.f32 %v328, %v642
      %v647 = vmul.f32 %v329, %v642
      %v648 = vmul.f32 %v330, %v642
      %v649 = vmul.f32 %v331, %v642
      %v656 = vrot.slane %v644, 4
      %v657 = vrot.slane %v646, 4
      %v658 = vsel %vm424, %v656, %v657
      %v659 = vrot.slane %v645, 4
      %v660 = vrot.slane %v647, 4
      %v661 = vsel %vm424, %v659, %v660
      %v662 = vrot.slane %v648, 4
      %v663 = vsel %vm424, %v657, %v662
      %v664 = vrot.slane %v649, 4
      %v665 = vsel %vm424, %v660, %v664
      %666 = vrot.lane.b32.xlu0 %v658, 120
      %v667 = vpop.permute.xlu0 %666
      %668 = vrot.lane.b32.xlu0 %v661, 120
      %v669 = vpop.permute.xlu0 %668
      %670 = vrot.lane.b32.xlu0 %v663, 120
      %v671 = vpop.permute.xlu0 %670
      %672 = vrot.lane.b32.xlu0 %v665, 120
      %v673 = vpop.permute.xlu0 %672
      %v674 = vsel %vm497, %v667, %v669
      %v675 = vsel %vm497, %v671, %v673
      %v678 = vadd.f32 %v634, %v674
      %v679 = vadd.f32 %v635, %v675
      %v680 = vlaneseq
      %v681 = vshrl.u32 %v680, 7
      %v682 = vsub.s32 4, %v681
      %v683 = vrot.slane %v336, %v682
      %685 = vrot.lane.b32.xlu0 %v683, 8
      %v686 = vpop.permute.xlu0 %685
      %v688 = vmul.f32 %v326, %v686
      %v689 = vmul.f32 %v327, %v686
      %v690 = vmul.f32 %v328, %v686
      %v691 = vmul.f32 %v329, %v686
      %v692 = vmul.f32 %v330, %v686
      %v693 = vmul.f32 %v331, %v686
      %v700 = vrot.slane %v688, 5
      %v701 = vrot.slane %v690, 5
      %v702 = vsel %vm299, %v700, %v701
      %v703 = vrot.slane %v689, 5
      %v704 = vrot.slane %v691, 5
      %v705 = vsel %vm299, %v703, %v704
      %v706 = vrot.slane %v692, 5
      %v707 = vsel %vm299, %v701, %v706
      %v708 = vrot.slane %v693, 5
      %v709 = vsel %vm299, %v704, %v708
      %710 = vrot.lane.b32.xlu0 %v702, 120
      %v711 = vpop.permute.xlu0 %710
      %712 = vrot.lane.b32.xlu0 %v705, 120
      %v713 = vpop.permute.xlu0 %712
      %714 = vrot.lane.b32.xlu0 %v707, 120
      %v715 = vpop.permute.xlu0 %714
      %716 = vrot.lane.b32.xlu0 %v709, 120
      %v717 = vpop.permute.xlu0 %716
      %v718 = vsel %vm497, %v711, %v713
      %v719 = vsel %vm497, %v715, %v717
      %v722 = vadd.f32 %v678, %v718
      %v723 = vadd.f32 %v679, %v719
      %v724 = vlaneseq
      %v725 = vshrl.u32 %v724, 7
      %v726 = vsub.s32 3, %v725
      %v727 = vrot.slane %v337, %v726
      %729 = vrot.lane.b32.xlu0 %v727, 8
      %v730 = vpop.permute.xlu0 %729
      %v732 = vmul.f32 %v326, %v730
      %v733 = vmul.f32 %v327, %v730
      %v734 = vmul.f32 %v328, %v730
      %v735 = vmul.f32 %v329, %v730
      %v736 = vmul.f32 %v330, %v730
      %v737 = vmul.f32 %v331, %v730
      %v744 = vrot.slane %v732, 6
      %v745 = vrot.slane %v734, 6
      %v746 = vsel %vm463, %v744, %v745
      %v747 = vrot.slane %v733, 6
      %v748 = vrot.slane %v735, 6
      %v749 = vsel %vm463, %v747, %v748
      %v750 = vrot.slane %v736, 6
      %v751 = vsel %vm463, %v745, %v750
      %v752 = vrot.slane %v737, 6
      %v753 = vsel %vm463, %v748, %v752
      %754 = vrot.lane.b32.xlu0 %v746, 120
      %v755 = vpop.permute.xlu0 %754
      %756 = vrot.lane.b32.xlu0 %v749, 120
      %v757 = vpop.permute.xlu0 %756
      %758 = vrot.lane.b32.xlu0 %v751, 120
      %v759 = vpop.permute.xlu0 %758
      %760 = vrot.lane.b32.xlu0 %v753, 120
      %v761 = vpop.permute.xlu0 %760
      %v762 = vsel %vm497, %v755, %v757
      %v763 = vsel %vm497, %v759, %v761
      %v766 = vadd.f32 %v722, %v762
      %v767 = vadd.f32 %v723, %v763
      %v768 = vlaneseq
      %v769 = vshrl.u32 %v768, 7
      %v770 = vsub.s32 2, %v769
      %v771 = vrot.slane %v332, %v770
      %773 = vrot.lane.b32.xlu0 %v771, 16
      %v774 = vpop.permute.xlu0 %773
      %v776 = vmul.f32 %v326, %v774
      %v777 = vmul.f32 %v327, %v774
      %v778 = vmul.f32 %v328, %v774
      %v779 = vmul.f32 %v329, %v774
      %784 = vrot.lane.b32.xlu0 %v776, 112
      %v785 = vpop.permute.xlu0 %784
      %786 = vrot.lane.b32.xlu0 %v777, 112
      %v787 = vpop.permute.xlu0 %786
      %788 = vrot.lane.b32.xlu0 %v778, 112
      %v789 = vpop.permute.xlu0 %788
      %790 = vrot.lane.b32.xlu0 %v779, 112
      %v791 = vpop.permute.xlu0 %790
      %vm792 = vcmask 916480
      %v793 = vsel %vm792, %v785, %v787
      %v794 = vsel %vm792, %v789, %v791
      %v797 = vadd.f32 %v766, %v793
      %v798 = vadd.f32 %v767, %v794
      %v799 = vlaneseq
      %v800 = vshrl.u32 %v799, 7
      %v801 = vsub.s32 1, %v800
      %v802 = vrot.slane %v333, %v801
      %804 = vrot.lane.b32.xlu0 %v802, 16
      %v805 = vpop.permute.xlu0 %804
      %v807 = vmul.f32 %v326, %v805
      %v808 = vmul.f32 %v327, %v805
      %v809 = vmul.f32 %v328, %v805
      %v810 = vmul.f32 %v329, %v805
      %v811 = vmul.f32 %v330, %v805
      %v812 = vmul.f32 %v331, %v805
      %v819 = vrot.slane %v807, 1
      %v820 = vrot.slane %v809, 1
      %v821 = vsel %vm364, %v819, %v820
      %v822 = vrot.slane %v808, 1
      %v823 = vrot.slane %v810, 1
      %v824 = vsel %vm364, %v822, %v823
      %v825 = vrot.slane %v811, 1
      %v826 = vsel %vm364, %v820, %v825
      %v827 = vrot.slane %v812, 1
      %v828 = vsel %vm364, %v823, %v827
      %829 = vrot.lane.b32.xlu0 %v821, 112
      %v830 = vpop.permute.xlu0 %829
      %831 = vrot.lane.b32.xlu0 %v824, 112
      %v832 = vpop.permute.xlu0 %831
      %833 = vrot.lane.b32.xlu0 %v826, 112
      %v834 = vpop.permute.xlu0 %833
      %835 = vrot.lane.b32.xlu0 %v828, 112
      %v836 = vpop.permute.xlu0 %835
      %v837 = vsel %vm792, %v830, %v832
      %v838 = vsel %vm792, %v834, %v836
      %v841 = vadd.f32 %v797, %v837
      %v842 = vadd.f32 %v798, %v838
      %v843 = vlaneseq
      %v844 = vshrl.u32 %v843, 7
      %v845 = vsub.s32 0, %v844
      %v846 = vrot.slane %v334, %v845
      %848 = vrot.lane.b32.xlu0 %v846, 16
      %v849 = vpop.permute.xlu0 %848
      %v851 = vmul.f32 %v326, %v849
      %v852 = vmul.f32 %v327, %v849
      %v853 = vmul.f32 %v328, %v849
      %v854 = vmul.f32 %v329, %v849
      %v855 = vmul.f32 %v330, %v849
      %v856 = vmul.f32 %v331, %v849
      %v863 = vrot.slane %v851, 2
      %v864 = vrot.slane %v853, 2
      %v865 = vsel %vm384, %v863, %v864
      %v866 = vrot.slane %v852, 2
      %v867 = vrot.slane %v854, 2
      %v868 = vsel %vm384, %v866, %v867
      %v869 = vrot.slane %v855, 2
      %v870 = vsel %vm384, %v864, %v869
      %v871 = vrot.slane %v856, 2
      %v872 = vsel %vm384, %v867, %v871
      %873 = vrot.lane.b32.xlu0 %v865, 112
      %v874 = vpop.permute.xlu0 %873
      %875 = vrot.lane.b32.xlu0 %v868, 112
      %v876 = vpop.permute.xlu0 %875
      %877 = vrot.lane.b32.xlu0 %v870, 112
      %v878 = vpop.permute.xlu0 %877
      %879 = vrot.lane.b32.xlu0 %v872, 112
      %v880 = vpop.permute.xlu0 %879
      %v881 = vsel %vm792, %v874, %v876
      %v882 = vsel %vm792, %v878, %v880
      %v885 = vadd.f32 %v841, %v881
      %v886 = vadd.f32 %v842, %v882
      %v887 = vlaneseq
      %v888 = vshrl.u32 %v887, 7
      %v889 = vsub.s32 7, %v888
      %v890 = vrot.slane %v334, %v889
      %892 = vrot.lane.b32.xlu0 %v890, 16
      %v893 = vpop.permute.xlu0 %892
      %v895 = vmul.f32 %v326, %v893
      %v896 = vmul.f32 %v327, %v893
      %v897 = vmul.f32 %v328, %v893
      %v898 = vmul.f32 %v329, %v893
      %v899 = vmul.f32 %v330, %v893
      %v900 = vmul.f32 %v331, %v893
      %v907 = vrot.slane %v895, 3
      %v908 = vrot.slane %v897, 3
      %v909 = vsel %vm404, %v907, %v908
      %v910 = vrot.slane %v896, 3
      %v911 = vrot.slane %v898, 3
      %v912 = vsel %vm404, %v910, %v911
      %v913 = vrot.slane %v899, 3
      %v914 = vsel %vm404, %v908, %v913
      %v915 = vrot.slane %v900, 3
      %v916 = vsel %vm404, %v911, %v915
      %917 = vrot.lane.b32.xlu0 %v909, 112
      %v918 = vpop.permute.xlu0 %917
      %919 = vrot.lane.b32.xlu0 %v912, 112
      %v920 = vpop.permute.xlu0 %919
      %921 = vrot.lane.b32.xlu0 %v914, 112
      %v922 = vpop.permute.xlu0 %921
      %923 = vrot.lane.b32.xlu0 %v916, 112
      %v924 = vpop.permute.xlu0 %923
      %v925 = vsel %vm792, %v918, %v920
      %v926 = vsel %vm792, %v922, %v924
      %v929 = vadd.f32 %v885, %v925
      %v930 = vadd.f32 %v886, %v926
      %v931 = vlaneseq
      %v932 = vshrl.u32 %v931, 7
      %v933 = vsub.s32 6, %v932
      %v934 = vrot.slane %v335, %v933
      %936 = vrot.lane.b32.xlu0 %v934, 16
      %v937 = vpop.permute.xlu0 %936
      %v939 = vmul.f32 %v326, %v937
      %v940 = vmul.f32 %v327, %v937
      %v941 = vmul.f32 %v328, %v937
      %v942 = vmul.f32 %v329, %v937
      %v943 = vmul.f32 %v330, %v937
      %v944 = vmul.f32 %v331, %v937
      %v951 = vrot.slane %v939, 4
      %v952 = vrot.slane %v941, 4
      %v953 = vsel %vm424, %v951, %v952
      %v954 = vrot.slane %v940, 4
      %v955 = vrot.slane %v942, 4
      %v956 = vsel %vm424, %v954, %v955
      %v957 = vrot.slane %v943, 4
      %v958 = vsel %vm424, %v952, %v957
      %v959 = vrot.slane %v944, 4
      %v960 = vsel %vm424, %v955, %v959
      %961 = vrot.lane.b32.xlu0 %v953, 112
      %v962 = vpop.permute.xlu0 %961
      %963 = vrot.lane.b32.xlu0 %v956, 112
      %v964 = vpop.permute.xlu0 %963
      %965 = vrot.lane.b32.xlu0 %v958, 112
      %v966 = vpop.permute.xlu0 %965
      %967 = vrot.lane.b32.xlu0 %v960, 112
      %v968 = vpop.permute.xlu0 %967
      %v969 = vsel %vm792, %v962, %v964
      %v970 = vsel %vm792, %v966, %v968
      %v973 = vadd.f32 %v929, %v969
      %v974 = vadd.f32 %v930, %v970
      %v975 = vlaneseq
      %v976 = vshrl.u32 %v975, 7
      %v977 = vsub.s32 5, %v976
      %v978 = vrot.slane %v336, %v977
      %980 = vrot.lane.b32.xlu0 %v978, 16
      %v981 = vpop.permute.xlu0 %980
      %v983 = vmul.f32 %v326, %v981
      %v984 = vmul.f32 %v327, %v981
      %v985 = vmul.f32 %v328, %v981
      %v986 = vmul.f32 %v329, %v981
      %v987 = vmul.f32 %v330, %v981
      %v988 = vmul.f32 %v331, %v981
      %v995 = vrot.slane %v983, 5
      %v996 = vrot.slane %v985, 5
      %v997 = vsel %vm299, %v995, %v996
      %v998 = vrot.slane %v984, 5
      %v999 = vrot.slane %v986, 5
      %v1000 = vsel %vm299, %v998, %v999
      %v1001 = vrot.slane %v987, 5
      %v1002 = vsel %vm299, %v996, %v1001
      %v1003 = vrot.slane %v988, 5
      %v1004 = vsel %vm299, %v999, %v1003
      %1005 = vrot.lane.b32.xlu0 %v997, 112
      %v1006 = vpop.permute.xlu0 %1005
      %1007 = vrot.lane.b32.xlu0 %v1000, 112
      %v1008 = vpop.permute.xlu0 %1007
      %1009 = vrot.lane.b32.xlu0 %v1002, 112
      %v1010 = vpop.permute.xlu0 %1009
      %1011 = vrot.lane.b32.xlu0 %v1004, 112
      %v1012 = vpop.permute.xlu0 %1011
      %v1013 = vsel %vm792, %v1006, %v1008
      %v1014 = vsel %vm792, %v1010, %v1012
      %v1017 = vadd.f32 %v973, %v1013
      %v1018 = vadd.f32 %v974, %v1014
      %v1019 = vlaneseq
      %v1020 = vshrl.u32 %v1019, 7
      %v1021 = vsub.s32 4, %v1020
      %v1022 = vrot.slane %v337, %v1021
      %1024 = vrot.lane.b32.xlu0 %v1022, 16
      %v1025 = vpop.permute.xlu0 %1024
      %v1027 = vmul.f32 %v326, %v1025
      %v1028 = vmul.f32 %v327, %v1025
      %v1029 = vmul.f32 %v328, %v1025
      %v1030 = vmul.f32 %v329, %v1025
      %v1031 = vmul.f32 %v330, %v1025
      %v1032 = vmul.f32 %v331, %v1025
      %v1039 = vrot.slane %v1027, 6
      %v1040 = vrot.slane %v1029, 6
      %v1041 = vsel %vm463, %v1039, %v1040
      %v1042 = vrot.slane %v1028, 6
      %v1043 = vrot.slane %v1030, 6
      %v1044 = vsel %vm463, %v1042, %v1043
      %v1045 = vrot.slane %v1031, 6
      %v1046 = vsel %vm463, %v1040, %v1045
      %v1047 = vrot.slane %v1032, 6
      %v1048 = vsel %vm463, %v1043, %v1047
      %1049 = vrot.lane.b32.xlu0 %v1041, 112
      %v1050 = vpop.permute.xlu0 %1049
      %1051 = vrot.lane.b32.xlu0 %v1044, 112
      %v1052 = vpop.permute.xlu0 %1051
      %1053 = vrot.lane.b32.xlu0 %v1046, 112
      %v1054 = vpop.permute.xlu0 %1053
      %1055 = vrot.lane.b32.xlu0 %v1048, 112
      %v1056 = vpop.permute.xlu0 %1055
      %v1057 = vsel %vm792, %v1050, %v1052
      %v1058 = vsel %vm792, %v1054, %v1056
      %v1061 = vadd.f32 %v1017, %v1057
      %v1062 = vadd.f32 %v1018, %v1058
      %v1063 = vlaneseq
      %v1064 = vshrl.u32 %v1063, 7
      %v1065 = vsub.s32 3, %v1064
      %v1066 = vrot.slane %v332, %v1065
      %1068 = vrot.lane.b32.xlu0 %v1066, 24
      %v1069 = vpop.permute.xlu0 %1068
      %v1071 = vmul.f32 %v326, %v1069
      %v1072 = vmul.f32 %v327, %v1069
      %v1073 = vmul.f32 %v328, %v1069
      %v1074 = vmul.f32 %v329, %v1069
      %1079 = vrot.lane.b32.xlu0 %v1071, 104
      %v1080 = vpop.permute.xlu0 %1079
      %1081 = vrot.lane.b32.xlu0 %v1072, 104
      %v1082 = vpop.permute.xlu0 %1081
      %1083 = vrot.lane.b32.xlu0 %v1073, 104
      %v1084 = vpop.permute.xlu0 %1083
      %1085 = vrot.lane.b32.xlu0 %v1074, 104
      %v1086 = vpop.permute.xlu0 %1085
      %vm1087 = vcmask 850944
      %v1088 = vsel %vm1087, %v1080, %v1082
      %v1089 = vsel %vm1087, %v1084, %v1086
      %v1092 = vadd.f32 %v1061, %v1088
      %v1093 = vadd.f32 %v1062, %v1089
      %v1094 = vlaneseq
      %v1095 = vshrl.u32 %v1094, 7
      %v1096 = vsub.s32 2, %v1095
      %v1097 = vrot.slane %v333, %v1096
      %1099 = vrot.lane.b32.xlu0 %v1097, 24
      %v1100 = vpop.permute.xlu0 %1099
      %v1102 = vmul.f32 %v326, %v1100
      %v1103 = vmul.f32 %v327, %v1100
      %v1104 = vmul.f32 %v328, %v1100
      %v1105 = vmul.f32 %v329, %v1100
      %v1106 = vmul.f32 %v330, %v1100
      %v1107 = vmul.f32 %v331, %v1100
      %v1114 = vrot.slane %v1102, 1
      %v1115 = vrot.slane %v1104, 1
      %v1116 = vsel %vm364, %v1114, %v1115
      %v1117 = vrot.slane %v1103, 1
      %v1118 = vrot.slane %v1105, 1
      %v1119 = vsel %vm364, %v1117, %v1118
      %v1120 = vrot.slane %v1106, 1
      %v1121 = vsel %vm364, %v1115, %v1120
      %v1122 = vrot.slane %v1107, 1
      %v1123 = vsel %vm364, %v1118, %v1122
      %1124 = vrot.lane.b32.xlu0 %v1116, 104
      %v1125 = vpop.permute.xlu0 %1124
      %1126 = vrot.lane.b32.xlu0 %v1119, 104
      %v1127 = vpop.permute.xlu0 %1126
      %1128 = vrot.lane.b32.xlu0 %v1121, 104
      %v1129 = vpop.permute.xlu0 %1128
      %1130 = vrot.lane.b32.xlu0 %v1123, 104
      %v1131 = vpop.permute.xlu0 %1130
      %v1132 = vsel %vm1087, %v1125, %v1127
      %v1133 = vsel %vm1087, %v1129, %v1131
      %v1136 = vadd.f32 %v1092, %v1132
      %v1137 = vadd.f32 %v1093, %v1133
      %v1138 = vlaneseq
      %v1139 = vshrl.u32 %v1138, 7
      %v1140 = vsub.s32 1, %v1139
      %v1141 = vrot.slane %v334, %v1140
      %1143 = vrot.lane.b32.xlu0 %v1141, 24
      %v1144 = vpop.permute.xlu0 %1143
      %v1146 = vmul.f32 %v326, %v1144
      %v1147 = vmul.f32 %v327, %v1144
      %v1148 = vmul.f32 %v328, %v1144
      %v1149 = vmul.f32 %v329, %v1144
      %v1150 = vmul.f32 %v330, %v1144
      %v1151 = vmul.f32 %v331, %v1144
      %v1158 = vrot.slane %v1146, 2
      %v1159 = vrot.slane %v1148, 2
      %v1160 = vsel %vm384, %v1158, %v1159
      %v1161 = vrot.slane %v1147, 2
      %v1162 = vrot.slane %v1149, 2
      %v1163 = vsel %vm384, %v1161, %v1162
      %v1164 = vrot.slane %v1150, 2
      %v1165 = vsel %vm384, %v1159, %v1164
      %v1166 = vrot.slane %v1151, 2
      %v1167 = vsel %vm384, %v1162, %v1166
      %1168 = vrot.lane.b32.xlu0 %v1160, 104
      %v1169 = vpop.permute.xlu0 %1168
      %1170 = vrot.lane.b32.xlu0 %v1163, 104
      %v1171 = vpop.permute.xlu0 %1170
      %1172 = vrot.lane.b32.xlu0 %v1165, 104
      %v1173 = vpop.permute.xlu0 %1172
      %1174 = vrot.lane.b32.xlu0 %v1167, 104
      %v1175 = vpop.permute.xlu0 %1174
      %v1176 = vsel %vm1087, %v1169, %v1171
      %v1177 = vsel %vm1087, %v1173, %v1175
      %v1180 = vadd.f32 %v1136, %v1176
      %v1181 = vadd.f32 %v1137, %v1177
      %v1182 = vlaneseq
      %v1183 = vshrl.u32 %v1182, 7
      %v1184 = vsub.s32 0, %v1183
      %v1185 = vrot.slane %v335, %v1184
      %1187 = vrot.lane.b32.xlu0 %v1185, 24
      %v1188 = vpop.permute.xlu0 %1187
      %v1190 = vmul.f32 %v326, %v1188
      %v1191 = vmul.f32 %v327, %v1188
      %v1192 = vmul.f32 %v328, %v1188
      %v1193 = vmul.f32 %v329, %v1188
      %v1194 = vmul.f32 %v330, %v1188
      %v1195 = vmul.f32 %v331, %v1188
      %v1202 = vrot.slane %v1190, 3
      %v1203 = vrot.slane %v1192, 3
      %v1204 = vsel %vm404, %v1202, %v1203
      %v1205 = vrot.slane %v1191, 3
      %v1206 = vrot.slane %v1193, 3
      %v1207 = vsel %vm404, %v1205, %v1206
      %v1208 = vrot.slane %v1194, 3
      %v1209 = vsel %vm404, %v1203, %v1208
      %v1210 = vrot.slane %v1195, 3
      %v1211 = vsel %vm404, %v1206, %v1210
      %1212 = vrot.lane.b32.xlu0 %v1204, 104
      %v1213 = vpop.permute.xlu0 %1212
      %1214 = vrot.lane.b32.xlu0 %v1207, 104
      %v1215 = vpop.permute.xlu0 %1214
      %1216 = vrot.lane.b32.xlu0 %v1209, 104
      %v1217 = vpop.permute.xlu0 %1216
      %1218 = vrot.lane.b32.xlu0 %v1211, 104
      %v1219 = vpop.permute.xlu0 %1218
      %v1220 = vsel %vm1087, %v1213, %v1215
      %v1221 = vsel %vm1087, %v1217, %v1219
      %v1224 = vadd.f32 %v1180, %v1220
      %v1225 = vadd.f32 %v1181, %v1221
      %v1226 = vlaneseq
      %v1227 = vshrl.u32 %v1226, 7
      %v1228 = vsub.s32 7, %v1227
      %v1229 = vrot.slane %v335, %v1228
      %1231 = vrot.lane.b32.xlu0 %v1229, 24
      %v1232 = vpop.permute.xlu0 %1231
      %v1234 = vmul.f32 %v326, %v1232
      %v1235 = vmul.f32 %v327, %v1232
      %v1236 = vmul.f32 %v328, %v1232
      %v1237 = vmul.f32 %v329, %v1232
      %v1238 = vmul.f32 %v330, %v1232
      %v1239 = vmul.f32 %v331, %v1232
      %v1246 = vrot.slane %v1234, 4
      %v1247 = vrot.slane %v1236, 4
      %v1248 = vsel %vm424, %v1246, %v1247
      %v1249 = vrot.slane %v1235, 4
      %v1250 = vrot.slane %v1237, 4
      %v1251 = vsel %vm424, %v1249, %v1250
      %v1252 = vrot.slane %v1238, 4
      %v1253 = vsel %vm424, %v1247, %v1252
      %v1254 = vrot.slane %v1239, 4
      %v1255 = vsel %vm424, %v1250, %v1254
      %1256 = vrot.lane.b32.xlu0 %v1248, 104
      %v1257 = vpop.permute.xlu0 %1256
      %1258 = vrot.lane.b32.xlu0 %v1251, 104
      %v1259 = vpop.permute.xlu0 %1258
      %1260 = vrot.lane.b32.xlu0 %v1253, 104
      %v1261 = vpop.permute.xlu0 %1260
      %1262 = vrot.lane.b32.xlu0 %v1255, 104
      %v1263 = vpop.permute.xlu0 %1262
      %v1264 = vsel %vm1087, %v1257, %v1259
      %v1265 = vsel %vm1087, %v1261, %v1263
      %v1268 = vadd.f32 %v1224, %v1264
      %v1269 = vadd.f32 %v1225, %v1265
      %v1270 = vlaneseq
      %v1271 = vshrl.u32 %v1270, 7
      %v1272 = vsub.s32 6, %v1271
      %v1273 = vrot.slane %v336, %v1272
      %1275 = vrot.lane.b32.xlu0 %v1273, 24
      %v1276 = vpop.permute.xlu0 %1275
      %v1278 = vmul.f32 %v326, %v1276
      %v1279 = vmul.f32 %v327, %v1276
      %v1280 = vmul.f32 %v328, %v1276
      %v1281 = vmul.f32 %v329, %v1276
      %v1282 = vmul.f32 %v330, %v1276
      %v1283 = vmul.f32 %v331, %v1276
      %v1290 = vrot.slane %v1278, 5
      %v1291 = vrot.slane %v1280, 5
      %v1292 = vsel %vm299, %v1290, %v1291
      %v1293 = vrot.slane %v1279, 5
      %v1294 = vrot.slane %v1281, 5
      %v1295 = vsel %vm299, %v1293, %v1294
      %v1296 = vrot.slane %v1282, 5
      %v1297 = vsel %vm299, %v1291, %v1296
      %v1298 = vrot.slane %v1283, 5
      %v1299 = vsel %vm299, %v1294, %v1298
      %1300 = vrot.lane.b32.xlu0 %v1292, 104
      %v1301 = vpop.permute.xlu0 %1300
      %1302 = vrot.lane.b32.xlu0 %v1295, 104
      %v1303 = vpop.permute.xlu0 %1302
      %1304 = vrot.lane.b32.xlu0 %v1297, 104
      %v1305 = vpop.permute.xlu0 %1304
      %1306 = vrot.lane.b32.xlu0 %v1299, 104
      %v1307 = vpop.permute.xlu0 %1306
      %v1308 = vsel %vm1087, %v1301, %v1303
      %v1309 = vsel %vm1087, %v1305, %v1307
      %v1312 = vadd.f32 %v1268, %v1308
      %v1313 = vadd.f32 %v1269, %v1309
      %v1314 = vlaneseq
      %v1315 = vshrl.u32 %v1314, 7
      %v1316 = vsub.s32 5, %v1315
      %v1317 = vrot.slane %v337, %v1316
      %1319 = vrot.lane.b32.xlu0 %v1317, 24
      %v1320 = vpop.permute.xlu0 %1319
      %v1322 = vmul.f32 %v326, %v1320
      %v1323 = vmul.f32 %v327, %v1320
      %v1324 = vmul.f32 %v328, %v1320
      %v1325 = vmul.f32 %v329, %v1320
      %v1326 = vmul.f32 %v330, %v1320
      %v1327 = vmul.f32 %v331, %v1320
      %v1334 = vrot.slane %v1322, 6
      %v1335 = vrot.slane %v1324, 6
      %v1336 = vsel %vm463, %v1334, %v1335
      %v1337 = vrot.slane %v1323, 6
      %v1338 = vrot.slane %v1325, 6
      %v1339 = vsel %vm463, %v1337, %v1338
      %v1340 = vrot.slane %v1326, 6
      %v1341 = vsel %vm463, %v1335, %v1340
      %v1342 = vrot.slane %v1327, 6
      %v1343 = vsel %vm463, %v1338, %v1342
      %1344 = vrot.lane.b32.xlu0 %v1336, 104
      %v1345 = vpop.permute.xlu0 %1344
      %1346 = vrot.lane.b32.xlu0 %v1339, 104
      %v1347 = vpop.permute.xlu0 %1346
      %1348 = vrot.lane.b32.xlu0 %v1341, 104
      %v1349 = vpop.permute.xlu0 %1348
      %1350 = vrot.lane.b32.xlu0 %v1343, 104
      %v1351 = vpop.permute.xlu0 %1350
      %v1352 = vsel %vm1087, %v1345, %v1347
      %v1353 = vsel %vm1087, %v1349, %v1351
      %v1356 = vadd.f32 %v1312, %v1352
      %v1357 = vadd.f32 %v1313, %v1353
      %v1358 = vlaneseq
      %v1359 = vshrl.u32 %v1358, 7
      %v1360 = vsub.s32 4, %v1359
      %v1361 = vrot.slane %v332, %v1360
      %1363 = vrot.lane.b32.xlu0 %v1361, 32
      %v1364 = vpop.permute.xlu0 %1363
      %v1366 = vmul.f32 %v326, %v1364
      %v1367 = vmul.f32 %v327, %v1364
      %v1368 = vmul.f32 %v328, %v1364
      %v1369 = vmul.f32 %v329, %v1364
      %1374 = vrot.lane.b32.xlu0 %v1366, 96
      %v1375 = vpop.permute.xlu0 %1374
      %1376 = vrot.lane.b32.xlu0 %v1367, 96
      %v1377 = vpop.permute.xlu0 %1376
      %1378 = vrot.lane.b32.xlu0 %v1368, 96
      %v1379 = vpop.permute.xlu0 %1378
      %1380 = vrot.lane.b32.xlu0 %v1369, 96
      %v1381 = vpop.permute.xlu0 %1380
      %vm1382 = vcmask 785408
      %v1383 = vsel %vm1382, %v1375, %v1377
      %v1384 = vsel %vm1382, %v1379, %v1381
      %v1387 = vadd.f32 %v1356, %v1383
      %v1388 = vadd.f32 %v1357, %v1384
      %v1389 = vlaneseq
      %v1390 = vshrl.u32 %v1389, 7
      %v1391 = vsub.s32 3, %v1390
      %v1392 = vrot.slane %v333, %v1391
      %1394 = vrot.lane.b32.xlu0 %v1392, 32
      %v1395 = vpop.permute.xlu0 %1394
      %v1397 = vmul.f32 %v326, %v1395
      %v1398 = vmul.f32 %v327, %v1395
      %v1399 = vmul.f32 %v328, %v1395
      %v1400 = vmul.f32 %v329, %v1395
      %v1401 = vmul.f32 %v330, %v1395
      %v1402 = vmul.f32 %v331, %v1395
      %v1409 = vrot.slane %v1397, 1
      %v1410 = vrot.slane %v1399, 1
      %v1411 = vsel %vm364, %v1409, %v1410
      %v1412 = vrot.slane %v1398, 1
      %v1413 = vrot.slane %v1400, 1
      %v1414 = vsel %vm364, %v1412, %v1413
      %v1415 = vrot.slane %v1401, 1
      %v1416 = vsel %vm364, %v1410, %v1415
      %v1417 = vrot.slane %v1402, 1
      %v1418 = vsel %vm364, %v1413, %v1417
      %1419 = vrot.lane.b32.xlu0 %v1411, 96
      %v1420 = vpop.permute.xlu0 %1419
      %1421 = vrot.lane.b32.xlu0 %v1414, 96
      %v1422 = vpop.permute.xlu0 %1421
      %1423 = vrot.lane.b32.xlu0 %v1416, 96
      %v1424 = vpop.permute.xlu0 %1423
      %1425 = vrot.lane.b32.xlu0 %v1418, 96
      %v1426 = vpop.permute.xlu0 %1425
      %v1427 = vsel %vm1382, %v1420, %v1422
      %v1428 = vsel %vm1382, %v1424, %v1426
      %v1431 = vadd.f32 %v1387, %v1427
      %v1432 = vadd.f32 %v1388, %v1428
      %v1433 = vlaneseq
      %v1434 = vshrl.u32 %v1433, 7
      %v1435 = vsub.s32 2, %v1434
      %v1436 = vrot.slane %v334, %v1435
      %1438 = vrot.lane.b32.xlu0 %v1436, 32
      %v1439 = vpop.permute.xlu0 %1438
      %v1441 = vmul.f32 %v326, %v1439
      %v1442 = vmul.f32 %v327, %v1439
      %v1443 = vmul.f32 %v328, %v1439
      %v1444 = vmul.f32 %v329, %v1439
      %v1445 = vmul.f32 %v330, %v1439
      %v1446 = vmul.f32 %v331, %v1439
      %v1453 = vrot.slane %v1441, 2
      %v1454 = vrot.slane %v1443, 2
      %v1455 = vsel %vm384, %v1453, %v1454
      %v1456 = vrot.slane %v1442, 2
      %v1457 = vrot.slane %v1444, 2
      %v1458 = vsel %vm384, %v1456, %v1457
      %v1459 = vrot.slane %v1445, 2
      %v1460 = vsel %vm384, %v1454, %v1459
      %v1461 = vrot.slane %v1446, 2
      %v1462 = vsel %vm384, %v1457, %v1461
      %1463 = vrot.lane.b32.xlu0 %v1455, 96
      %v1464 = vpop.permute.xlu0 %1463
      %1465 = vrot.lane.b32.xlu0 %v1458, 96
      %v1466 = vpop.permute.xlu0 %1465
      %1467 = vrot.lane.b32.xlu0 %v1460, 96
      %v1468 = vpop.permute.xlu0 %1467
      %1469 = vrot.lane.b32.xlu0 %v1462, 96
      %v1470 = vpop.permute.xlu0 %1469
      %v1471 = vsel %vm1382, %v1464, %v1466
      %v1472 = vsel %vm1382, %v1468, %v1470
      %v1475 = vadd.f32 %v1431, %v1471
      %v1476 = vadd.f32 %v1432, %v1472
      %v1477 = vlaneseq
      %v1478 = vshrl.u32 %v1477, 7
      %v1479 = vsub.s32 1, %v1478
      %v1480 = vrot.slane %v335, %v1479
      %1482 = vrot.lane.b32.xlu0 %v1480, 32
      %v1483 = vpop.permute.xlu0 %1482
      %v1485 = vmul.f32 %v326, %v1483
      %v1486 = vmul.f32 %v327, %v1483
      %v1487 = vmul.f32 %v328, %v1483
      %v1488 = vmul.f32 %v329, %v1483
      %v1489 = vmul.f32 %v330, %v1483
      %v1490 = vmul.f32 %v331, %v1483
      %v1497 = vrot.slane %v1485, 3
      %v1498 = vrot.slane %v1487, 3
      %v1499 = vsel %vm404, %v1497, %v1498
      %v1500 = vrot.slane %v1486, 3
      %v1501 = vrot.slane %v1488, 3
      %v1502 = vsel %vm404, %v1500, %v1501
      %v1503 = vrot.slane %v1489, 3
      %v1504 = vsel %vm404, %v1498, %v1503
      %v1505 = vrot.slane %v1490, 3
      %v1506 = vsel %vm404, %v1501, %v1505
      %1507 = vrot.lane.b32.xlu0 %v1499, 96
      %v1508 = vpop.permute.xlu0 %1507
      %1509 = vrot.lane.b32.xlu0 %v1502, 96
      %v1510 = vpop.permute.xlu0 %1509
      %1511 = vrot.lane.b32.xlu0 %v1504, 96
      %v1512 = vpop.permute.xlu0 %1511
      %1513 = vrot.lane.b32.xlu0 %v1506, 96
      %v1514 = vpop.permute.xlu0 %1513
      %v1515 = vsel %vm1382, %v1508, %v1510
      %v1516 = vsel %vm1382, %v1512, %v1514
      %v1519 = vadd.f32 %v1475, %v1515
      %v1520 = vadd.f32 %v1476, %v1516
      %v1521 = vlaneseq
      %v1522 = vshrl.u32 %v1521, 7
      %v1523 = vsub.s32 0, %v1522
      %v1524 = vrot.slane %v336, %v1523
      %1526 = vrot.lane.b32.xlu0 %v1524, 32
      %v1527 = vpop.permute.xlu0 %1526
      %v1529 = vmul.f32 %v326, %v1527
      %v1530 = vmul.f32 %v327, %v1527
      %v1531 = vmul.f32 %v328, %v1527
      %v1532 = vmul.f32 %v329, %v1527
      %v1533 = vmul.f32 %v330, %v1527
      %v1534 = vmul.f32 %v331, %v1527
      %v1541 = vrot.slane %v1529, 4
      %v1542 = vrot.slane %v1531, 4
      %v1543 = vsel %vm424, %v1541, %v1542
      %v1544 = vrot.slane %v1530, 4
      %v1545 = vrot.slane %v1532, 4
      %v1546 = vsel %vm424, %v1544, %v1545
      %v1547 = vrot.slane %v1533, 4
      %v1548 = vsel %vm424, %v1542, %v1547
      %v1549 = vrot.slane %v1534, 4
      %v1550 = vsel %vm424, %v1545, %v1549
      %1551 = vrot.lane.b32.xlu0 %v1543, 96
      %v1552 = vpop.permute.xlu0 %1551
      %1553 = vrot.lane.b32.xlu0 %v1546, 96
      %v1554 = vpop.permute.xlu0 %1553
      %1555 = vrot.lane.b32.xlu0 %v1548, 96
      %v1556 = vpop.permute.xlu0 %1555
      %1557 = vrot.lane.b32.xlu0 %v1550, 96
      %v1558 = vpop.permute.xlu0 %1557
      %v1559 = vsel %vm1382, %v1552, %v1554
      %v1560 = vsel %vm1382, %v1556, %v1558
      %v1563 = vadd.f32 %v1519, %v1559
      %v1564 = vadd.f32 %v1520, %v1560
      %v1565 = vlaneseq
      %v1566 = vshrl.u32 %v1565, 7
      %v1567 = vsub.s32 7, %v1566
      %v1568 = vrot.slane %v336, %v1567
      %1570 = vrot.lane.b32.xlu0 %v1568, 32
      %v1571 = vpop.permute.xlu0 %1570
      %v1573 = vmul.f32 %v326, %v1571
      %v1574 = vmul.f32 %v327, %v1571
      %v1575 = vmul.f32 %v328, %v1571
      %v1576 = vmul.f32 %v329, %v1571
      %v1577 = vmul.f32 %v330, %v1571
      %v1578 = vmul.f32 %v331, %v1571
      %v1585 = vrot.slane %v1573, 5
      %v1586 = vrot.slane %v1575, 5
      %v1587 = vsel %vm299, %v1585, %v1586
      %v1588 = vrot.slane %v1574, 5
      %v1589 = vrot.slane %v1576, 5
      %v1590 = vsel %vm299, %v1588, %v1589
      %v1591 = vrot.slane %v1577, 5
      %v1592 = vsel %vm299, %v1586, %v1591
      %v1593 = vrot.slane %v1578, 5
      %v1594 = vsel %vm299, %v1589, %v1593
      %1595 = vrot.lane.b32.xlu0 %v1587, 96
      %v1596 = vpop.permute.xlu0 %1595
      %1597 = vrot.lane.b32.xlu0 %v1590, 96
      %v1598 = vpop.permute.xlu0 %1597
      %1599 = vrot.lane.b32.xlu0 %v1592, 96
      %v1600 = vpop.permute.xlu0 %1599
      %1601 = vrot.lane.b32.xlu0 %v1594, 96
      %v1602 = vpop.permute.xlu0 %1601
      %v1603 = vsel %vm1382, %v1596, %v1598
      %v1604 = vsel %vm1382, %v1600, %v1602
      %v1607 = vadd.f32 %v1563, %v1603
      %v1608 = vadd.f32 %v1564, %v1604
      %v1609 = vlaneseq
      %v1610 = vshrl.u32 %v1609, 7
      %v1611 = vsub.s32 6, %v1610
      %v1612 = vrot.slane %v337, %v1611
      %1614 = vrot.lane.b32.xlu0 %v1612, 32
      %v1615 = vpop.permute.xlu0 %1614
      %v1617 = vmul.f32 %v326, %v1615
      %v1618 = vmul.f32 %v327, %v1615
      %v1619 = vmul.f32 %v328, %v1615
      %v1620 = vmul.f32 %v329, %v1615
      %v1621 = vmul.f32 %v330, %v1615
      %v1622 = vmul.f32 %v331, %v1615
      %v1629 = vrot.slane %v1617, 6
      %v1630 = vrot.slane %v1619, 6
      %v1631 = vsel %vm463, %v1629, %v1630
      %v1632 = vrot.slane %v1618, 6
      %v1633 = vrot.slane %v1620, 6
      %v1634 = vsel %vm463, %v1632, %v1633
      %v1635 = vrot.slane %v1621, 6
      %v1636 = vsel %vm463, %v1630, %v1635
      %v1637 = vrot.slane %v1622, 6
      %v1638 = vsel %vm463, %v1633, %v1637
      %1639 = vrot.lane.b32.xlu0 %v1631, 96
      %v1640 = vpop.permute.xlu0 %1639
      %1641 = vrot.lane.b32.xlu0 %v1634, 96
      %v1642 = vpop.permute.xlu0 %1641
      %1643 = vrot.lane.b32.xlu0 %v1636, 96
      %v1644 = vpop.permute.xlu0 %1643
      %1645 = vrot.lane.b32.xlu0 %v1638, 96
      %v1646 = vpop.permute.xlu0 %1645
      %v1647 = vsel %vm1382, %v1640, %v1642
      %v1648 = vsel %vm1382, %v1644, %v1646
      %v1651 = vadd.f32 %v1607, %v1647
      %v1652 = vadd.f32 %v1608, %v1648
      %v1653 = vlaneseq
      %v1654 = vshrl.u32 %v1653, 7
      %v1655 = vsub.s32 5, %v1654
      %v1656 = vrot.slane %v332, %v1655
      %1658 = vrot.lane.b32.xlu0 %v1656, 40
      %v1659 = vpop.permute.xlu0 %1658
      %v1661 = vmul.f32 %v326, %v1659
      %v1662 = vmul.f32 %v327, %v1659
      %v1663 = vmul.f32 %v328, %v1659
      %v1664 = vmul.f32 %v329, %v1659
      %1669 = vrot.lane.b32.xlu0 %v1661, 88
      %v1670 = vpop.permute.xlu0 %1669
      %1671 = vrot.lane.b32.xlu0 %v1662, 88
      %v1672 = vpop.permute.xlu0 %1671
      %1673 = vrot.lane.b32.xlu0 %v1663, 88
      %v1674 = vpop.permute.xlu0 %1673
      %1675 = vrot.lane.b32.xlu0 %v1664, 88
      %v1676 = vpop.permute.xlu0 %1675
      %vm1677 = vcmask 719872
      %v1678 = vsel %vm1677, %v1670, %v1672
      %v1679 = vsel %vm1677, %v1674, %v1676
      %v1682 = vadd.f32 %v1651, %v1678
      %v1683 = vadd.f32 %v1652, %v1679
      %v1684 = vlaneseq
      %v1685 = vshrl.u32 %v1684, 7
      %v1686 = vsub.s32 4, %v1685
      %v1687 = vrot.slane %v333, %v1686
      %1689 = vrot.lane.b32.xlu0 %v1687, 40
      %v1690 = vpop.permute.xlu0 %1689
      %v1692 = vmul.f32 %v326, %v1690
      %v1693 = vmul.f32 %v327, %v1690
      %v1694 = vmul.f32 %v328, %v1690
      %v1695 = vmul.f32 %v329, %v1690
      %v1696 = vmul.f32 %v330, %v1690
      %v1697 = vmul.f32 %v331, %v1690
      %v1704 = vrot.slane %v1692, 1
      %v1705 = vrot.slane %v1694, 1
      %v1706 = vsel %vm364, %v1704, %v1705
      %v1707 = vrot.slane %v1693, 1
      %v1708 = vrot.slane %v1695, 1
      %v1709 = vsel %vm364, %v1707, %v1708
      %v1710 = vrot.slane %v1696, 1
      %v1711 = vsel %vm364, %v1705, %v1710
      %v1712 = vrot.slane %v1697, 1
      %v1713 = vsel %vm364, %v1708, %v1712
      %1714 = vrot.lane.b32.xlu0 %v1706, 88
      %v1715 = vpop.permute.xlu0 %1714
      %1716 = vrot.lane.b32.xlu0 %v1709, 88
      %v1717 = vpop.permute.xlu0 %1716
      %1718 = vrot.lane.b32.xlu0 %v1711, 88
      %v1719 = vpop.permute.xlu0 %1718
      %1720 = vrot.lane.b32.xlu0 %v1713, 88
      %v1721 = vpop.permute.xlu0 %1720
      %v1722 = vsel %vm1677, %v1715, %v1717
      %v1723 = vsel %vm1677, %v1719, %v1721
      %v1726 = vadd.f32 %v1682, %v1722
      %v1727 = vadd.f32 %v1683, %v1723
      %v1728 = vlaneseq
      %v1729 = vshrl.u32 %v1728, 7
      %v1730 = vsub.s32 3, %v1729
      %v1731 = vrot.slane %v334, %v1730
      %1733 = vrot.lane.b32.xlu0 %v1731, 40
      %v1734 = vpop.permute.xlu0 %1733
      %v1736 = vmul.f32 %v326, %v1734
      %v1737 = vmul.f32 %v327, %v1734
      %v1738 = vmul.f32 %v328, %v1734
      %v1739 = vmul.f32 %v329, %v1734
      %v1740 = vmul.f32 %v330, %v1734
      %v1741 = vmul.f32 %v331, %v1734
      %v1748 = vrot.slane %v1736, 2
      %v1749 = vrot.slane %v1738, 2
      %v1750 = vsel %vm384, %v1748, %v1749
      %v1751 = vrot.slane %v1737, 2
      %v1752 = vrot.slane %v1739, 2
      %v1753 = vsel %vm384, %v1751, %v1752
      %v1754 = vrot.slane %v1740, 2
      %v1755 = vsel %vm384, %v1749, %v1754
      %v1756 = vrot.slane %v1741, 2
      %v1757 = vsel %vm384, %v1752, %v1756
      %1758 = vrot.lane.b32.xlu0 %v1750, 88
      %v1759 = vpop.permute.xlu0 %1758
      %1760 = vrot.lane.b32.xlu0 %v1753, 88
      %v1761 = vpop.permute.xlu0 %1760
      %1762 = vrot.lane.b32.xlu0 %v1755, 88
      %v1763 = vpop.permute.xlu0 %1762
      %1764 = vrot.lane.b32.xlu0 %v1757, 88
      %v1765 = vpop.permute.xlu0 %1764
      %v1766 = vsel %vm1677, %v1759, %v1761
      %v1767 = vsel %vm1677, %v1763, %v1765
      %v1770 = vadd.f32 %v1726, %v1766
      %v1771 = vadd.f32 %v1727, %v1767
      %v1772 = vlaneseq
      %v1773 = vshrl.u32 %v1772, 7
      %v1774 = vsub.s32 2, %v1773
      %v1775 = vrot.slane %v335, %v1774
      %1777 = vrot.lane.b32.xlu0 %v1775, 40
      %v1778 = vpop.permute.xlu0 %1777
      %v1780 = vmul.f32 %v326, %v1778
      %v1781 = vmul.f32 %v327, %v1778
      %v1782 = vmul.f32 %v328, %v1778
      %v1783 = vmul.f32 %v329, %v1778
      %v1784 = vmul.f32 %v330, %v1778
      %v1785 = vmul.f32 %v331, %v1778
      %v1792 = vrot.slane %v1780, 3
      %v1793 = vrot.slane %v1782, 3
      %v1794 = vsel %vm404, %v1792, %v1793
      %v1795 = vrot.slane %v1781, 3
      %v1796 = vrot.slane %v1783, 3
      %v1797 = vsel %vm404, %v1795, %v1796
      %v1798 = vrot.slane %v1784, 3
      %v1799 = vsel %vm404, %v1793, %v1798
      %v1800 = vrot.slane %v1785, 3
      %v1801 = vsel %vm404, %v1796, %v1800
      %1802 = vrot.lane.b32.xlu0 %v1794, 88
      %v1803 = vpop.permute.xlu0 %1802
      %1804 = vrot.lane.b32.xlu0 %v1797, 88
      %v1805 = vpop.permute.xlu0 %1804
      %1806 = vrot.lane.b32.xlu0 %v1799, 88
      %v1807 = vpop.permute.xlu0 %1806
      %1808 = vrot.lane.b32.xlu0 %v1801, 88
      %v1809 = vpop.permute.xlu0 %1808
      %v1810 = vsel %vm1677, %v1803, %v1805
      %v1811 = vsel %vm1677, %v1807, %v1809
      %v1814 = vadd.f32 %v1770, %v1810
      %v1815 = vadd.f32 %v1771, %v1811
      %v1816 = vlaneseq
      %v1817 = vshrl.u32 %v1816, 7
      %v1818 = vsub.s32 1, %v1817
      %v1819 = vrot.slane %v336, %v1818
      %1821 = vrot.lane.b32.xlu0 %v1819, 40
      %v1822 = vpop.permute.xlu0 %1821
      %v1824 = vmul.f32 %v326, %v1822
      %v1825 = vmul.f32 %v327, %v1822
      %v1826 = vmul.f32 %v328, %v1822
      %v1827 = vmul.f32 %v329, %v1822
      %v1828 = vmul.f32 %v330, %v1822
      %v1829 = vmul.f32 %v331, %v1822
      %v1836 = vrot.slane %v1824, 4
      %v1837 = vrot.slane %v1826, 4
      %v1838 = vsel %vm424, %v1836, %v1837
      %v1839 = vrot.slane %v1825, 4
      %v1840 = vrot.slane %v1827, 4
      %v1841 = vsel %vm424, %v1839, %v1840
      %v1842 = vrot.slane %v1828, 4
      %v1843 = vsel %vm424, %v1837, %v1842
      %v1844 = vrot.slane %v1829, 4
      %v1845 = vsel %vm424, %v1840, %v1844
      %1846 = vrot.lane.b32.xlu0 %v1838, 88
      %v1847 = vpop.permute.xlu0 %1846
      %1848 = vrot.lane.b32.xlu0 %v1841, 88
      %v1849 = vpop.permute.xlu0 %1848
      %1850 = vrot.lane.b32.xlu0 %v1843, 88
      %v1851 = vpop.permute.xlu0 %1850
      %1852 = vrot.lane.b32.xlu0 %v1845, 88
      %v1853 = vpop.permute.xlu0 %1852
      %v1854 = vsel %vm1677, %v1847, %v1849
      %v1855 = vsel %vm1677, %v1851, %v1853
      %v1858 = vadd.f32 %v1814, %v1854
      %v1859 = vadd.f32 %v1815, %v1855
      %v1860 = vlaneseq
      %v1861 = vshrl.u32 %v1860, 7
      %v1862 = vsub.s32 0, %v1861
      %v1863 = vrot.slane %v337, %v1862
      %1865 = vrot.lane.b32.xlu0 %v1863, 40
      %v1866 = vpop.permute.xlu0 %1865
      %v1868 = vmul.f32 %v326, %v1866
      %v1869 = vmul.f32 %v327, %v1866
      %v1870 = vmul.f32 %v328, %v1866
      %v1871 = vmul.f32 %v329, %v1866
      %v1872 = vmul.f32 %v330, %v1866
      %v1873 = vmul.f32 %v331, %v1866
      %v1880 = vrot.slane %v1868, 5
      %v1881 = vrot.slane %v1870, 5
      %v1882 = vsel %vm299, %v1880, %v1881
      %v1883 = vrot.slane %v1869, 5
      %v1884 = vrot.slane %v1871, 5
      %v1885 = vsel %vm299, %v1883, %v1884
      %v1886 = vrot.slane %v1872, 5
      %v1887 = vsel %vm299, %v1881, %v1886
      %v1888 = vrot.slane %v1873, 5
      %v1889 = vsel %vm299, %v1884, %v1888
      %1890 = vrot.lane.b32.xlu0 %v1882, 88
      %v1891 = vpop.permute.xlu0 %1890
      %1892 = vrot.lane.b32.xlu0 %v1885, 88
      %v1893 = vpop.permute.xlu0 %1892
      %1894 = vrot.lane.b32.xlu0 %v1887, 88
      %v1895 = vpop.permute.xlu0 %1894
      %1896 = vrot.lane.b32.xlu0 %v1889, 88
      %v1897 = vpop.permute.xlu0 %1896
      %v1898 = vsel %vm1677, %v1891, %v1893
      %v1899 = vsel %vm1677, %v1895, %v1897
      %v1902 = vadd.f32 %v1858, %v1898
      %v1903 = vadd.f32 %v1859, %v1899
      %v1904 = vlaneseq
      %v1905 = vshrl.u32 %v1904, 7
      %v1906 = vsub.s32 7, %v1905
      %v1907 = vrot.slane %v337, %v1906
      %1909 = vrot.lane.b32.xlu0 %v1907, 40
      %v1910 = vpop.permute.xlu0 %1909
      %v1912 = vmul.f32 %v326, %v1910
      %v1913 = vmul.f32 %v327, %v1910
      %v1914 = vmul.f32 %v328, %v1910
      %v1915 = vmul.f32 %v329, %v1910
      %v1916 = vmul.f32 %v330, %v1910
      %v1917 = vmul.f32 %v331, %v1910
      %v1924 = vrot.slane %v1912, 6
      %v1925 = vrot.slane %v1914, 6
      %v1926 = vsel %vm463, %v1924, %v1925
      %v1927 = vrot.slane %v1913, 6
      %v1928 = vrot.slane %v1915, 6
      %v1929 = vsel %vm463, %v1927, %v1928
      %v1930 = vrot.slane %v1916, 6
      %v1931 = vsel %vm463, %v1925, %v1930
      %v1932 = vrot.slane %v1917, 6
      %v1933 = vsel %vm463, %v1928, %v1932
      %1934 = vrot.lane.b32.xlu0 %v1926, 88
      %v1935 = vpop.permute.xlu0 %1934
      %1936 = vrot.lane.b32.xlu0 %v1929, 88
      %v1937 = vpop.permute.xlu0 %1936
      %1938 = vrot.lane.b32.xlu0 %v1931, 88
      %v1939 = vpop.permute.xlu0 %1938
      %1940 = vrot.lane.b32.xlu0 %v1933, 88
      %v1941 = vpop.permute.xlu0 %1940
      %v1942 = vsel %vm1677, %v1935, %v1937
      %v1943 = vsel %vm1677, %v1939, %v1941
      %v1946 = vadd.f32 %v1902, %v1942
      %v1947 = vadd.f32 %v1903, %v1943
      %v1948 = vlaneseq
      %v1949 = vshrl.u32 %v1948, 7
      %v1950 = vsub.s32 6, %v1949
      %v1951 = vrot.slane %v332, %v1950
      %1953 = vrot.lane.b32.xlu0 %v1951, 48
      %v1954 = vpop.permute.xlu0 %1953
      %v1956 = vmul.f32 %v326, %v1954
      %v1957 = vmul.f32 %v327, %v1954
      %v1958 = vmul.f32 %v328, %v1954
      %v1959 = vmul.f32 %v329, %v1954
      %1964 = vrot.lane.b32.xlu0 %v1956, 80
      %v1965 = vpop.permute.xlu0 %1964
      %1966 = vrot.lane.b32.xlu0 %v1957, 80
      %v1967 = vpop.permute.xlu0 %1966
      %1968 = vrot.lane.b32.xlu0 %v1958, 80
      %v1969 = vpop.permute.xlu0 %1968
      %1970 = vrot.lane.b32.xlu0 %v1959, 80
      %v1971 = vpop.permute.xlu0 %1970
      %vm1972 = vcmask 654336
      %v1973 = vsel %vm1972, %v1965, %v1967
      %v1974 = vsel %vm1972, %v1969, %v1971
      %v1977 = vadd.f32 %v1946, %v1973
      %v1978 = vadd.f32 %v1947, %v1974
      %v1979 = vlaneseq
      %v1980 = vshrl.u32 %v1979, 7
      %v1981 = vsub.s32 5, %v1980
      %v1982 = vrot.slane %v333, %v1981
      %1984 = vrot.lane.b32.xlu0 %v1982, 48
      %v1985 = vpop.permute.xlu0 %1984
      %v1987 = vmul.f32 %v326, %v1985
      %v1988 = vmul.f32 %v327, %v1985
      %v1989 = vmul.f32 %v328, %v1985
      %v1990 = vmul.f32 %v329, %v1985
      %v1991 = vmul.f32 %v330, %v1985
      %v1992 = vmul.f32 %v331, %v1985
      %v1999 = vrot.slane %v1987, 1
      %v2000 = vrot.slane %v1989, 1
      %v2001 = vsel %vm364, %v1999, %v2000
      %v2002 = vrot.slane %v1988, 1
      %v2003 = vrot.slane %v1990, 1
      %v2004 = vsel %vm364, %v2002, %v2003
      %v2005 = vrot.slane %v1991, 1
      %v2006 = vsel %vm364, %v2000, %v2005
      %v2007 = vrot.slane %v1992, 1
      %v2008 = vsel %vm364, %v2003, %v2007
      %2009 = vrot.lane.b32.xlu0 %v2001, 80
      %v2010 = vpop.permute.xlu0 %2009
      %2011 = vrot.lane.b32.xlu0 %v2004, 80
      %v2012 = vpop.permute.xlu0 %2011
      %2013 = vrot.lane.b32.xlu0 %v2006, 80
      %v2014 = vpop.permute.xlu0 %2013
      %2015 = vrot.lane.b32.xlu0 %v2008, 80
      %v2016 = vpop.permute.xlu0 %2015
      %v2017 = vsel %vm1972, %v2010, %v2012
      %v2018 = vsel %vm1972, %v2014, %v2016
      %v2021 = vadd.f32 %v1977, %v2017
      %v2022 = vadd.f32 %v1978, %v2018
      %v2023 = vlaneseq
      %v2024 = vshrl.u32 %v2023, 7
      %v2025 = vsub.s32 4, %v2024
      %v2026 = vrot.slane %v334, %v2025
      %2028 = vrot.lane.b32.xlu0 %v2026, 48
      %v2029 = vpop.permute.xlu0 %2028
      %v2031 = vmul.f32 %v326, %v2029
      %v2032 = vmul.f32 %v327, %v2029
      %v2033 = vmul.f32 %v328, %v2029
      %v2034 = vmul.f32 %v329, %v2029
      %v2035 = vmul.f32 %v330, %v2029
      %v2036 = vmul.f32 %v331, %v2029
      %v2043 = vrot.slane %v2031, 2
      %v2044 = vrot.slane %v2033, 2
      %v2045 = vsel %vm384, %v2043, %v2044
      %v2046 = vrot.slane %v2032, 2
      %v2047 = vrot.slane %v2034, 2
      %v2048 = vsel %vm384, %v2046, %v2047
      %v2049 = vrot.slane %v2035, 2
      %v2050 = vsel %vm384, %v2044, %v2049
      %v2051 = vrot.slane %v2036, 2
      %v2052 = vsel %vm384, %v2047, %v2051
      %2053 = vrot.lane.b32.xlu0 %v2045, 80
      %v2054 = vpop.permute.xlu0 %2053
      %2055 = vrot.lane.b32.xlu0 %v2048, 80
      %v2056 = vpop.permute.xlu0 %2055
      %2057 = vrot.lane.b32.xlu0 %v2050, 80
      %v2058 = vpop.permute.xlu0 %2057
      %2059 = vrot.lane.b32.xlu0 %v2052, 80
      %v2060 = vpop.permute.xlu0 %2059
      %v2061 = vsel %vm1972, %v2054, %v2056
      %v2062 = vsel %vm1972, %v2058, %v2060
      %v2065 = vadd.f32 %v2021, %v2061
      %v2066 = vadd.f32 %v2022, %v2062
      %v2067 = vlaneseq
      %v2068 = vshrl.u32 %v2067, 7
      %v2069 = vsub.s32 3, %v2068
      %v2070 = vrot.slane %v335, %v2069
      %2072 = vrot.lane.b32.xlu0 %v2070, 48
      %v2073 = vpop.permute.xlu0 %2072
      %v2075 = vmul.f32 %v326, %v2073
      %v2076 = vmul.f32 %v327, %v2073
      %v2077 = vmul.f32 %v328, %v2073
      %v2078 = vmul.f32 %v329, %v2073
      %v2079 = vmul.f32 %v330, %v2073
      %v2080 = vmul.f32 %v331, %v2073
      %v2087 = vrot.slane %v2075, 3
      %v2088 = vrot.slane %v2077, 3
      %v2089 = vsel %vm404, %v2087, %v2088
      %v2090 = vrot.slane %v2076, 3
      %v2091 = vrot.slane %v2078, 3
      %v2092 = vsel %vm404, %v2090, %v2091
      %v2093 = vrot.slane %v2079, 3
      %v2094 = vsel %vm404, %v2088, %v2093
      %v2095 = vrot.slane %v2080, 3
      %v2096 = vsel %vm404, %v2091, %v2095
      %2097 = vrot.lane.b32.xlu0 %v2089, 80
      %v2098 = vpop.permute.xlu0 %2097
      %2099 = vrot.lane.b32.xlu0 %v2092, 80
      %v2100 = vpop.permute.xlu0 %2099
      %2101 = vrot.lane.b32.xlu0 %v2094, 80
      %v2102 = vpop.permute.xlu0 %2101
      %2103 = vrot.lane.b32.xlu0 %v2096, 80
      %v2104 = vpop.permute.xlu0 %2103
      %v2105 = vsel %vm1972, %v2098, %v2100
      %v2106 = vsel %vm1972, %v2102, %v2104
      %v2109 = vadd.f32 %v2065, %v2105
      %v2110 = vadd.f32 %v2066, %v2106
      %v2111 = vlaneseq
      %v2112 = vshrl.u32 %v2111, 7
      %v2113 = vsub.s32 2, %v2112
      %v2114 = vrot.slane %v336, %v2113
      %2116 = vrot.lane.b32.xlu0 %v2114, 48
      %v2117 = vpop.permute.xlu0 %2116
      %v2119 = vmul.f32 %v326, %v2117
      %v2120 = vmul.f32 %v327, %v2117
      %v2121 = vmul.f32 %v328, %v2117
      %v2122 = vmul.f32 %v329, %v2117
      %v2123 = vmul.f32 %v330, %v2117
      %v2124 = vmul.f32 %v331, %v2117
      %v2131 = vrot.slane %v2119, 4
      %v2132 = vrot.slane %v2121, 4
      %v2133 = vsel %vm424, %v2131, %v2132
      %v2134 = vrot.slane %v2120, 4
      %v2135 = vrot.slane %v2122, 4
      %v2136 = vsel %vm424, %v2134, %v2135
      %v2137 = vrot.slane %v2123, 4
      %v2138 = vsel %vm424, %v2132, %v2137
      %v2139 = vrot.slane %v2124, 4
      %v2140 = vsel %vm424, %v2135, %v2139
      %2141 = vrot.lane.b32.xlu0 %v2133, 80
      %v2142 = vpop.permute.xlu0 %2141
      %2143 = vrot.lane.b32.xlu0 %v2136, 80
      %v2144 = vpop.permute.xlu0 %2143
      %2145 = vrot.lane.b32.xlu0 %v2138, 80
      %v2146 = vpop.permute.xlu0 %2145
      %2147 = vrot.lane.b32.xlu0 %v2140, 80
      %v2148 = vpop.permute.xlu0 %2147
      %v2149 = vsel %vm1972, %v2142, %v2144
      %v2150 = vsel %vm1972, %v2146, %v2148
      %v2153 = vadd.f32 %v2109, %v2149
      %v2154 = vadd.f32 %v2110, %v2150
      %v2155 = vlaneseq
      %v2156 = vshrl.u32 %v2155, 7
      %v2157 = vsub.s32 1, %v2156
      %v2158 = vrot.slane %v337, %v2157
      %2160 = vrot.lane.b32.xlu0 %v2158, 48
      %v2161 = vpop.permute.xlu0 %2160
      %v2163 = vmul.f32 %v326, %v2161
      %v2164 = vmul.f32 %v327, %v2161
      %v2165 = vmul.f32 %v328, %v2161
      %v2166 = vmul.f32 %v329, %v2161
      %v2167 = vmul.f32 %v330, %v2161
      %v2168 = vmul.f32 %v331, %v2161
      %v2175 = vrot.slane %v2163, 5
      %v2176 = vrot.slane %v2165, 5
      %v2177 = vsel %vm299, %v2175, %v2176
      %v2178 = vrot.slane %v2164, 5
      %v2179 = vrot.slane %v2166, 5
      %v2180 = vsel %vm299, %v2178, %v2179
      %v2181 = vrot.slane %v2167, 5
      %v2182 = vsel %vm299, %v2176, %v2181
      %v2183 = vrot.slane %v2168, 5
      %v2184 = vsel %vm299, %v2179, %v2183
      %2185 = vrot.lane.b32.xlu0 %v2177, 80
      %v2186 = vpop.permute.xlu0 %2185
      %2187 = vrot.lane.b32.xlu0 %v2180, 80
      %v2188 = vpop.permute.xlu0 %2187
      %2189 = vrot.lane.b32.xlu0 %v2182, 80
      %v2190 = vpop.permute.xlu0 %2189
      %2191 = vrot.lane.b32.xlu0 %v2184, 80
      %v2192 = vpop.permute.xlu0 %2191
      %v2193 = vsel %vm1972, %v2186, %v2188
      %v2194 = vsel %vm1972, %v2190, %v2192
      %v2197 = vadd.f32 %v2153, %v2193
      %v2198 = vadd.f32 %v2154, %v2194
      %v2199 = vlaneseq
      %v2200 = vshrl.u32 %v2199, 7
      %v2201 = vsub.s32 0, %v2200
      %v2202 = vrot.slane %v338, %v2201
      %2204 = vrot.lane.b32.xlu0 %v2202, 48
      %v2205 = vpop.permute.xlu0 %2204
      %v2207 = vmul.f32 %v326, %v2205
      %v2208 = vmul.f32 %v327, %v2205
      %v2209 = vmul.f32 %v328, %v2205
      %v2210 = vmul.f32 %v329, %v2205
      %v2211 = vmul.f32 %v330, %v2205
      %v2212 = vmul.f32 %v331, %v2205
      %v2219 = vrot.slane %v2207, 6
      %v2220 = vrot.slane %v2209, 6
      %v2221 = vsel %vm463, %v2219, %v2220
      %v2222 = vrot.slane %v2208, 6
      %v2223 = vrot.slane %v2210, 6
      %v2224 = vsel %vm463, %v2222, %v2223
      %v2225 = vrot.slane %v2211, 6
      %v2226 = vsel %vm463, %v2220, %v2225
      %v2227 = vrot.slane %v2212, 6
      %v2228 = vsel %vm463, %v2223, %v2227
      %2229 = vrot.lane.b32.xlu0 %v2221, 80
      %v2230 = vpop.permute.xlu0 %2229
      %2231 = vrot.lane.b32.xlu0 %v2224, 80
      %v2232 = vpop.permute.xlu0 %2231
      %2233 = vrot.lane.b32.xlu0 %v2226, 80
      %v2234 = vpop.permute.xlu0 %2233
      %2235 = vrot.lane.b32.xlu0 %v2228, 80
      %v2236 = vpop.permute.xlu0 %2235
      %v2237 = vsel %vm1972, %v2230, %v2232
      %v2238 = vsel %vm1972, %v2234, %v2236
      %v2241 = vadd.f32 %v2197, %v2237
      %v2242 = vadd.f32 %v2198, %v2238
      %2245 = vrot.lane.b32.xlu0 %v2241, 120
      %v2246 = vpop.permute.xlu0 %2245
      %2247 = vrot.lane.b32.xlu0 %v2242, 120
      %v2248 = vpop.permute.xlu0 %2247
      %2251 = vrot.lane.b32.xlu0 %v2241, 112
      %v2252 = vpop.permute.xlu0 %2251
      %2253 = vrot.lane.b32.xlu0 %v2242, 112
      %v2254 = vpop.permute.xlu0 %2253
      %2257 = vrot.lane.b32.xlu0 %v2241, 104
      %v2258 = vpop.permute.xlu0 %2257
      %2259 = vrot.lane.b32.xlu0 %v2242, 104
      %v2260 = vpop.permute.xlu0 %2259
      %2263 = vrot.lane.b32.xlu0 %v2241, 96
      %v2264 = vpop.permute.xlu0 %2263
      %2265 = vrot.lane.b32.xlu0 %v2242, 96
      %v2266 = vpop.permute.xlu0 %2265
      %2269 = vrot.lane.b32.xlu0 %v2241, 88
      %v2270 = vpop.permute.xlu0 %2269
      %2271 = vrot.lane.b32.xlu0 %v2242, 88
      %v2272 = vpop.permute.xlu0 %2271
      %2275 = vrot.lane.b32.xlu0 %v2241, 80
      %v2276 = vpop.permute.xlu0 %2275
      %2277 = vrot.lane.b32.xlu0 %v2242, 80
      %v2278 = vpop.permute.xlu0 %2277
      %2281 = vrot.lane.b32.xlu0 %v2241, 72
      %v2282 = vpop.permute.xlu0 %2281
      %2283 = vrot.lane.b32.xlu0 %v2242, 72
      %v2284 = vpop.permute.xlu0 %2283
      %2287 = vrot.lane.b32.xlu0 %v2241, 64
      %v2288 = vpop.permute.xlu0 %2287
      %2289 = vrot.lane.b32.xlu0 %v2242, 64
      %v2290 = vpop.permute.xlu0 %2289
      %2293 = vrot.lane.b32.xlu0 %v2241, 56
      %v2294 = vpop.permute.xlu0 %2293
      %2295 = vrot.lane.b32.xlu0 %v2242, 56
      %v2296 = vpop.permute.xlu0 %2295
      %2299 = vrot.lane.b32.xlu0 %v2241, 48
      %v2300 = vpop.permute.xlu0 %2299
      %2301 = vrot.lane.b32.xlu0 %v2242, 48
      %v2302 = vpop.permute.xlu0 %2301
      %2305 = vrot.lane.b32.xlu0 %v2241, 40
      %v2306 = vpop.permute.xlu0 %2305
      %2307 = vrot.lane.b32.xlu0 %v2242, 40
      %v2308 = vpop.permute.xlu0 %2307
      %2311 = vrot.lane.b32.xlu0 %v2241, 32
      %v2312 = vpop.permute.xlu0 %2311
      %2313 = vrot.lane.b32.xlu0 %v2242, 32
      %v2314 = vpop.permute.xlu0 %2313
      %2317 = vrot.lane.b32.xlu0 %v2241, 24
      %v2318 = vpop.permute.xlu0 %2317
      %2319 = vrot.lane.b32.xlu0 %v2242, 24
      %v2320 = vpop.permute.xlu0 %2319
      %2323 = vrot.lane.b32.xlu0 %v2241, 16
      %v2324 = vpop.permute.xlu0 %2323
      %2325 = vrot.lane.b32.xlu0 %v2242, 16
      %v2326 = vpop.permute.xlu0 %2325
      %2329 = vrot.lane.b32.xlu0 %v2241, 8
      %v2330 = vpop.permute.xlu0 %2329
      %2331 = vrot.lane.b32.xlu0 %v2242, 8
      %v2332 = vpop.permute.xlu0 %2331
      %vm2335 = vcmask 64512
      %v2336 = vsel %vm2335, %v2241, 0.0
      %2337 = vadd.xlane.f32.xlu0 %v2336
      %v2338 = vpop.xlane.xlu0 %2337
      %v2339 = vsel %vm2335, %v2242, 0.0
      %2340 = vadd.xlane.f32.xlu0 %v2339
      %v2341 = vpop.xlane.xlu0 %2340
      %v2342 = vsel %vm2335, %v2246, 0.0
      %2343 = vadd.xlane.f32.xlu0 %v2342
      %v2344 = vpop.xlane.xlu0 %2343
      %v2345 = vsel %vm2335, %v2248, 0.0
      %2346 = vadd.xlane.f32.xlu0 %v2345
      %v2347 = vpop.xlane.xlu0 %2346
      %v2348 = vsel %vm2335, %v2252, 0.0
      %2349 = vadd.xlane.f32.xlu0 %v2348
      %v2350 = vpop.xlane.xlu0 %2349
      %v2351 = vsel %vm2335, %v2254, 0.0
      %2352 = vadd.xlane.f32.xlu0 %v2351
      %v2353 = vpop.xlane.xlu0 %2352
      %v2354 = vsel %vm2335, %v2258, 0.0
      %2355 = vadd.xlane.f32.xlu0 %v2354
      %v2356 = vpop.xlane.xlu0 %2355
      %v2357 = vsel %vm2335, %v2260, 0.0
      %2358 = vadd.xlane.f32.xlu0 %v2357
      %v2359 = vpop.xlane.xlu0 %2358
      %v2360 = vsel %vm2335, %v2264, 0.0
      %2361 = vadd.xlane.f32.xlu0 %v2360
      %v2362 = vpop.xlane.xlu0 %2361
      %v2363 = vsel %vm2335, %v2266, 0.0
      %2364 = vadd.xlane.f32.xlu0 %v2363
      %v2365 = vpop.xlane.xlu0 %2364
      %v2366 = vsel %vm2335, %v2270, 0.0
      %2367 = vadd.xlane.f32.xlu0 %v2366
      %v2368 = vpop.xlane.xlu0 %2367
      %v2369 = vsel %vm2335, %v2272, 0.0
      %2370 = vadd.xlane.f32.xlu0 %v2369
      %v2371 = vpop.xlane.xlu0 %2370
      %v2372 = vsel %vm2335, %v2276, 0.0
      %2373 = vadd.xlane.f32.xlu0 %v2372
      %v2374 = vpop.xlane.xlu0 %2373
      %v2375 = vsel %vm2335, %v2278, 0.0
      %2376 = vadd.xlane.f32.xlu0 %v2375
      %v2377 = vpop.xlane.xlu0 %2376
      %v2378 = vsel %vm2335, %v2282, 0.0
      %2379 = vadd.xlane.f32.xlu0 %v2378
      %v2380 = vpop.xlane.xlu0 %2379
      %v2381 = vsel %vm2335, %v2284, 0.0
      %2382 = vadd.xlane.f32.xlu0 %v2381
      %v2383 = vpop.xlane.xlu0 %2382
      %v2384 = vsel %vm2335, %v2288, 0.0
      %2385 = vadd.xlane.f32.xlu0 %v2384
      %v2386 = vpop.xlane.xlu0 %2385
      %v2387 = vsel %vm2335, %v2290, 0.0
      %2388 = vadd.xlane.f32.xlu0 %v2387
      %v2389 = vpop.xlane.xlu0 %2388
      %v2390 = vsel %vm2335, %v2294, 0.0
      %2391 = vadd.xlane.f32.xlu0 %v2390
      %v2392 = vpop.xlane.xlu0 %2391
      %v2393 = vsel %vm2335, %v2296, 0.0
      %2394 = vadd.xlane.f32.xlu0 %v2393
      %v2395 = vpop.xlane.xlu0 %2394
      %v2396 = vsel %vm2335, %v2300, 0.0
      %2397 = vadd.xlane.f32.xlu0 %v2396
      %v2398 = vpop.xlane.xlu0 %2397
      %v2399 = vsel %vm2335, %v2302, 0.0
      %2400 = vadd.xlane.f32.xlu0 %v2399
      %v2401 = vpop.xlane.xlu0 %2400
      %v2402 = vsel %vm2335, %v2306, 0.0
      %2403 = vadd.xlane.f32.xlu0 %v2402
      %v2404 = vpop.xlane.xlu0 %2403
      %v2405 = vsel %vm2335, %v2308, 0.0
      %2406 = vadd.xlane.f32.xlu0 %v2405
      %v2407 = vpop.xlane.xlu0 %2406
      %v2408 = vsel %vm2335, %v2312, 0.0
      %2409 = vadd.xlane.f32.xlu0 %v2408
      %v2410 = vpop.xlane.xlu0 %2409
      %v2411 = vsel %vm2335, %v2314, 0.0
      %2412 = vadd.xlane.f32.xlu0 %v2411
      %v2413 = vpop.xlane.xlu0 %2412
      %v2414 = vsel %vm2335, %v2318, 0.0
      %2415 = vadd.xlane.f32.xlu0 %v2414
      %v2416 = vpop.xlane.xlu0 %2415
      %v2417 = vsel %vm2335, %v2320, 0.0
      %2418 = vadd.xlane.f32.xlu0 %v2417
      %v2419 = vpop.xlane.xlu0 %2418
      %v2420 = vsel %vm2335, %v2324, 0.0
      %2421 = vadd.xlane.f32.xlu0 %v2420
      %v2422 = vpop.xlane.xlu0 %2421
      %v2423 = vsel %vm2335, %v2326, 0.0
      %2424 = vadd.xlane.f32.xlu0 %v2423
      %v2425 = vpop.xlane.xlu0 %2424
      %v2426 = vsel %vm2335, %v2330, 0.0
      %2427 = vadd.xlane.f32.xlu0 %v2426
      %v2428 = vpop.xlane.xlu0 %2427
      %v2429 = vsel %vm2335, %v2332, 0.0
      %2430 = vadd.xlane.f32.xlu0 %v2429
      %v2431 = vpop.xlane.xlu0 %2430
      %v2432 = vrcp.pop 8.0
      %v2433 = vmul.f32 %v2338, %v2432
      %v2434 = vmul.f32 %v2341, %v2432
      %v2435 = vmul.f32 %v2344, %v2432
      %v2436 = vmul.f32 %v2347, %v2432
      %v2437 = vmul.f32 %v2350, %v2432
      %v2438 = vmul.f32 %v2353, %v2432
      %v2439 = vmul.f32 %v2356, %v2432
      %v2440 = vmul.f32 %v2359, %v2432
      %v2441 = vmul.f32 %v2362, %v2432
      %v2442 = vmul.f32 %v2365, %v2432
      %v2443 = vmul.f32 %v2368, %v2432
      %v2444 = vmul.f32 %v2371, %v2432
      %v2445 = vmul.f32 %v2374, %v2432
      %v2446 = vmul.f32 %v2377, %v2432
      %v2447 = vmul.f32 %v2380, %v2432
      %v2448 = vmul.f32 %v2383, %v2432
      %v2449 = vmul.f32 %v2386, %v2432
      %v2450 = vmul.f32 %v2389, %v2432
      %v2451 = vmul.f32 %v2392, %v2432
      %v2452 = vmul.f32 %v2395, %v2432
      %v2453 = vmul.f32 %v2398, %v2432
      %v2454 = vmul.f32 %v2401, %v2432
      %v2455 = vmul.f32 %v2404, %v2432
      %v2456 = vmul.f32 %v2407, %v2432
      %v2457 = vmul.f32 %v2410, %v2432
      %v2458 = vmul.f32 %v2413, %v2432
      %v2459 = vmul.f32 %v2416, %v2432
      %v2460 = vmul.f32 %v2419, %v2432
      %v2461 = vmul.f32 %v2422, %v2432
      %v2462 = vmul.f32 %v2425, %v2432
      %v2463 = vmul.f32 %v2428, %v2432
      %v2464 = vmul.f32 %v2431, %v2432
      %v2465 = vsub.f32 %v2241, %v2433
      %v2466 = vsub.f32 %v2242, %v2434
      %v2467 = vsub.f32 %v2246, %v2435
      %v2468 = vsub.f32 %v2248, %v2436
      %v2469 = vsub.f32 %v2252, %v2437
      %v2470 = vsub.f32 %v2254, %v2438
      %v2471 = vsub.f32 %v2258, %v2439
      %v2472 = vsub.f32 %v2260, %v2440
      %v2473 = vsub.f32 %v2264, %v2441
      %v2474 = vsub.f32 %v2266, %v2442
      %v2475 = vsub.f32 %v2270, %v2443
      %v2476 = vsub.f32 %v2272, %v2444
      %v2477 = vsub.f32 %v2276, %v2445
      %v2478 = vsub.f32 %v2278, %v2446
      %v2479 = vsub.f32 %v2282, %v2447
      %v2480 = vsub.f32 %v2284, %v2448
      %v2481 = vsub.f32 %v2288, %v2449
      %v2482 = vsub.f32 %v2290, %v2450
      %v2483 = vsub.f32 %v2294, %v2451
      %v2484 = vsub.f32 %v2296, %v2452
      %v2485 = vsub.f32 %v2300, %v2453
      %v2486 = vsub.f32 %v2302, %v2454
      %v2487 = vsub.f32 %v2306, %v2455
      %v2488 = vsub.f32 %v2308, %v2456
      %v2489 = vsub.f32 %v2312, %v2457
      %v2490 = vsub.f32 %v2314, %v2458
      %v2491 = vsub.f32 %v2318, %v2459
      %v2492 = vsub.f32 %v2320, %v2460
      %v2493 = vsub.f32 %v2324, %v2461
      %v2494 = vsub.f32 %v2326, %v2462
      %v2495 = vsub.f32 %v2330, %v2463
      %v2496 = vsub.f32 %v2332, %v2464
      %v2497 = vmul.f32 %v2465, %v2465
      %v2498 = vmul.f32 %v2466, %v2466
      %v2499 = vmul.f32 %v2467, %v2467
      %v2500 = vmul.f32 %v2468, %v2468
      %v2501 = vmul.f32 %v2469, %v2469
      %v2502 = vmul.f32 %v2470, %v2470
      %v2503 = vmul.f32 %v2471, %v2471
      %v2504 = vmul.f32 %v2472, %v2472
      %v2505 = vmul.f32 %v2473, %v2473
      %v2506 = vmul.f32 %v2474, %v2474
      %v2507 = vmul.f32 %v2475, %v2475
      %v2508 = vmul.f32 %v2476, %v2476
      %v2509 = vmul.f32 %v2477, %v2477
      %v2510 = vmul.f32 %v2478, %v2478
      %v2511 = vmul.f32 %v2479, %v2479
      %v2512 = vmul.f32 %v2480, %v2480
      %v2513 = vmul.f32 %v2481, %v2481
      %v2514 = vmul.f32 %v2482, %v2482
      %v2515 = vmul.f32 %v2483, %v2483
      %v2516 = vmul.f32 %v2484, %v2484
      %v2517 = vmul.f32 %v2485, %v2485
      %v2518 = vmul.f32 %v2486, %v2486
      %v2519 = vmul.f32 %v2487, %v2487
      %v2520 = vmul.f32 %v2488, %v2488
      %v2521 = vmul.f32 %v2489, %v2489
      %v2522 = vmul.f32 %v2490, %v2490
      %v2523 = vmul.f32 %v2491, %v2491
      %v2524 = vmul.f32 %v2492, %v2492
      %v2525 = vmul.f32 %v2493, %v2493
      %v2526 = vmul.f32 %v2494, %v2494
      %v2527 = vmul.f32 %v2495, %v2495
      %v2528 = vmul.f32 %v2496, %v2496
      %v2529 = vsel %vm2335, %v2497, 0.0
      %2530 = vadd.xlane.f32.xlu0 %v2529
      %v2531 = vpop.xlane.xlu0 %2530
      %v2532 = vsel %vm2335, %v2498, 0.0
      %2533 = vadd.xlane.f32.xlu0 %v2532
      %v2534 = vpop.xlane.xlu0 %2533
      %v2535 = vsel %vm2335, %v2499, 0.0
      %2536 = vadd.xlane.f32.xlu0 %v2535
      %v2537 = vpop.xlane.xlu0 %2536
      %v2538 = vsel %vm2335, %v2500, 0.0
      %2539 = vadd.xlane.f32.xlu0 %v2538
      %v2540 = vpop.xlane.xlu0 %2539
      %v2541 = vsel %vm2335, %v2501, 0.0
      %2542 = vadd.xlane.f32.xlu0 %v2541
      %v2543 = vpop.xlane.xlu0 %2542
      %v2544 = vsel %vm2335, %v2502, 0.0
      %2545 = vadd.xlane.f32.xlu0 %v2544
      %v2546 = vpop.xlane.xlu0 %2545
      %v2547 = vsel %vm2335, %v2503, 0.0
      %2548 = vadd.xlane.f32.xlu0 %v2547
      %v2549 = vpop.xlane.xlu0 %2548
      %v2550 = vsel %vm2335, %v2504, 0.0
      %2551 = vadd.xlane.f32.xlu0 %v2550
      %v2552 = vpop.xlane.xlu0 %2551
      %v2553 = vsel %vm2335, %v2505, 0.0
      %2554 = vadd.xlane.f32.xlu0 %v2553
      %v2555 = vpop.xlane.xlu0 %2554
      %v2556 = vsel %vm2335, %v2506, 0.0
      %2557 = vadd.xlane.f32.xlu0 %v2556
      %v2558 = vpop.xlane.xlu0 %2557
      %v2559 = vsel %vm2335, %v2507, 0.0
      %2560 = vadd.xlane.f32.xlu0 %v2559
      %v2561 = vpop.xlane.xlu0 %2560
      %v2562 = vsel %vm2335, %v2508, 0.0
      %2563 = vadd.xlane.f32.xlu0 %v2562
      %v2564 = vpop.xlane.xlu0 %2563
      %v2565 = vsel %vm2335, %v2509, 0.0
      %2566 = vadd.xlane.f32.xlu0 %v2565
      %v2567 = vpop.xlane.xlu0 %2566
      %v2568 = vsel %vm2335, %v2510, 0.0
      %2569 = vadd.xlane.f32.xlu0 %v2568
      %v2570 = vpop.xlane.xlu0 %2569
      %v2571 = vsel %vm2335, %v2511, 0.0
      %2572 = vadd.xlane.f32.xlu0 %v2571
      %v2573 = vpop.xlane.xlu0 %2572
      %v2574 = vsel %vm2335, %v2512, 0.0
      %2575 = vadd.xlane.f32.xlu0 %v2574
      %v2576 = vpop.xlane.xlu0 %2575
      %v2577 = vsel %vm2335, %v2513, 0.0
      %2578 = vadd.xlane.f32.xlu0 %v2577
      %v2579 = vpop.xlane.xlu0 %2578
      %v2580 = vsel %vm2335, %v2514, 0.0
      %2581 = vadd.xlane.f32.xlu0 %v2580
      %v2582 = vpop.xlane.xlu0 %2581
      %v2583 = vsel %vm2335, %v2515, 0.0
      %2584 = vadd.xlane.f32.xlu0 %v2583
      %v2585 = vpop.xlane.xlu0 %2584
      %v2586 = vsel %vm2335, %v2516, 0.0
      %2587 = vadd.xlane.f32.xlu0 %v2586
      %v2588 = vpop.xlane.xlu0 %2587
      %v2589 = vsel %vm2335, %v2517, 0.0
      %2590 = vadd.xlane.f32.xlu0 %v2589
      %v2591 = vpop.xlane.xlu0 %2590
      %v2592 = vsel %vm2335, %v2518, 0.0
      %2593 = vadd.xlane.f32.xlu0 %v2592
      %v2594 = vpop.xlane.xlu0 %2593
      %v2595 = vsel %vm2335, %v2519, 0.0
      %2596 = vadd.xlane.f32.xlu0 %v2595
      %v2597 = vpop.xlane.xlu0 %2596
      %v2598 = vsel %vm2335, %v2520, 0.0
      %2599 = vadd.xlane.f32.xlu0 %v2598
      %v2600 = vpop.xlane.xlu0 %2599
      %v2601 = vsel %vm2335, %v2521, 0.0
      %2602 = vadd.xlane.f32.xlu0 %v2601
      %v2603 = vpop.xlane.xlu0 %2602
      %v2604 = vsel %vm2335, %v2522, 0.0
      %2605 = vadd.xlane.f32.xlu0 %v2604
      %v2606 = vpop.xlane.xlu0 %2605
      %v2607 = vsel %vm2335, %v2523, 0.0
      %2608 = vadd.xlane.f32.xlu0 %v2607
      %v2609 = vpop.xlane.xlu0 %2608
      %v2610 = vsel %vm2335, %v2524, 0.0
      %2611 = vadd.xlane.f32.xlu0 %v2610
      %v2612 = vpop.xlane.xlu0 %2611
      %v2613 = vsel %vm2335, %v2525, 0.0
      %2614 = vadd.xlane.f32.xlu0 %v2613
      %v2615 = vpop.xlane.xlu0 %2614
      %v2616 = vsel %vm2335, %v2526, 0.0
      %2617 = vadd.xlane.f32.xlu0 %v2616
      %v2618 = vpop.xlane.xlu0 %2617
      %v2619 = vsel %vm2335, %v2527, 0.0
      %2620 = vadd.xlane.f32.xlu0 %v2619
      %v2621 = vpop.xlane.xlu0 %2620
      %v2622 = vsel %vm2335, %v2528, 0.0
      %2623 = vadd.xlane.f32.xlu0 %v2622
      %v2624 = vpop.xlane.xlu0 %2623
      %v2625 = vmul.f32 %v2531, %v2432
      %v2626 = vmul.f32 %v2534, %v2432
      %v2627 = vmul.f32 %v2537, %v2432
      %v2628 = vmul.f32 %v2540, %v2432
      %v2629 = vmul.f32 %v2543, %v2432
      %v2630 = vmul.f32 %v2546, %v2432
      %v2631 = vmul.f32 %v2549, %v2432
      %v2632 = vmul.f32 %v2552, %v2432
      %v2633 = vmul.f32 %v2555, %v2432
      %v2634 = vmul.f32 %v2558, %v2432
      %v2635 = vmul.f32 %v2561, %v2432
      %v2636 = vmul.f32 %v2564, %v2432
      %v2637 = vmul.f32 %v2567, %v2432
      %v2638 = vmul.f32 %v2570, %v2432
      %v2639 = vmul.f32 %v2573, %v2432
      %v2640 = vmul.f32 %v2576, %v2432
      %v2641 = vmul.f32 %v2579, %v2432
      %v2642 = vmul.f32 %v2582, %v2432
      %v2643 = vmul.f32 %v2585, %v2432
      %v2644 = vmul.f32 %v2588, %v2432
      %v2645 = vmul.f32 %v2591, %v2432
      %v2646 = vmul.f32 %v2594, %v2432
      %v2647 = vmul.f32 %v2597, %v2432
      %v2648 = vmul.f32 %v2600, %v2432
      %v2649 = vmul.f32 %v2603, %v2432
      %v2650 = vmul.f32 %v2606, %v2432
      %v2651 = vmul.f32 %v2609, %v2432
      %v2652 = vmul.f32 %v2612, %v2432
      %v2653 = vmul.f32 %v2615, %v2432
      %v2654 = vmul.f32 %v2618, %v2432
      %v2655 = vmul.f32 %v2621, %v2432
      %v2656 = vmul.f32 %v2624, %v2432
      %v2657 = vadd.f32 %v2625, 1e-06
      %v2658 = vadd.f32 %v2626, 1e-06
      %v2659 = vadd.f32 %v2627, 1e-06
      %v2660 = vadd.f32 %v2628, 1e-06
      %v2661 = vadd.f32 %v2629, 1e-06
      %v2662 = vadd.f32 %v2630, 1e-06
      %v2663 = vadd.f32 %v2631, 1e-06
      %v2664 = vadd.f32 %v2632, 1e-06
      %v2665 = vadd.f32 %v2633, 1e-06
      %v2666 = vadd.f32 %v2634, 1e-06
      %v2667 = vadd.f32 %v2635, 1e-06
      %v2668 = vadd.f32 %v2636, 1e-06
      %v2669 = vadd.f32 %v2637, 1e-06
      %v2670 = vadd.f32 %v2638, 1e-06
      %v2671 = vadd.f32 %v2639, 1e-06
      %v2672 = vadd.f32 %v2640, 1e-06
      %v2673 = vadd.f32 %v2641, 1e-06
      %v2674 = vadd.f32 %v2642, 1e-06
      %v2675 = vadd.f32 %v2643, 1e-06
      %v2676 = vadd.f32 %v2644, 1e-06
      %v2677 = vadd.f32 %v2645, 1e-06
      %v2678 = vadd.f32 %v2646, 1e-06
      %v2679 = vadd.f32 %v2647, 1e-06
      %v2680 = vadd.f32 %v2648, 1e-06
      %v2681 = vadd.f32 %v2649, 1e-06
      %v2682 = vadd.f32 %v2650, 1e-06
      %v2683 = vadd.f32 %v2651, 1e-06
      %v2684 = vadd.f32 %v2652, 1e-06
      %v2685 = vadd.f32 %v2653, 1e-06
      %v2686 = vadd.f32 %v2654, 1e-06
      %v2687 = vadd.f32 %v2655, 1e-06
      %v2688 = vadd.f32 %v2656, 1e-06
      %v2689 = vrsqrt.pop %v2657
      %v2690 = vrsqrt.pop %v2658
      %v2691 = vrsqrt.pop %v2659
      %v2692 = vrsqrt.pop %v2660
      %v2693 = vrsqrt.pop %v2661
      %v2694 = vrsqrt.pop %v2662
      %v2695 = vrsqrt.pop %v2663
      %v2696 = vrsqrt.pop %v2664
      %v2697 = vrsqrt.pop %v2665
      %v2698 = vrsqrt.pop %v2666
      %v2699 = vrsqrt.pop %v2667
      %v2700 = vrsqrt.pop %v2668
      %v2701 = vrsqrt.pop %v2669
      %v2702 = vrsqrt.pop %v2670
      %v2703 = vrsqrt.pop %v2671
      %v2704 = vrsqrt.pop %v2672
      %v2705 = vrsqrt.pop %v2673
      %v2706 = vrsqrt.pop %v2674
      %v2707 = vrsqrt.pop %v2675
      %v2708 = vrsqrt.pop %v2676
      %v2709 = vrsqrt.pop %v2677
      %v2710 = vrsqrt.pop %v2678
      %v2711 = vrsqrt.pop %v2679
      %v2712 = vrsqrt.pop %v2680
      %v2713 = vrsqrt.pop %v2681
      %v2714 = vrsqrt.pop %v2682
      %v2715 = vrsqrt.pop %v2683
      %v2716 = vrsqrt.pop %v2684
      %v2717 = vrsqrt.pop %v2685
      %v2718 = vrsqrt.pop %v2686
      %v2719 = vrsqrt.pop %v2687
      %v2720 = vrsqrt.pop %v2688
      %v2721 = vmul.f32 %v2465, %v2689
      %v2722 = vmul.f32 %v2466, %v2690
      %v2723 = vmul.f32 %v2467, %v2691
      %v2724 = vmul.f32 %v2468, %v2692
      %v2725 = vmul.f32 %v2469, %v2693
      %v2726 = vmul.f32 %v2470, %v2694
      %v2727 = vmul.f32 %v2471, %v2695
      %v2728 = vmul.f32 %v2472, %v2696
      %v2729 = vmul.f32 %v2473, %v2697
      %v2730 = vmul.f32 %v2474, %v2698
      %v2731 = vmul.f32 %v2475, %v2699
      %v2732 = vmul.f32 %v2476, %v2700
      %v2733 = vmul.f32 %v2477, %v2701
      %v2734 = vmul.f32 %v2478, %v2702
      %v2735 = vmul.f32 %v2479, %v2703
      %v2736 = vmul.f32 %v2480, %v2704
      %v2737 = vmul.f32 %v2481, %v2705
      %v2738 = vmul.f32 %v2482, %v2706
      %v2739 = vmul.f32 %v2483, %v2707
      %v2740 = vmul.f32 %v2484, %v2708
      %v2741 = vmul.f32 %v2485, %v2709
      %v2742 = vmul.f32 %v2486, %v2710
      %v2743 = vmul.f32 %v2487, %v2711
      %v2744 = vmul.f32 %v2488, %v2712
      %v2745 = vmul.f32 %v2489, %v2713
      %v2746 = vmul.f32 %v2490, %v2714
      %v2747 = vmul.f32 %v2491, %v2715
      %v2748 = vmul.f32 %v2492, %v2716
      %v2749 = vmul.f32 %v2493, %v2717
      %v2750 = vmul.f32 %v2494, %v2718
      %v2751 = vmul.f32 %v2495, %v2719
      %v2752 = vmul.f32 %v2496, %v2720
      %v2753 = vpack.c.bf16 %v2722, %v2721
      %v2754 = vpack.c.bf16 %v2724, %v2723
      %v2755 = vpack.c.bf16 %v2726, %v2725
      %v2756 = vpack.c.bf16 %v2728, %v2727
      %v2757 = vpack.c.bf16 %v2730, %v2729
      %v2758 = vpack.c.bf16 %v2732, %v2731
      %v2759 = vpack.c.bf16 %v2734, %v2733
      %v2760 = vpack.c.bf16 %v2736, %v2735
      %v2761 = vpack.c.bf16 %v2738, %v2737
      %v2762 = vpack.c.bf16 %v2740, %v2739
      %v2763 = vpack.c.bf16 %v2742, %v2741
      %v2764 = vpack.c.bf16 %v2744, %v2743
      %v2765 = vpack.c.bf16 %v2746, %v2745
      %v2766 = vpack.c.bf16 %v2748, %v2747
      %v2767 = vpack.c.bf16 %v2750, %v2749
      %v2768 = vpack.c.bf16 %v2752, %v2751
      %v2769 = vld [vmem:[%s3] sm:$0xf]
      %v2770 = vld [vmem:[%s4] sm:$0x1]
      %v2772 = vlaneseq
      %v2773 = vshrl.u32 %v2772, 7
      %v2774 = vsub.s32 0, %v2773
      %v2775 = vrot.slane %v2770, %v2774
      %v2778 = vsel %vm2335, %v2753, 0
      %v2781 = vsel %vm2335, %v2754, 0
      %v2784 = vsel %vm2335, %v2755, 0
      %v2787 = vsel %vm2335, %v2756, 0
      %v2790 = vsel %vm2335, %v2757, 0
      %v2793 = vsel %vm2335, %v2758, 0
      %v2796 = vsel %vm2335, %v2759, 0
      %v2799 = vsel %vm2335, %v2760, 0
      %v2802 = vsel %vm2335, %v2761, 0
      %v2805 = vsel %vm2335, %v2762, 0
      %v2808 = vsel %vm2335, %v2763, 0
      %v2811 = vsel %vm2335, %v2764, 0
      %v2814 = vsel %vm2335, %v2765, 0
      %v2817 = vsel %vm2335, %v2766, 0
      %v2820 = vsel %vm2335, %v2767, 0
      %v2823 = vsel %vm2335, %v2768, 0
      %v2826 = vsel %vm424, %v2769, 0
      %2828 = vmatprep.subr.bf16.mxu0 0
      %2829 = vmatpush1.bf16.msra.mxu0 0
      %2830 = vmatprep.subr.bf16.mxu0 0
      %2831 = vmatpush1.bf16.msra.mxu0 0
      %2832 = vmatprep.subr.bf16.mxu0 0
      %2833 = vmatpush1.bf16.msra.mxu0 0
      %2834 = vmatprep.subr.bf16.mxu0 0
      %2835 = vmatpush1.bf16.msra.mxu0 0
      %2836 = vmatprep.subr.bf16.mxu0 0
      %2837 = vmatpush1.bf16.msra.mxu0 0
      %2838 = vmatprep.subr.bf16.mxu0 0
      %2839 = vmatpush1.bf16.msra.mxu0 0
      %2840 = vmatprep.subr.bf16.mxu0 0
      %2841 = vmatpush1.bf16.msra.mxu0 0
      %2842 = vmatprep.subr.bf16.mxu0 0
      %2843 = vmatpush1.bf16.msra.mxu0 %v2826
      %2844 = vmatprep.subr.bf16.mxu0 0
      %2845 = vmatpush2.bf16.msra.mxu0 0
      %2846 = vmatprep.subr.bf16.mxu0 0
      %2847 = vmatpush2.bf16.msra.mxu0 0
      %2848 = vmatprep.subr.bf16.mxu0 0
      %2849 = vmatpush2.bf16.msra.mxu0 0
      %2850 = vmatprep.subr.bf16.mxu0 0
      %2851 = vmatpush2.bf16.msra.mxu0 0
      %2852 = vmatprep.subr.bf16.mxu0 0
      %2853 = vmatpush2.bf16.msra.mxu0 0
      %2854 = vmatprep.subr.bf16.mxu0 0
      %2855 = vmatpush2.bf16.msra.mxu0 0
      %2856 = vmatprep.subr.bf16.mxu0 0
      %2857 = vmatpush2.bf16.msra.mxu0 0
      %2858 = vmatprep.subr.bf16.mxu0 0
      %2859 = vmatpush2.bf16.msra.mxu0 0
      %2860 = vmatprep.mubr.bf16.mxu0 0
      %2861 = vmatmul.mubr.bf16.gmra.mxu0 %v2778
      %v2862 = vpop.f32.mrf.mxu0
      %v2863 = vadd.f32 %v2775, %v2862
      %v2864 = vpop.f32.mrf.mxu0
      %v2865 = vpop.f32.mrf.mxu0
      %v2866 = vadd.f32 %v2775, %v2865
      %v2867 = vpop.f32.mrf.mxu0
      %2868 = vmatprep.mubr.bf16.mxu0 0
      %2869 = vmatmul.mubr.bf16.gmra.mxu0 %v2781
      %v2870 = vpop.f32.mrf.mxu0
      %v2871 = vadd.f32 %v2775, %v2870
      %v2872 = vpop.f32.mrf.mxu0
      %v2873 = vpop.f32.mrf.mxu0
      %v2874 = vadd.f32 %v2775, %v2873
      %v2875 = vpop.f32.mrf.mxu0
      %2876 = vmatprep.mubr.bf16.mxu0 0
      %2877 = vmatmul.mubr.bf16.gmra.mxu0 %v2784
      %v2878 = vpop.f32.mrf.mxu0
      %v2879 = vadd.f32 %v2775, %v2878
      %v2880 = vpop.f32.mrf.mxu0
      %v2881 = vpop.f32.mrf.mxu0
      %v2882 = vadd.f32 %v2775, %v2881
      %v2883 = vpop.f32.mrf.mxu0
      %2884 = vmatprep.mubr.bf16.mxu0 0
      %2885 = vmatmul.mubr.bf16.gmra.mxu0 %v2787
      %v2886 = vpop.f32.mrf.mxu0
      %v2887 = vadd.f32 %v2775, %v2886
      %v2888 = vpop.f32.mrf.mxu0
      %v2889 = vpop.f32.mrf.mxu0
      %v2890 = vadd.f32 %v2775, %v2889
      %v2891 = vpop.f32.mrf.mxu0
      %2892 = vmatprep.mubr.bf16.mxu0 0
      %2893 = vmatmul.mubr.bf16.gmra.mxu0 %v2790
      %v2894 = vpop.f32.mrf.mxu0
      %v2895 = vadd.f32 %v2775, %v2894
      %v2896 = vpop.f32.mrf.mxu0
      %v2897 = vpop.f32.mrf.mxu0
      %v2898 = vadd.f32 %v2775, %v2897
      %v2899 = vpop.f32.mrf.mxu0
      %2900 = vmatprep.mubr.bf16.mxu0 0
      %2901 = vmatmul.mubr.bf16.gmra.mxu0 %v2793
      %v2902 = vpop.f32.mrf.mxu0
      %v2903 = vadd.f32 %v2775, %v2902
      %v2904 = vpop.f32.mrf.mxu0
      %v2905 = vpop.f32.mrf.mxu0
      %v2906 = vadd.f32 %v2775, %v2905
      %v2907 = vpop.f32.mrf.mxu0
      %2908 = vmatprep.mubr.bf16.mxu0 0
      %2909 = vmatmul.mubr.bf16.gmra.mxu0 %v2796
      %v2910 = vpop.f32.mrf.mxu0
      %v2911 = vadd.f32 %v2775, %v2910
      %v2912 = vpop.f32.mrf.mxu0
      %v2913 = vpop.f32.mrf.mxu0
      %v2914 = vadd.f32 %v2775, %v2913
      %v2915 = vpop.f32.mrf.mxu0
      %2916 = vmatprep.mubr.bf16.mxu0 0
      %2917 = vmatmul.mubr.bf16.gmra.mxu0 %v2799
      %v2918 = vpop.f32.mrf.mxu0
      %v2919 = vadd.f32 %v2775, %v2918
      %v2920 = vpop.f32.mrf.mxu0
      %v2921 = vpop.f32.mrf.mxu0
      %v2922 = vadd.f32 %v2775, %v2921
      %v2923 = vpop.f32.mrf.mxu0
      %2924 = vmatprep.mubr.bf16.mxu0 0
      %2925 = vmatmul.mubr.bf16.gmra.mxu0 %v2802
      %v2926 = vpop.f32.mrf.mxu0
      %v2927 = vadd.f32 %v2775, %v2926
      %v2928 = vpop.f32.mrf.mxu0
      %v2929 = vpop.f32.mrf.mxu0
      %v2930 = vadd.f32 %v2775, %v2929
      %v2931 = vpop.f32.mrf.mxu0
      %2932 = vmatprep.mubr.bf16.mxu0 0
      %2933 = vmatmul.mubr.bf16.gmra.mxu0 %v2805
      %v2934 = vpop.f32.mrf.mxu0
      %v2935 = vadd.f32 %v2775, %v2934
      %v2936 = vpop.f32.mrf.mxu0
      %v2937 = vpop.f32.mrf.mxu0
      %v2938 = vadd.f32 %v2775, %v2937
      %v2939 = vpop.f32.mrf.mxu0
      %2940 = vmatprep.mubr.bf16.mxu0 0
      %2941 = vmatmul.mubr.bf16.gmra.mxu0 %v2808
      %v2942 = vpop.f32.mrf.mxu0
      %v2943 = vadd.f32 %v2775, %v2942
      %v2944 = vpop.f32.mrf.mxu0
      %v2945 = vpop.f32.mrf.mxu0
      %v2946 = vadd.f32 %v2775, %v2945
      %v2947 = vpop.f32.mrf.mxu0
      %2948 = vmatprep.mubr.bf16.mxu0 0
      %2949 = vmatmul.mubr.bf16.gmra.mxu0 %v2811
      %v2950 = vpop.f32.mrf.mxu0
      %v2951 = vadd.f32 %v2775, %v2950
      %v2952 = vpop.f32.mrf.mxu0
      %v2953 = vpop.f32.mrf.mxu0
      %v2954 = vadd.f32 %v2775, %v2953
      %v2955 = vpop.f32.mrf.mxu0
      %2956 = vmatprep.mubr.bf16.mxu0 0
      %2957 = vmatmul.mubr.bf16.gmra.mxu0 %v2814
      %v2958 = vpop.f32.mrf.mxu0
      %v2959 = vadd.f32 %v2775, %v2958
      %v2960 = vpop.f32.mrf.mxu0
      %v2961 = vpop.f32.mrf.mxu0
      %v2962 = vadd.f32 %v2775, %v2961
      %v2963 = vpop.f32.mrf.mxu0
      %2964 = vmatprep.mubr.bf16.mxu0 0
      %2965 = vmatmul.mubr.bf16.gmra.mxu0 %v2817
      %v2966 = vpop.f32.mrf.mxu0
      %v2967 = vadd.f32 %v2775, %v2966
      %v2968 = vpop.f32.mrf.mxu0
      %v2969 = vpop.f32.mrf.mxu0
      %v2970 = vadd.f32 %v2775, %v2969
      %v2971 = vpop.f32.mrf.mxu0
      %2972 = vmatprep.mubr.bf16.mxu0 0
      %2973 = vmatmul.mubr.bf16.gmra.mxu0 %v2820
      %v2974 = vpop.f32.mrf.mxu0
      %v2975 = vadd.f32 %v2775, %v2974
      %v2976 = vpop.f32.mrf.mxu0
      %v2977 = vpop.f32.mrf.mxu0
      %v2978 = vadd.f32 %v2775, %v2977
      %v2979 = vpop.f32.mrf.mxu0
      %2980 = vmatprep.mubr.bf16.mxu0 0
      %2981 = vmatmul.mubr.bf16.gmra.mxu0 %v2823
      %v2982 = vpop.f32.mrf.mxu0
      %v2983 = vadd.f32 %v2775, %v2982
      %v2984 = vpop.f32.mrf.mxu0
      %v2985 = vpop.f32.mrf.mxu0
      %v2986 = vadd.f32 %v2775, %v2985
      %v2987 = vpop.f32.mrf.mxu0
      %2988 = vdwg.mxu0
      %v2989 = vmul.f32 %v2863, 0.5
      %v2990 = vmul.f32 %v2866, 0.5
      %v2991 = vmul.f32 %v2871, 0.5
      %v2992 = vmul.f32 %v2874, 0.5
      %v2993 = vmul.f32 %v2879, 0.5
      %v2994 = vmul.f32 %v2882, 0.5
      %v2995 = vmul.f32 %v2887, 0.5
      %v2996 = vmul.f32 %v2890, 0.5
      %v2997 = vmul.f32 %v2895, 0.5
      %v2998 = vmul.f32 %v2898, 0.5
      %v2999 = vmul.f32 %v2903, 0.5
      %v3000 = vmul.f32 %v2906, 0.5
      %v3001 = vmul.f32 %v2911, 0.5
      %v3002 = vmul.f32 %v2914, 0.5
      %v3003 = vmul.f32 %v2919, 0.5
      %v3004 = vmul.f32 %v2922, 0.5
      %v3005 = vmul.f32 %v2927, 0.5
      %v3006 = vmul.f32 %v2930, 0.5
      %v3007 = vmul.f32 %v2935, 0.5
      %v3008 = vmul.f32 %v2938, 0.5
      %v3009 = vmul.f32 %v2943, 0.5
      %v3010 = vmul.f32 %v2946, 0.5
      %v3011 = vmul.f32 %v2951, 0.5
      %v3012 = vmul.f32 %v2954, 0.5
      %v3013 = vmul.f32 %v2959, 0.5
      %v3014 = vmul.f32 %v2962, 0.5
      %v3015 = vmul.f32 %v2967, 0.5
      %v3016 = vmul.f32 %v2970, 0.5
      %v3017 = vmul.f32 %v2975, 0.5
      %v3018 = vmul.f32 %v2978, 0.5
      %v3019 = vmul.f32 %v2983, 0.5
      %v3020 = vmul.f32 %v2986, 0.5
      %v3021 = vmul.f32 %v2863, 0.70710677
      %v3022 = vmul.f32 %v2866, 0.70710677
      %v3023 = vmul.f32 %v2871, 0.70710677
      %v3024 = vmul.f32 %v2874, 0.70710677
      %v3025 = vmul.f32 %v2879, 0.70710677
      %v3026 = vmul.f32 %v2882, 0.70710677
      %v3027 = vmul.f32 %v2887, 0.70710677
      %v3028 = vmul.f32 %v2890, 0.70710677
      %v3029 = vmul.f32 %v2895, 0.70710677
      %v3030 = vmul.f32 %v2898, 0.70710677
      %v3031 = vmul.f32 %v2903, 0.70710677
      %v3032 = vmul.f32 %v2906, 0.70710677
      %v3033 = vmul.f32 %v2911, 0.70710677
      %v3034 = vmul.f32 %v2914, 0.70710677
      %v3035 = vmul.f32 %v2919, 0.70710677
      %v3036 = vmul.f32 %v2922, 0.70710677
      %v3037 = vmul.f32 %v2927, 0.70710677
      %v3038 = vmul.f32 %v2930, 0.70710677
      %v3039 = vmul.f32 %v2935, 0.70710677
      %v3040 = vmul.f32 %v2938, 0.70710677
      %v3041 = vmul.f32 %v2943, 0.70710677
      %v3042 = vmul.f32 %v2946, 0.70710677
      %v3043 = vmul.f32 %v2951, 0.70710677
      %v3044 = vmul.f32 %v2954, 0.70710677
      %v3045 = vmul.f32 %v2959, 0.70710677
      %v3046 = vmul.f32 %v2962, 0.70710677
      %v3047 = vmul.f32 %v2967, 0.70710677
      %v3048 = vmul.f32 %v2970, 0.70710677
      %v3049 = vmul.f32 %v2975, 0.70710677
      %v3050 = vmul.f32 %v2978, 0.70710677
      %v3051 = vmul.f32 %v2983, 0.70710677
      %v3052 = vmul.f32 %v2986, 0.70710677
      %v3053 = verf.f32.pop %v3021
      %v3054 = verf.f32.pop %v3022
      %v3055 = verf.f32.pop %v3023
      %v3056 = verf.f32.pop %v3024
      %v3057 = verf.f32.pop %v3025
      %v3058 = verf.f32.pop %v3026
      %v3059 = verf.f32.pop %v3027
      %v3060 = verf.f32.pop %v3028
      %v3061 = verf.f32.pop %v3029
      %v3062 = verf.f32.pop %v3030
      %v3063 = verf.f32.pop %v3031
      %v3064 = verf.f32.pop %v3032
      %v3065 = verf.f32.pop %v3033
      %v3066 = verf.f32.pop %v3034
      %v3067 = verf.f32.pop %v3035
      %v3068 = verf.f32.pop %v3036
      %v3069 = verf.f32.pop %v3037
      %v3070 = verf.f32.pop %v3038
      %v3071 = verf.f32.pop %v3039
      %v3072 = verf.f32.pop %v3040
      %v3073 = verf.f32.pop %v3041
      %v3074 = verf.f32.pop %v3042
      %v3075 = verf.f32.pop %v3043
      %v3076 = verf.f32.pop %v3044
      %v3077 = verf.f32.pop %v3045
      %v3078 = verf.f32.pop %v3046
      %v3079 = verf.f32.pop %v3047
      %v3080 = verf.f32.pop %v3048
      %v3081 = verf.f32.pop %v3049
      %v3082 = verf.f32.pop %v3050
      %v3083 = verf.f32.pop %v3051
      %v3084 = verf.f32.pop %v3052
      %v3085 = vadd.f32 %v3053, 1.0
      %v3086 = vadd.f32 %v3054, 1.0
      %v3087 = vadd.f32 %v3055, 1.0
      %v3088 = vadd.f32 %v3056, 1.0
      %v3089 = vadd.f32 %v3057, 1.0
      %v3090 = vadd.f32 %v3058, 1.0
      %v3091 = vadd.f32 %v3059, 1.0
      %v3092 = vadd.f32 %v3060, 1.0
      %v3093 = vadd.f32 %v3061, 1.0
      %v3094 = vadd.f32 %v3062, 1.0
      %v3095 = vadd.f32 %v3063, 1.0
      %v3096 = vadd.f32 %v3064, 1.0
      %v3097 = vadd.f32 %v3065, 1.0
      %v3098 = vadd.f32 %v3066, 1.0
      %v3099 = vadd.f32 %v3067, 1.0
      %v3100 = vadd.f32 %v3068, 1.0
      %v3101 = vadd.f32 %v3069, 1.0
      %v3102 = vadd.f32 %v3070, 1.0
      %v3103 = vadd.f32 %v3071, 1.0
      %v3104 = vadd.f32 %v3072, 1.0
      %v3105 = vadd.f32 %v3073, 1.0
      %v3106 = vadd.f32 %v3074, 1.0
      %v3107 = vadd.f32 %v3075, 1.0
      %v3108 = vadd.f32 %v3076, 1.0
      %v3109 = vadd.f32 %v3077, 1.0
      %v3110 = vadd.f32 %v3078, 1.0
      %v3111 = vadd.f32 %v3079, 1.0
      %v3112 = vadd.f32 %v3080, 1.0
      %v3113 = vadd.f32 %v3081, 1.0
      %v3114 = vadd.f32 %v3082, 1.0
      %v3115 = vadd.f32 %v3083, 1.0
      %v3116 = vadd.f32 %v3084, 1.0
      %v3117 = vmul.f32 %v2989, %v3085
      %v3118 = vmul.f32 %v2990, %v3086
      %v3119 = vmul.f32 %v2991, %v3087
      %v3120 = vmul.f32 %v2992, %v3088
      %v3121 = vmul.f32 %v2993, %v3089
      %v3122 = vmul.f32 %v2994, %v3090
      %v3123 = vmul.f32 %v2995, %v3091
      %v3124 = vmul.f32 %v2996, %v3092
      %v3125 = vmul.f32 %v2997, %v3093
      %v3126 = vmul.f32 %v2998, %v3094
      %v3127 = vmul.f32 %v2999, %v3095
      %v3128 = vmul.f32 %v3000, %v3096
      %v3129 = vmul.f32 %v3001, %v3097
      %v3130 = vmul.f32 %v3002, %v3098
      %v3131 = vmul.f32 %v3003, %v3099
      %v3132 = vmul.f32 %v3004, %v3100
      %v3133 = vmul.f32 %v3005, %v3101
      %v3134 = vmul.f32 %v3006, %v3102
      %v3135 = vmul.f32 %v3007, %v3103
      %v3136 = vmul.f32 %v3008, %v3104
      %v3137 = vmul.f32 %v3009, %v3105
      %v3138 = vmul.f32 %v3010, %v3106
      %v3139 = vmul.f32 %v3011, %v3107
      %v3140 = vmul.f32 %v3012, %v3108
      %v3141 = vmul.f32 %v3013, %v3109
      %v3142 = vmul.f32 %v3014, %v3110
      %v3143 = vmul.f32 %v3015, %v3111
      %v3144 = vmul.f32 %v3016, %v3112
      %v3145 = vmul.f32 %v3017, %v3113
      %v3146 = vmul.f32 %v3018, %v3114
      %v3147 = vmul.f32 %v3019, %v3115
      %v3148 = vmul.f32 %v3020, %v3116
      %v3149 = vpack.c.bf16 %v3118, %v3117
      %v3150 = vpack.c.bf16 %v3120, %v3119
      %v3151 = vpack.c.bf16 %v3122, %v3121
      %v3152 = vpack.c.bf16 %v3124, %v3123
      %v3153 = vpack.c.bf16 %v3126, %v3125
      %v3154 = vpack.c.bf16 %v3128, %v3127
      %v3155 = vpack.c.bf16 %v3130, %v3129
      %v3156 = vpack.c.bf16 %v3132, %v3131
      %v3157 = vpack.c.bf16 %v3134, %v3133
      %v3158 = vpack.c.bf16 %v3136, %v3135
      %v3159 = vpack.c.bf16 %v3138, %v3137
      %v3160 = vpack.c.bf16 %v3140, %v3139
      %v3161 = vpack.c.bf16 %v3142, %v3141
      %v3162 = vpack.c.bf16 %v3144, %v3143
      %v3163 = vpack.c.bf16 %v3146, %v3145
      %v3164 = vpack.c.bf16 %v3148, %v3147
      %v3165 = vld [vmem:[%s5] sm:$0xf]
      %v3166 = vld [vmem:[%s5 + $0x4] sm:$0xf]
      %v3167 = vld [vmem:[%s5 + $0x8] sm:$0xf]
      %v3168 = vld [vmem:[%s5 + $0xc] sm:$0xf]
      %v3169 = vld [vmem:[%s6] sm:$0x1]
      %v3171 = vlaneseq
      %v3172 = vshrl.u32 %v3171, 7
      %v3173 = vsub.s32 0, %v3172
      %v3174 = vrot.slane %v3169, %v3173
      %v3180 = vunpack.c.l.b16 %v3165
      %v3181 = vunpack.c.l.b16 %v3166
      %v3182 = vunpack.c.l.b16 %v3167
      %v3183 = vunpack.c.l.b16 %v3168
      %v3184 = vpack.c.b16 %v3181, %v3180
      %v3185 = vpack.c.b16 %v3183, %v3182
      %vm3188 = vcmask 261120
      %v3190 = vsel %vm3188, %v3149, 0
      %v3193 = vsel %vm3188, %v3150, 0
      %v3196 = vsel %vm3188, %v3151, 0
      %v3199 = vsel %vm3188, %v3152, 0
      %v3202 = vsel %vm3188, %v3153, 0
      %v3205 = vsel %vm3188, %v3154, 0
      %v3208 = vsel %vm3188, %v3155, 0
      %v3211 = vsel %vm3188, %v3156, 0
      %v3214 = vsel %vm3188, %v3157, 0
      %v3217 = vsel %vm3188, %v3158, 0
      %v3220 = vsel %vm3188, %v3159, 0
      %v3223 = vsel %vm3188, %v3160, 0
      %v3226 = vsel %vm3188, %v3161, 0
      %v3229 = vsel %vm3188, %v3162, 0
      %v3232 = vsel %vm3188, %v3163, 0
      %v3235 = vsel %vm3188, %v3164, 0
      %3237 = vmatprep.subr.bf16.mxu0 0
      %3238 = vmatpush1.bf16.msra.mxu0 0
      %3239 = vmatprep.subr.bf16.mxu0 0
      %3240 = vmatpush1.bf16.msra.mxu0 0
      %3241 = vmatprep.subr.bf16.mxu0 0
      %3242 = vmatpush1.bf16.msra.mxu0 0
      %3243 = vmatprep.subr.bf16.mxu0 0
      %3244 = vmatpush1.bf16.msra.mxu0 0
      %3245 = vmatprep.subr.bf16.mxu0 0
      %3246 = vmatpush1.bf16.msra.mxu0 0
      %3247 = vmatprep.subr.bf16.mxu0 0
      %3248 = vmatpush1.bf16.msra.mxu0 0
      %3249 = vmatprep.subr.bf16.mxu0 0
      %3250 = vmatpush1.bf16.msra.mxu0 %v3185
      %3251 = vmatprep.subr.bf16.mxu0 0
      %3252 = vmatpush1.bf16.msra.mxu0 %v3184
      %3253 = vmatprep.subr.bf16.mxu0 0
      %3254 = vmatpush2.bf16.msra.mxu0 0
      %3255 = vmatprep.subr.bf16.mxu0 0
      %3256 = vmatpush2.bf16.msra.mxu0 0
      %3257 = vmatprep.subr.bf16.mxu0 0
      %3258 = vmatpush2.bf16.msra.mxu0 0
      %3259 = vmatprep.subr.bf16.mxu0 0
      %3260 = vmatpush2.bf16.msra.mxu0 0
      %3261 = vmatprep.subr.bf16.mxu0 0
      %3262 = vmatpush2.bf16.msra.mxu0 0
      %3263 = vmatprep.subr.bf16.mxu0 0
      %3264 = vmatpush2.bf16.msra.mxu0 0
      %3265 = vmatprep.subr.bf16.mxu0 0
      %3266 = vmatpush2.bf16.msra.mxu0 0
      %3267 = vmatprep.subr.bf16.mxu0 0
      %3268 = vmatpush2.bf16.msra.mxu0 0
      %3269 = vmatprep.mubr.bf16.mxu0 0
      %3270 = vmatmul.mubr.bf16.gmra.mxu0 %v3190
      %v3271 = vpop.f32.mrf.mxu0
      %v3272 = vadd.f32 %v3174, %v3271
      %v3273 = vpop.f32.mrf.mxu0
      %v3274 = vpop.f32.mrf.mxu0
      %v3275 = vadd.f32 %v3174, %v3274
      %v3276 = vpop.f32.mrf.mxu0
      %3277 = vmatprep.mubr.bf16.mxu0 0
      %3278 = vmatmul.mubr.bf16.gmra.mxu0 %v3193
      %v3279 = vpop.f32.mrf.mxu0
      %v3280 = vadd.f32 %v3174, %v3279
      %v3281 = vpop.f32.mrf.mxu0
      %v3282 = vpop.f32.mrf.mxu0
      %v3283 = vadd.f32 %v3174, %v3282
      %v3284 = vpop.f32.mrf.mxu0
      %3285 = vmatprep.mubr.bf16.mxu0 0
      %3286 = vmatmul.mubr.bf16.gmra.mxu0 %v3196
      %v3287 = vpop.f32.mrf.mxu0
      %v3288 = vadd.f32 %v3174, %v3287
      %v3289 = vpop.f32.mrf.mxu0
      %v3290 = vpop.f32.mrf.mxu0
      %v3291 = vadd.f32 %v3174, %v3290
      %v3292 = vpop.f32.mrf.mxu0
      %3293 = vmatprep.mubr.bf16.mxu0 0
      %3294 = vmatmul.mubr.bf16.gmra.mxu0 %v3199
      %v3295 = vpop.f32.mrf.mxu0
      %v3296 = vadd.f32 %v3174, %v3295
      %v3297 = vpop.f32.mrf.mxu0
      %v3298 = vpop.f32.mrf.mxu0
      %v3299 = vadd.f32 %v3174, %v3298
      %v3300 = vpop.f32.mrf.mxu0
      %3301 = vmatprep.mubr.bf16.mxu0 0
      %3302 = vmatmul.mubr.bf16.gmra.mxu0 %v3202
      %v3303 = vpop.f32.mrf.mxu0
      %v3304 = vadd.f32 %v3174, %v3303
      %v3305 = vpop.f32.mrf.mxu0
      %v3306 = vpop.f32.mrf.mxu0
      %v3307 = vadd.f32 %v3174, %v3306
      %v3308 = vpop.f32.mrf.mxu0
      %3309 = vmatprep.mubr.bf16.mxu0 0
      %3310 = vmatmul.mubr.bf16.gmra.mxu0 %v3205
      %v3311 = vpop.f32.mrf.mxu0
      %v3312 = vadd.f32 %v3174, %v3311
      %v3313 = vpop.f32.mrf.mxu0
      %v3314 = vpop.f32.mrf.mxu0
      %v3315 = vadd.f32 %v3174, %v3314
      %v3316 = vpop.f32.mrf.mxu0
      %3317 = vmatprep.mubr.bf16.mxu0 0
      %3318 = vmatmul.mubr.bf16.gmra.mxu0 %v3208
      %v3319 = vpop.f32.mrf.mxu0
      %v3320 = vadd.f32 %v3174, %v3319
      %v3321 = vpop.f32.mrf.mxu0
      %v3322 = vpop.f32.mrf.mxu0
      %v3323 = vadd.f32 %v3174, %v3322
      %v3324 = vpop.f32.mrf.mxu0
      %3325 = vmatprep.mubr.bf16.mxu0 0
      %3326 = vmatmul.mubr.bf16.gmra.mxu0 %v3211
      %v3327 = vpop.f32.mrf.mxu0
      %v3328 = vadd.f32 %v3174, %v3327
      %v3329 = vpop.f32.mrf.mxu0
      %v3330 = vpop.f32.mrf.mxu0
      %v3331 = vadd.f32 %v3174, %v3330
      %v3332 = vpop.f32.mrf.mxu0
      %3333 = vmatprep.mubr.bf16.mxu0 0
      %3334 = vmatmul.mubr.bf16.gmra.mxu0 %v3214
      %v3335 = vpop.f32.mrf.mxu0
      %v3336 = vadd.f32 %v3174, %v3335
      %v3337 = vpop.f32.mrf.mxu0
      %v3338 = vpop.f32.mrf.mxu0
      %v3339 = vadd.f32 %v3174, %v3338
      %v3340 = vpop.f32.mrf.mxu0
      %3341 = vmatprep.mubr.bf16.mxu0 0
      %3342 = vmatmul.mubr.bf16.gmra.mxu0 %v3217
      %v3343 = vpop.f32.mrf.mxu0
      %v3344 = vadd.f32 %v3174, %v3343
      %v3345 = vpop.f32.mrf.mxu0
      %v3346 = vpop.f32.mrf.mxu0
      %v3347 = vadd.f32 %v3174, %v3346
      %v3348 = vpop.f32.mrf.mxu0
      %3349 = vmatprep.mubr.bf16.mxu0 0
      %3350 = vmatmul.mubr.bf16.gmra.mxu0 %v3220
      %v3351 = vpop.f32.mrf.mxu0
      %v3352 = vadd.f32 %v3174, %v3351
      %v3353 = vpop.f32.mrf.mxu0
      %v3354 = vpop.f32.mrf.mxu0
      %v3355 = vadd.f32 %v3174, %v3354
      %v3356 = vpop.f32.mrf.mxu0
      %3357 = vmatprep.mubr.bf16.mxu0 0
      %3358 = vmatmul.mubr.bf16.gmra.mxu0 %v3223
      %v3359 = vpop.f32.mrf.mxu0
      %v3360 = vadd.f32 %v3174, %v3359
      %v3361 = vpop.f32.mrf.mxu0
      %v3362 = vpop.f32.mrf.mxu0
      %v3363 = vadd.f32 %v3174, %v3362
      %v3364 = vpop.f32.mrf.mxu0
      %3365 = vmatprep.mubr.bf16.mxu0 0
      %3366 = vmatmul.mubr.bf16.gmra.mxu0 %v3226
      %v3367 = vpop.f32.mrf.mxu0
      %v3368 = vadd.f32 %v3174, %v3367
      %v3369 = vpop.f32.mrf.mxu0
      %v3370 = vpop.f32.mrf.mxu0
      %v3371 = vadd.f32 %v3174, %v3370
      %v3372 = vpop.f32.mrf.mxu0
      %3373 = vmatprep.mubr.bf16.mxu0 0
      %3374 = vmatmul.mubr.bf16.gmra.mxu0 %v3229
      %v3375 = vpop.f32.mrf.mxu0
      %v3376 = vadd.f32 %v3174, %v3375
      %v3377 = vpop.f32.mrf.mxu0
      %v3378 = vpop.f32.mrf.mxu0
      %v3379 = vadd.f32 %v3174, %v3378
      %v3380 = vpop.f32.mrf.mxu0
      %3381 = vmatprep.mubr.bf16.mxu0 0
      %3382 = vmatmul.mubr.bf16.gmra.mxu0 %v3232
      %v3383 = vpop.f32.mrf.mxu0
      %v3384 = vadd.f32 %v3174, %v3383
      %v3385 = vpop.f32.mrf.mxu0
      %v3386 = vpop.f32.mrf.mxu0
      %v3387 = vadd.f32 %v3174, %v3386
      %v3388 = vpop.f32.mrf.mxu0
      %3389 = vmatprep.mubr.bf16.mxu0 0
      %3390 = vmatmul.mubr.bf16.gmra.mxu0 %v3235
      %v3391 = vpop.f32.mrf.mxu0
      %v3392 = vadd.f32 %v3174, %v3391
      %v3393 = vpop.f32.mrf.mxu0
      %v3394 = vpop.f32.mrf.mxu0
      %v3395 = vadd.f32 %v3174, %v3394
      %v3396 = vpop.f32.mrf.mxu0
      %3397 = vdwg.mxu0
      %3400 = vrot.lane.b32.xlu0 %v3280, 8
      %v3401 = vpop.permute.xlu0 %3400
      %3402 = vrot.lane.b32.xlu0 %v3283, 8
      %v3403 = vpop.permute.xlu0 %3402
      %3408 = vrot.lane.b32.xlu0 %v3288, 16
      %v3409 = vpop.permute.xlu0 %3408
      %3410 = vrot.lane.b32.xlu0 %v3291, 16
      %v3411 = vpop.permute.xlu0 %3410
      %3416 = vrot.lane.b32.xlu0 %v3296, 24
      %v3417 = vpop.permute.xlu0 %3416
      %3418 = vrot.lane.b32.xlu0 %v3299, 24
      %v3419 = vpop.permute.xlu0 %3418
      %3424 = vrot.lane.b32.xlu0 %v3304, 32
      %v3425 = vpop.permute.xlu0 %3424
      %3426 = vrot.lane.b32.xlu0 %v3307, 32
      %v3427 = vpop.permute.xlu0 %3426
      %3432 = vrot.lane.b32.xlu0 %v3312, 40
      %v3433 = vpop.permute.xlu0 %3432
      %3434 = vrot.lane.b32.xlu0 %v3315, 40
      %v3435 = vpop.permute.xlu0 %3434
      %3440 = vrot.lane.b32.xlu0 %v3320, 48
      %v3441 = vpop.permute.xlu0 %3440
      %3442 = vrot.lane.b32.xlu0 %v3323, 48
      %v3443 = vpop.permute.xlu0 %3442
      %3448 = vrot.lane.b32.xlu0 %v3328, 56
      %v3449 = vpop.permute.xlu0 %3448
      %3450 = vrot.lane.b32.xlu0 %v3331, 56
      %v3451 = vpop.permute.xlu0 %3450
      %3456 = vrot.lane.b32.xlu0 %v3336, 64
      %v3457 = vpop.permute.xlu0 %3456
      %3458 = vrot.lane.b32.xlu0 %v3339, 64
      %v3459 = vpop.permute.xlu0 %3458
      %3464 = vrot.lane.b32.xlu0 %v3344, 72
      %v3465 = vpop.permute.xlu0 %3464
      %3466 = vrot.lane.b32.xlu0 %v3347, 72
      %v3467 = vpop.permute.xlu0 %3466
      %3472 = vrot.lane.b32.xlu0 %v3352, 80
      %v3473 = vpop.permute.xlu0 %3472
      %3474 = vrot.lane.b32.xlu0 %v3355, 80
      %v3475 = vpop.permute.xlu0 %3474
      %3480 = vrot.lane.b32.xlu0 %v3360, 88
      %v3481 = vpop.permute.xlu0 %3480
      %3482 = vrot.lane.b32.xlu0 %v3363, 88
      %v3483 = vpop.permute.xlu0 %3482
      %3488 = vrot.lane.b32.xlu0 %v3368, 96
      %v3489 = vpop.permute.xlu0 %3488
      %3490 = vrot.lane.b32.xlu0 %v3371, 96
      %v3491 = vpop.permute.xlu0 %3490
      %3496 = vrot.lane.b32.xlu0 %v3376, 104
      %v3497 = vpop.permute.xlu0 %3496
      %3498 = vrot.lane.b32.xlu0 %v3379, 104
      %v3499 = vpop.permute.xlu0 %3498
      %3504 = vrot.lane.b32.xlu0 %v3384, 112
      %v3505 = vpop.permute.xlu0 %3504
      %3506 = vrot.lane.b32.xlu0 %v3387, 112
      %v3507 = vpop.permute.xlu0 %3506
      %3512 = vrot.lane.b32.xlu0 %v3392, 120
      %v3513 = vpop.permute.xlu0 %3512
      %3514 = vrot.lane.b32.xlu0 %v3395, 120
      %v3515 = vpop.permute.xlu0 %3514
      %v3518 = vsel %vm2335, %v3272, %v3401
      %v3519 = vsel %vm2335, %v3275, %v3403
      %vm3520 = vcmask 130048
      %v3521 = vsel %vm3520, %v3518, %v3409
      %v3522 = vsel %vm3520, %v3519, %v3411
      %v3523 = vsel %vm290, %v3521, %v3417
      %v3524 = vsel %vm290, %v3522, %v3419
      %v3525 = vsel %vm3188, %v3523, %v3425
      %v3526 = vsel %vm3188, %v3524, %v3427
      %vm3527 = vcmask 326656
      %v3528 = vsel %vm3527, %v3525, %v3433
      %v3529 = vsel %vm3527, %v3526, %v3435
      %v3530 = vsel %vm316, %v3528, %v3441
      %v3531 = vsel %vm316, %v3529, %v3443
      %vm3532 = vcmask 457728
      %v3533 = vsel %vm3532, %v3530, %v3449
      %v3534 = vsel %vm3532, %v3531, %v3451
      %vm3535 = vcmask 523264
      %v3536 = vsel %vm3535, %v3533, %v3457
      %v3537 = vsel %vm3535, %v3534, %v3459
      %vm3538 = vcmask 588800
      %v3539 = vsel %vm3538, %v3536, %v3465
      %v3540 = vsel %vm3538, %v3537, %v3467
      %v3541 = vsel %vm1972, %v3539, %v3473
      %v3542 = vsel %vm1972, %v3540, %v3475
      %v3543 = vsel %vm1677, %v3541, %v3481
      %v3544 = vsel %vm1677, %v3542, %v3483
      %v3545 = vsel %vm1382, %v3543, %v3489
      %v3546 = vsel %vm1382, %v3544, %v3491
      %v3547 = vsel %vm1087, %v3545, %v3497
      %v3548 = vsel %vm1087, %v3546, %v3499
      %v3549 = vsel %vm792, %v3547, %v3505
      %v3550 = vsel %vm792, %v3548, %v3507
      %v3551 = vsel %vm497, %v3549, %v3513
      %v3552 = vsel %vm497, %v3550, %v3515
      %v3553 = vld [vmem:[%s273] sm:$0xff]
      %v3554 = vld [vmem:[%s273 + $0x8] sm:$0xff]
      %v3555 = vadd.f32 %v3553, %v3551
      %v3556 = vadd.f32 %v3554, %v3552
      %3557 = vst [vmem:[%s278] sm:$0xff] %v3555
      %3558 = vst [vmem:[%s278 + $0x8] sm:$0xff] %v3556
      %p3559 = scmp.lt.s32.totalorder %s18, 1
      %s3560 = scalar_select %p3559, %s18, 1
      %s3561 = smul.addr %s3560, 2
      %s3562 = smul.addr %s3561, 8
      %s3563 = scalar_lea.vmem %s7, %s3562
      // Predicated region
      $region49: #{convnext_block.1} parent=47 // pred_check
        %p3564 = pneg %p188
      $region50: #{convnext_block.1} parent=47 // pred_check_branch
        %3566 = sbr.rel (%p3564) target = $region52
      $region51: #{convnext_block.1} parent=47 // pred_region
        _
      $region52: #{convnext_block.1} parent=47 // pred_fallthru
        _
    $region48: #{convnext_block.1} parent=5 // pred_fallthru
      _
    %p3567 = scmp.le.s32.totalorder 2, %s13
    // Predicated region
    $region53: #{convnext_block.1} parent=5 // pred_check
      %p3568 = pneg %p3567
    $region54: #{convnext_block.1} parent=5 // pred_check_branch
      %3570 = sbr.rel (%p3568) target = $region56
    $region55: #{convnext_block.1} parent=5 // pred_region
      %s3571 = ssub.s32 %s13, 2
      // Predicated region
      $region57: #{convnext_block.1} parent=55 // pred_check
        %p3572 = pneg %p194
      $region58: #{convnext_block.1} parent=55 // pred_check_branch
        %3574 = sbr.rel (%p3572) target = $region60
      $region59: #{convnext_block.1} parent=55 // pred_region
        %p3575 = scmp.lt.s32.totalorder %s19, 1
        %s3576 = scalar_select %p3575, %s19, 1
        %s3577 = smul.addr %s3576, 2
        %s3578 = smul.addr %s3577, 8
        %s3579 = scalar_lea.vmem %s7, %s3578
      $region60: #{convnext_block.1} parent=55 // pred_fallthru
        _
    $region56: #{convnext_block.1} parent=5 // pred_fallthru
      _
  $region6: #{convnext_block.1} parent=0 // loop_footer
    %s17 = sadd.s32 1, %s13
  $region7: #{convnext_block.1} parent=0 // loop_footer_branch
    %12 = sbr.rel target = $region3
  $region8: #{convnext_block.1} parent=0 // loop_exit
    _

</llo_original>
